<compile_context>
chip_gen: v7x
topology: tpu7x:2x2x1
jax: 0.10.0
libtpu: 0.0.40
codegen_flags: <defaults>
</compile_context>

<pallas_src>
import jax
import jax.numpy as jnp
from jax.experimental import pallas as pl
from jax.experimental.pallas import tpu as pltpu


def csquare_kernel(x1_ref, x2_ref,
                   w1a_ref, b1a_ref, w2a_ref, b2a_ref, w3a_ref,
                   w1b_ref, b1b_ref, w2b_ref, b2b_ref, w3b_ref,
                   out1_ref, out2_ref, out3_ref, attn_co_ref):
    x1 = x1_ref[0]            # (c, tp): channels on sublanes, positions on lanes
    x2 = x2_ref[0]
    hp = jax.lax.Precision.HIGHEST

    def mm(w, v):
        return jnp.dot(w, v, preferred_element_type=jnp.float32, precision=hp)

    # Branch MLPs kept fully separate: no (2c, tp) concat copy, no block-diag
    # zero weights, no post-matmul sublane slices.  BN scales are folded into
    # the weights in the wrapper; only the bias add remains here.
    h1a = jnp.maximum(mm(w1a_ref[...], x1) + b1a_ref[...], 0.0)
    h2a = jnp.maximum(mm(w2a_ref[...], h1a) + b2a_ref[...], 0.0)
    h1b = jnp.maximum(mm(w1b_ref[...], x2) + b1b_ref[...], 0.0)
    h2b = jnp.maximum(mm(w2b_ref[...], h1b) + b2b_ref[...], 0.0)
    d = mm(w3a_ref[...], h2a) - mm(w3b_ref[...], h2b)      # a1 - a2, (c, tp)

    # 2-way softmax via the sigmoid of the difference: a single EUP exp.
    # Exact divides here: the channel norm below divides by (max - min), which
    # can be small, so approx-reciprocal error would be amplified.
    e = jnp.exp(-jnp.abs(d))
    inv = 1.0 / (1.0 + e)
    p_hi = inv                          # sigmoid(|d|)  = max(p1, p2)
    p_lo = e * inv                      # sigmoid(-|d|) = min(p1, p2)
    pos = d >= 0.0
    p1 = jnp.where(pos, p_hi, p_lo)     # attn_x1_softmax
    p2 = jnp.where(pos, p_lo, p_hi)     # attn_x2_softmax

    # channel_normalization: min/max over channels = sublane (XLU) reduction.
    mn = jnp.min(p_lo, axis=0, keepdims=True)
    mx = jnp.max(p_lo, axis=0, keepdims=True)
    attn = jnp.clip((p_lo - mn) / (mx - mn + 1e-6), 0.0, 1.0)

    out1_ref[0] = (x1 + x2) * 0.5 * attn
    out2_ref[0] = (1.0 - attn) * p1
    out3_ref[0] = (1.0 - attn) * p2

    # attn_co written directly in (s, c, h*w) order: m small static stores of
    # (c, hw) lane slices.  Saves the wrapper transpose's extra HBM pass.
    m = attn_co_ref.shape[1]
    hw = attn_co_ref.shape[3]
    for j in range(m):
        attn_co_ref[0, j] = attn[:, j * hw:(j + 1) * hw]


def _fold_branch(w1, s1, b1, w2, s2, b2, w3):
    # Fold BN scale into the (transposed, out-channels-on-rows) conv weights;
    # biases become column vectors for broadcasting against (rows, tp).
    return ((w1 * s1).T, b1.T, (w2 * s2).T, b2.T, w3.T)


def _pick_s_per_step(s, hw, c, n, budget_bytes=16 << 20):
    """Number of s-slices per grid step (lane tile tp = m * hw).

    Constraints: m divides s, and m*hw is a multiple of 128 unless m == s
    (full-dim block exemption).  Prefers the largest tile within a VMEM
    budget while keeping >= 2 total grid steps for v7x's two TensorCores.
    """
    max_tp = max(128, budget_bytes // (100 * c))   # ~100 live bytes per lane col
    valid = [m for m in range(1, s + 1)
             if s % m == 0 and ((m * hw) % 128 == 0 or m == s)]
    in_budget = [m for m in valid if m * hw <= max_tp]
    if in_budget:
        multi = [m for m in in_budget if n * (s // m) >= 2]
        return max(multi) if multi else max(in_budget)
    # TODO(synk): pad the position axis for huge/awkward (s, h*w) shapes
    # instead of taking the smallest lane-legal (possibly over-budget) tile.
    return min(valid)


def csquare_forward(x1, x2, params, m=None):
    """x1, x2: [n, c, s, h, w] float32."""
    n, c, s, h, w = x1.shape
    hw = h * w
    P = s * hw
    if m is None:
        m = _pick_s_per_step(s, hw, c, n)
    assert s % m == 0
    tp = m * hw

    (w1a, s1a, b1a, w2a, s2a, b2a, w3a,
     w1b, s1b, b1b, w2b, s2b, b2b, w3b) = params
    Wa = _fold_branch(w1a, s1a, b1a, w2a, s2a, b2a, w3a)
    Wb = _fold_branch(w1b, s1b, b1b, w2b, s2b, b2b, w3b)
    hidden = w1a.shape[1]

    # NCHW-native: pure reshapes, no wrapper transposes / extra HBM passes.
    x1r = x1.reshape(n, c, P)
    x2r = x2.reshape(n, c, P)

    x_spec = pl.BlockSpec((1, c, tp), lambda ni, pi: (ni, 0, pi))
    attn_spec = pl.BlockSpec((1, m, c, hw), lambda ni, pi: (ni, pi, 0, 0))

    def w_spec(p):
        return pl.BlockSpec(p.shape, lambda ni, pi: (0,) * p.ndim)

    out_shape = (
        jax.ShapeDtypeStruct((n, c, P), jnp.float32),       # out1
        jax.ShapeDtypeStruct((n, c, P), jnp.float32),       # out2
        jax.ShapeDtypeStruct((n, c, P), jnp.float32),       # out3
        jax.ShapeDtypeStruct((n, s, c, hw), jnp.float32),   # attn_co layout
    )

    weight_bytes = 4 * sum(int(a.size) for a in (*Wa, *Wb))
    cost = pl.CostEstimate(
        flops=int(n * P * 4 * hidden * (2 * c + hidden) + 30 * n * c * P),
        transcendentals=int(n * c * P),
        bytes_accessed=int(6 * n * c * P * 4 + weight_bytes),
    )

    out1f, out2f, out3f, attnf = pl.pallas_call(
        csquare_kernel,
        out_shape=out_shape,
        grid=(n, s // m),
        in_specs=[x_spec, x_spec] + [w_spec(p) for p in (*Wa, *Wb)],
        out_specs=[x_spec, x_spec, x_spec, attn_spec],
        compiler_params=pltpu.CompilerParams(
            dimension_semantics=("parallel", "parallel"),
            vmem_limit_bytes=48 * 1024 * 1024),
        cost_estimate=cost,
    )(x1r, x2r, *Wa, *Wb)

    out1 = out1f.reshape(n, c, s, h, w)
    out2 = out2f.reshape(n, c, s, h, w)
    out3 = out3f.reshape(n, c, s, h, w)
    attn_co = attnf.reshape(n * s, c, h, w)   # free: already in (n s) c h w order
    return out1, out2, out3, attn_co


def make_params(key, c, hidden):
    """Deterministic synthetic weights for the two conv branches (BN as s/b)."""
    ks = jax.random.split(key, 2)

    def branch(k0):
        kk = jax.random.split(k0, 7)
        w1 = 0.2 * jax.random.normal(kk[0], (c, hidden), jnp.float32)
        s1 = 1.0 + 0.05 * jax.random.normal(kk[1], (1, hidden), jnp.float32)
        b1 = 0.05 * jax.random.normal(kk[2], (1, hidden), jnp.float32)
        w2 = 0.2 * jax.random.normal(kk[3], (hidden, hidden), jnp.float32)
        s2 = 1.0 + 0.05 * jax.random.normal(kk[4], (1, hidden), jnp.float32)
        b2 = 0.05 * jax.random.normal(kk[5], (1, hidden), jnp.float32)
        w3 = 0.2 * jax.random.normal(kk[6], (hidden, c), jnp.float32)
        return (w1, s1, b1, w2, s2, b2, w3)

    return branch(ks[0]) + branch(ks[1])


def csquare_ref(x1, x2, params):
    """Pure-JAX reference mirroring the PyTorch semantics (f32 matmuls)."""
    (w1a, s1a, b1a, w2a, s2a, b2a, w3a,
     w1b, s1b, b1b, w2b, s2b, b2b, w3b) = params
    hp = jax.lax.Precision.HIGHEST

    def conv(x, wm):  # 1x1 conv over channel axis 1, weight [cin, cout]
        return jnp.einsum("ncshw,cd->ndshw", x, wm, precision=hp)

    def bcast(v):
        return v.reshape(1, -1, 1, 1, 1)

    def mlp(x, w1, s1, b1, w2, s2, b2, w3):
        h1 = jax.nn.relu(conv(x, w1) * bcast(s1) + bcast(b1))
        h2 = jax.nn.relu(conv(h1, w2) * bcast(s2) + bcast(b2))
        return conv(h2, w3)

    a1 = mlp(x1, w1a, s1a, b1a, w2a, s2a, b2a, w3a)
    a2 = mlp(x2, w1b, s1b, b1b, w2b, s2b, b2b, w3b)
    p = jax.nn.softmax(jnp.stack([a1, a2], axis=1), axis=1)
    p1, p2 = p[:, 0], p[:, 1]
    attn_min = jnp.minimum(p1, p2)
    mn = attn_min.min(axis=1, keepdims=True)
    mx = attn_min.max(axis=1, keepdims=True)
    attn = jnp.clip((attn_min - mn) / (mx - mn + 1e-6), 0.0, 1.0)
    n, c, s, h, w = x1.shape
    attn_co = jnp.transpose(attn, (0, 2, 1, 3, 4)).reshape(n * s, c, h, w)
    return (x1 + x2) / 2 * attn, (1.0 - attn) * p1, (1.0 - attn) * p2, attn_co


if __name__ == "__main__":
    # Small shapes consistent with the module: in_channels=32, squeeze_ratio=4
    # -> hidden_dim=8; x1, x2: [n, c, s, h, w] = [2, 32, 4, 8, 8]
    n, c, s, h, w = 2, 32, 4, 8, 8
    hidden = c // 4

    key = jax.random.PRNGKey(0)
    k1, k2, kp = jax.random.split(key, 3)
    x1 = jax.random.normal(k1, (n, c, s, h, w), jnp.float32)
    x2 = jax.random.normal(k2, (n, c, s, h, w), jnp.float32)
    params = make_params(kp, c, hidden)

    outs = csquare_forward(x1, x2, params)
    outs = jax.block_until_ready(outs)

    refs = csquare_ref(x1, x2, params)
    for o, r in zip(outs, refs):
        assert o.shape == r.shape, (o.shape, r.shape)
        assert jnp.allclose(o, r, atol=2e-3, rtol=2e-3), float(jnp.abs(o - r).max())

    print("KERNEL_OK")
</pallas_src>

<mosaic_0001>
module attributes {stable_mosaic.version = 11 : i64} {
  func.func @csquare_kernel(%arg0: i32, %arg1: i32, %arg2: memref<1x32x256xf32, #tpu.memory_space<vmem>>, %arg3: memref<1x32x256xf32, #tpu.memory_space<vmem>>, %arg4: memref<8x32xf32, #tpu.memory_space<vmem>>, %arg5: memref<8x1xf32, #tpu.memory_space<vmem>>, %arg6: memref<8x8xf32, #tpu.memory_space<vmem>>, %arg7: memref<8x1xf32, #tpu.memory_space<vmem>>, %arg8: memref<32x8xf32, #tpu.memory_space<vmem>>, %arg9: memref<8x32xf32, #tpu.memory_space<vmem>>, %arg10: memref<8x1xf32, #tpu.memory_space<vmem>>, %arg11: memref<8x8xf32, #tpu.memory_space<vmem>>, %arg12: memref<8x1xf32, #tpu.memory_space<vmem>>, %arg13: memref<32x8xf32, #tpu.memory_space<vmem>>, %arg14: memref<1x32x256xf32, #tpu.memory_space<vmem>>, %arg15: memref<1x32x256xf32, #tpu.memory_space<vmem>>, %arg16: memref<1x32x256xf32, #tpu.memory_space<vmem>>, %arg17: memref<1x4x32x64xf32, #tpu.memory_space<vmem>>) attributes {dimension_semantics = [#tpu.dimension_semantics<parallel>, #tpu.dimension_semantics<parallel>], iteration_bounds = array<i64: 2, 1>, scalar_prefetch = 0 : i64, scratch_operands = 0 : i64, tpu.core_type = #tpu.core_type<tc>, window_params = [{transform_indices = @transform_0, window_bounds = array<i64: 1, 32, 256>}, {transform_indices = @transform_1, window_bounds = array<i64: 1, 32, 256>}, {pipeline_mode = #tpu.pipeline_mode<synchronous>, transform_indices = @transform_2, window_bounds = array<i64: 8, 32>}, {pipeline_mode = #tpu.pipeline_mode<synchronous>, transform_indices = @transform_3, window_bounds = array<i64: 8, 1>}, {pipeline_mode = #tpu.pipeline_mode<synchronous>, transform_indices = @transform_4, window_bounds = array<i64: 8, 8>}, {pipeline_mode = #tpu.pipeline_mode<synchronous>, transform_indices = @transform_5, window_bounds = array<i64: 8, 1>}, {pipeline_mode = #tpu.pipeline_mode<synchronous>, transform_indices = @transform_6, window_bounds = array<i64: 32, 8>}, {pipeline_mode = #tpu.pipeline_mode<synchronous>, transform_indices = @transform_7, window_bounds = array<i64: 8, 32>}, {pipeline_mode = #tpu.pipeline_mode<synchronous>, transform_indices = @transform_8, window_bounds = array<i64: 8, 1>}, {pipeline_mode = #tpu.pipeline_mode<synchronous>, transform_indices = @transform_9, window_bounds = array<i64: 8, 8>}, {pipeline_mode = #tpu.pipeline_mode<synchronous>, transform_indices = @transform_10, window_bounds = array<i64: 8, 1>}, {pipeline_mode = #tpu.pipeline_mode<synchronous>, transform_indices = @transform_11, window_bounds = array<i64: 32, 8>}, {transform_indices = @transform_12, window_bounds = array<i64: 1, 32, 256>}, {transform_indices = @transform_13, window_bounds = array<i64: 1, 32, 256>}, {transform_indices = @transform_14, window_bounds = array<i64: 1, 32, 256>}, {transform_indices = @transform_15, window_bounds = array<i64: 1, 4, 32, 64>}]} {
    %c0 = arith.constant 0 : index
    %c0_0 = arith.constant 0 : index
    %c0_1 = arith.constant 0 : index
    %0 = vector.load %arg2[%c0, %c0_0, %c0_1] : memref<1x32x256xf32, #tpu.memory_space<vmem>>, vector<1x32x256xf32>
    %1 = vector.shape_cast %0 : vector<1x32x256xf32> to vector<32x256xf32>
    %c0_2 = arith.constant 0 : index
    %c0_3 = arith.constant 0 : index
    %c0_4 = arith.constant 0 : index
    %2 = vector.load %arg3[%c0_2, %c0_3, %c0_4] : memref<1x32x256xf32, #tpu.memory_space<vmem>>, vector<1x32x256xf32>
    %3 = vector.shape_cast %2 : vector<1x32x256xf32> to vector<32x256xf32>
    %c0_5 = arith.constant 0 : index
    %c0_6 = arith.constant 0 : index
    %4 = vector.load %arg4[%c0_5, %c0_6] : memref<8x32xf32, #tpu.memory_space<vmem>>, vector<8x32xf32>
    %cst = arith.constant dense<0.000000e+00> : vector<8x256xf32>
    %5 = tpu.matmul %4, %1, %cst {dimension_numbers = #tpu.dot_dimension_numbers<[1], [0], [0], [1], [0, 0, 1, 1], [], []>, precision = #tpu.contract_precision<fp32>} : vector<8x32xf32>, vector<32x256xf32>, vector<8x256xf32> -> vector<8x256xf32>
    %c0_7 = arith.constant 0 : index
    %c0_8 = arith.constant 0 : index
    %6 = vector.load %arg5[%c0_7, %c0_8] : memref<8x1xf32, #tpu.memory_space<vmem>>, vector<8x1xf32>
    %7 = vector.broadcast %6 : vector<8x1xf32> to vector<8x256xf32>
    %8 = arith.addf %5, %7 : vector<8x256xf32>
    %cst_9 = arith.constant 0.000000e+00 : f32
    %9 = vector.broadcast %cst_9 : f32 to vector<8x256xf32>
    %10 = arith.maximumf %8, %9 : vector<8x256xf32>
    %c0_10 = arith.constant 0 : index
    %c0_11 = arith.constant 0 : index
    %11 = vector.load %arg6[%c0_10, %c0_11] : memref<8x8xf32, #tpu.memory_space<vmem>>, vector<8x8xf32>
    %cst_12 = arith.constant dense<0.000000e+00> : vector<8x256xf32>
    %12 = tpu.matmul %11, %10, %cst_12 {dimension_numbers = #tpu.dot_dimension_numbers<[1], [0], [0], [1], [0, 0, 1, 1], [], []>, precision = #tpu.contract_precision<fp32>} : vector<8x8xf32>, vector<8x256xf32>, vector<8x256xf32> -> vector<8x256xf32>
    %c0_13 = arith.constant 0 : index
    %c0_14 = arith.constant 0 : index
    %13 = vector.load %arg7[%c0_13, %c0_14] : memref<8x1xf32, #tpu.memory_space<vmem>>, vector<8x1xf32>
    %14 = vector.broadcast %13 : vector<8x1xf32> to vector<8x256xf32>
    %15 = arith.addf %12, %14 : vector<8x256xf32>
    %cst_15 = arith.constant 0.000000e+00 : f32
    %16 = vector.broadcast %cst_15 : f32 to vector<8x256xf32>
    %17 = arith.maximumf %15, %16 : vector<8x256xf32>
    %c0_16 = arith.constant 0 : index
    %c0_17 = arith.constant 0 : index
    %18 = vector.load %arg9[%c0_16, %c0_17] : memref<8x32xf32, #tpu.memory_space<vmem>>, vector<8x32xf32>
    %cst_18 = arith.constant dense<0.000000e+00> : vector<8x256xf32>
    %19 = tpu.matmul %18, %3, %cst_18 {dimension_numbers = #tpu.dot_dimension_numbers<[1], [0], [0], [1], [0, 0, 1, 1], [], []>, precision = #tpu.contract_precision<fp32>} : vector<8x32xf32>, vector<32x256xf32>, vector<8x256xf32> -> vector<8x256xf32>
    %c0_19 = arith.constant 0 : index
    %c0_20 = arith.constant 0 : index
    %20 = vector.load %arg10[%c0_19, %c0_20] : memref<8x1xf32, #tpu.memory_space<vmem>>, vector<8x1xf32>
    %21 = vector.broadcast %20 : vector<8x1xf32> to vector<8x256xf32>
    %22 = arith.addf %19, %21 : vector<8x256xf32>
    %cst_21 = arith.constant 0.000000e+00 : f32
    %23 = vector.broadcast %cst_21 : f32 to vector<8x256xf32>
    %24 = arith.maximumf %22, %23 : vector<8x256xf32>
    %c0_22 = arith.constant 0 : index
    %c0_23 = arith.constant 0 : index
    %25 = vector.load %arg11[%c0_22, %c0_23] : memref<8x8xf32, #tpu.memory_space<vmem>>, vector<8x8xf32>
    %cst_24 = arith.constant dense<0.000000e+00> : vector<8x256xf32>
    %26 = tpu.matmul %25, %24, %cst_24 {dimension_numbers = #tpu.dot_dimension_numbers<[1], [0], [0], [1], [0, 0, 1, 1], [], []>, precision = #tpu.contract_precision<fp32>} : vector<8x8xf32>, vector<8x256xf32>, vector<8x256xf32> -> vector<8x256xf32>
    %c0_25 = arith.constant 0 : index
    %c0_26 = arith.constant 0 : index
    %27 = vector.load %arg12[%c0_25, %c0_26] : memref<8x1xf32, #tpu.memory_space<vmem>>, vector<8x1xf32>
    %28 = vector.broadcast %27 : vector<8x1xf32> to vector<8x256xf32>
    %29 = arith.addf %26, %28 : vector<8x256xf32>
    %cst_27 = arith.constant 0.000000e+00 : f32
    %30 = vector.broadcast %cst_27 : f32 to vector<8x256xf32>
    %31 = arith.maximumf %29, %30 : vector<8x256xf32>
    %c0_28 = arith.constant 0 : index
    %c0_29 = arith.constant 0 : index
    %32 = vector.load %arg8[%c0_28, %c0_29] : memref<32x8xf32, #tpu.memory_space<vmem>>, vector<32x8xf32>
    %cst_30 = arith.constant dense<0.000000e+00> : vector<32x256xf32>
    %33 = tpu.matmul %32, %17, %cst_30 {dimension_numbers = #tpu.dot_dimension_numbers<[1], [0], [0], [1], [0, 0, 1, 1], [], []>, precision = #tpu.contract_precision<fp32>} : vector<32x8xf32>, vector<8x256xf32>, vector<32x256xf32> -> vector<32x256xf32>
    %c0_31 = arith.constant 0 : index
    %c0_32 = arith.constant 0 : index
    %34 = vector.load %arg13[%c0_31, %c0_32] : memref<32x8xf32, #tpu.memory_space<vmem>>, vector<32x8xf32>
    %cst_33 = arith.constant dense<0.000000e+00> : vector<32x256xf32>
    %35 = tpu.matmul %34, %31, %cst_33 {dimension_numbers = #tpu.dot_dimension_numbers<[1], [0], [0], [1], [0, 0, 1, 1], [], []>, precision = #tpu.contract_precision<fp32>} : vector<32x8xf32>, vector<8x256xf32>, vector<32x256xf32> -> vector<32x256xf32>
    %36 = arith.subf %33, %35 : vector<32x256xf32>
    %37 = math.absf %36 : vector<32x256xf32>
    %cst_34 = arith.constant 0.000000e+00 : f32
    %38 = vector.broadcast %cst_34 : f32 to vector<32x256xf32>
    %39 = arith.subf %38, %37 : vector<32x256xf32>
    %40 = math.exp %39 : vector<32x256xf32>
    %cst_35 = arith.constant 1.000000e+00 : f32
    %41 = vector.broadcast %cst_35 : f32 to vector<32x256xf32>
    %42 = arith.addf %41, %40 : vector<32x256xf32>
    %cst_36 = arith.constant 1.000000e+00 : f32
    %43 = vector.broadcast %cst_36 : f32 to vector<32x256xf32>
    %44 = arith.divf %43, %42 : vector<32x256xf32>
    %45 = arith.mulf %40, %44 : vector<32x256xf32>
    %cst_37 = arith.constant 0.000000e+00 : f32
    %46 = vector.broadcast %cst_37 : f32 to vector<32x256xf32>
    %47 = arith.cmpf oge, %36, %46 : vector<32x256xf32>
    %48 = arith.select %47, %44, %45 : vector<32x256xi1>, vector<32x256xf32>
    %49 = arith.select %47, %45, %44 : vector<32x256xi1>, vector<32x256xf32>
    %cst_38 = arith.constant dense<0x7F800000> : vector<256xf32>
    %50 = vector.multi_reduction <minimumf>, %45, %cst_38 [0] : vector<32x256xf32> to vector<256xf32>
    %51 = vector.shape_cast %50 : vector<256xf32> to vector<1x256xf32>
    %cst_39 = arith.constant dense<0xFF800000> : vector<256xf32>
    %52 = vector.multi_reduction <maximumf>, %45, %cst_39 [0] : vector<32x256xf32> to vector<256xf32>
    %53 = vector.shape_cast %52 : vector<256xf32> to vector<1x256xf32>
    %54 = vector.broadcast %51 : vector<1x256xf32> to vector<32x256xf32>
    %55 = arith.subf %45, %54 : vector<32x256xf32>
    %56 = arith.subf %53, %51 : vector<1x256xf32>
    %cst_40 = arith.constant 9.99999997E-7 : f32
    %57 = vector.broadcast %cst_40 : f32 to vector<1x256xf32>
    %58 = arith.addf %56, %57 : vector<1x256xf32>
    %59 = vector.broadcast %58 : vector<1x256xf32> to vector<32x256xf32>
    %60 = arith.divf %55, %59 : vector<32x256xf32>
    %cst_41 = arith.constant 0.000000e+00 : f32
    %cst_42 = arith.constant 1.000000e+00 : f32
    %61 = vector.broadcast %cst_41 : f32 to vector<32x256xf32>
    %62 = arith.maximumf %61, %60 : vector<32x256xf32>
    %63 = vector.broadcast %cst_42 : f32 to vector<32x256xf32>
    %64 = arith.minimumf %63, %62 : vector<32x256xf32>
    %65 = arith.addf %1, %3 : vector<32x256xf32>
    %cst_43 = arith.constant 5.000000e-01 : f32
    %66 = vector.broadcast %cst_43 : f32 to vector<32x256xf32>
    %67 = arith.mulf %65, %66 : vector<32x256xf32>
    %68 = arith.mulf %67, %64 : vector<32x256xf32>
    %c0_44 = arith.constant 0 : index
    %c0_45 = arith.constant 0 : index
    %c0_46 = arith.constant 0 : index
    %69 = vector.load %arg14[%c0_44, %c0_45, %c0_46] : memref<1x32x256xf32, #tpu.memory_space<vmem>>, vector<1x32x256xf32>
    %70 = vector.shape_cast %69 : vector<1x32x256xf32> to vector<32x256xf32>
    %71 = vector.shape_cast %68 : vector<32x256xf32> to vector<1x32x256xf32>
    tpu.vector_store %arg14[%c0_44, %c0_45, %c0_46], %71 {strides = array<i32>} : memref<1x32x256xf32, #tpu.memory_space<vmem>>, vector<1x32x256xf32>,
    %cst_47 = arith.constant 1.000000e+00 : f32
    %72 = vector.broadcast %cst_47 : f32 to vector<32x256xf32>
    %73 = arith.subf %72, %64 : vector<32x256xf32>
    %74 = arith.mulf %73, %48 : vector<32x256xf32>
    %c0_48 = arith.constant 0 : index
    %c0_49 = arith.constant 0 : index
    %c0_50 = arith.constant 0 : index
    %75 = vector.load %arg15[%c0_48, %c0_49, %c0_50] : memref<1x32x256xf32, #tpu.memory_space<vmem>>, vector<1x32x256xf32>
    %76 = vector.shape_cast %75 : vector<1x32x256xf32> to vector<32x256xf32>
    %77 = vector.shape_cast %74 : vector<32x256xf32> to vector<1x32x256xf32>
    tpu.vector_store %arg15[%c0_48, %c0_49, %c0_50], %77 {strides = array<i32>} : memref<1x32x256xf32, #tpu.memory_space<vmem>>, vector<1x32x256xf32>,
    %cst_51 = arith.constant 1.000000e+00 : f32
    %78 = vector.broadcast %cst_51 : f32 to vector<32x256xf32>
    %79 = arith.subf %78, %64 : vector<32x256xf32>
    %80 = arith.mulf %79, %49 : vector<32x256xf32>
    %c0_52 = arith.constant 0 : index
    %c0_53 = arith.constant 0 : index
    %c0_54 = arith.constant 0 : index
    %81 = vector.load %arg16[%c0_52, %c0_53, %c0_54] : memref<1x32x256xf32, #tpu.memory_space<vmem>>, vector<1x32x256xf32>
    %82 = vector.shape_cast %81 : vector<1x32x256xf32> to vector<32x256xf32>
    %83 = vector.shape_cast %80 : vector<32x256xf32> to vector<1x32x256xf32>
    tpu.vector_store %arg16[%c0_52, %c0_53, %c0_54], %83 {strides = array<i32>} : memref<1x32x256xf32, #tpu.memory_space<vmem>>, vector<1x32x256xf32>,
    %84 = vector.extract_strided_slice %64 {offsets = [0, 0], sizes = [32, 64], strides = [1, 1]} : vector<32x256xf32> to vector<32x64xf32>
    %c0_55 = arith.constant 0 : index
    %c0_56 = arith.constant 0 : index
    %c0_57 = arith.constant 0 : index
    %c0_58 = arith.constant 0 : index
    %85 = vector.load %arg17[%c0_55, %c0_56, %c0_57, %c0_58] : memref<1x4x32x64xf32, #tpu.memory_space<vmem>>, vector<1x1x32x64xf32>
    %86 = vector.shape_cast %85 : vector<1x1x32x64xf32> to vector<32x64xf32>
    %87 = vector.shape_cast %84 : vector<32x64xf32> to vector<1x1x32x64xf32>
    tpu.vector_store %arg17[%c0_55, %c0_56, %c0_57, %c0_58], %87 {strides = array<i32>} : memref<1x4x32x64xf32, #tpu.memory_space<vmem>>, vector<1x1x32x64xf32>,
    %88 = vector.extract_strided_slice %64 {offsets = [0, 64], sizes = [32, 64], strides = [1, 1]} : vector<32x256xf32> to vector<32x64xf32>
    %c0_59 = arith.constant 0 : index
    %c1 = arith.constant 1 : index
    %c0_60 = arith.constant 0 : index
    %c0_61 = arith.constant 0 : index
    %89 = vector.load %arg17[%c0_59, %c1, %c0_60, %c0_61] : memref<1x4x32x64xf32, #tpu.memory_space<vmem>>, vector<1x1x32x64xf32>
    %90 = vector.shape_cast %89 : vector<1x1x32x64xf32> to vector<32x64xf32>
    %91 = vector.shape_cast %88 : vector<32x64xf32> to vector<1x1x32x64xf32>
    tpu.vector_store %arg17[%c0_59, %c1, %c0_60, %c0_61], %91 {strides = array<i32>} : memref<1x4x32x64xf32, #tpu.memory_space<vmem>>, vector<1x1x32x64xf32>,
    %92 = vector.extract_strided_slice %64 {offsets = [0, 128], sizes = [32, 64], strides = [1, 1]} : vector<32x256xf32> to vector<32x64xf32>
    %c0_62 = arith.constant 0 : index
    %c2 = arith.constant 2 : index
    %c0_63 = arith.constant 0 : index
    %c0_64 = arith.constant 0 : index
    %93 = vector.load %arg17[%c0_62, %c2, %c0_63, %c0_64] : memref<1x4x32x64xf32, #tpu.memory_space<vmem>>, vector<1x1x32x64xf32>
    %94 = vector.shape_cast %93 : vector<1x1x32x64xf32> to vector<32x64xf32>
    %95 = vector.shape_cast %92 : vector<32x64xf32> to vector<1x1x32x64xf32>
    tpu.vector_store %arg17[%c0_62, %c2, %c0_63, %c0_64], %95 {strides = array<i32>} : memref<1x4x32x64xf32, #tpu.memory_space<vmem>>, vector<1x1x32x64xf32>,
    %96 = vector.extract_strided_slice %64 {offsets = [0, 192], sizes = [32, 64], strides = [1, 1]} : vector<32x256xf32> to vector<32x64xf32>
    %c0_65 = arith.constant 0 : index
    %c3 = arith.constant 3 : index
    %c0_66 = arith.constant 0 : index
    %c0_67 = arith.constant 0 : index
    %97 = vector.load %arg17[%c0_65, %c3, %c0_66, %c0_67] : memref<1x4x32x64xf32, #tpu.memory_space<vmem>>, vector<1x1x32x64xf32>
    %98 = vector.shape_cast %97 : vector<1x1x32x64xf32> to vector<32x64xf32>
    %99 = vector.shape_cast %96 : vector<32x64xf32> to vector<1x1x32x64xf32>
    tpu.vector_store %arg17[%c0_65, %c3, %c0_66, %c0_67], %99 {strides = array<i32>} : memref<1x4x32x64xf32, #tpu.memory_space<vmem>>, vector<1x1x32x64xf32>,
    return
  }
  func.func @transform_0(%arg0: i32, %arg1: i32) -> (i32, i32, i32) {
    %c0_i32 = arith.constant 0 : i32
    %c0_i32_0 = arith.constant 0 : i32
    return %arg0, %c0_i32, %arg1 : i32, i32, i32
  }
  func.func @transform_1(%arg0: i32, %arg1: i32) -> (i32, i32, i32) {
    %c0_i32 = arith.constant 0 : i32
    %c0_i32_0 = arith.constant 0 : i32
    return %arg0, %c0_i32, %arg1 : i32, i32, i32
  }
  func.func @transform_2(%arg0: i32, %arg1: i32) -> (i32, i32) {
    %c0_i32 = arith.constant 0 : i32
    %c0_i32_0 = arith.constant 0 : i32
    %c0_i32_1 = arith.constant 0 : i32
    return %c0_i32, %c0_i32_0 : i32, i32
  }
  func.func @transform_3(%arg0: i32, %arg1: i32) -> (i32, i32) {
    %c0_i32 = arith.constant 0 : i32
    %c0_i32_0 = arith.constant 0 : i32
    %c0_i32_1 = arith.constant 0 : i32
    return %c0_i32, %c0_i32_0 : i32, i32
  }
  func.func @transform_4(%arg0: i32, %arg1: i32) -> (i32, i32) {
    %c0_i32 = arith.constant 0 : i32
    %c0_i32_0 = arith.constant 0 : i32
    %c0_i32_1 = arith.constant 0 : i32
    return %c0_i32, %c0_i32_0 : i32, i32
  }
  func.func @transform_5(%arg0: i32, %arg1: i32) -> (i32, i32) {
    %c0_i32 = arith.constant 0 : i32
    %c0_i32_0 = arith.constant 0 : i32
    %c0_i32_1 = arith.constant 0 : i32
    return %c0_i32, %c0_i32_0 : i32, i32
  }
  func.func @transform_6(%arg0: i32, %arg1: i32) -> (i32, i32) {
    %c0_i32 = arith.constant 0 : i32
    %c0_i32_0 = arith.constant 0 : i32
    %c0_i32_1 = arith.constant 0 : i32
    return %c0_i32, %c0_i32_0 : i32, i32
  }
  func.func @transform_7(%arg0: i32, %arg1: i32) -> (i32, i32) {
    %c0_i32 = arith.constant 0 : i32
    %c0_i32_0 = arith.constant 0 : i32
    %c0_i32_1 = arith.constant 0 : i32
    return %c0_i32, %c0_i32_0 : i32, i32
  }
  func.func @transform_8(%arg0: i32, %arg1: i32) -> (i32, i32) {
    %c0_i32 = arith.constant 0 : i32
    %c0_i32_0 = arith.constant 0 : i32
    %c0_i32_1 = arith.constant 0 : i32
    return %c0_i32, %c0_i32_0 : i32, i32
  }
  func.func @transform_9(%arg0: i32, %arg1: i32) -> (i32, i32) {
    %c0_i32 = arith.constant 0 : i32
    %c0_i32_0 = arith.constant 0 : i32
    %c0_i32_1 = arith.constant 0 : i32
    return %c0_i32, %c0_i32_0 : i32, i32
  }
  func.func @transform_10(%arg0: i32, %arg1: i32) -> (i32, i32) {
    %c0_i32 = arith.constant 0 : i32
    %c0_i32_0 = arith.constant 0 : i32
    %c0_i32_1 = arith.constant 0 : i32
    return %c0_i32, %c0_i32_0 : i32, i32
  }
  func.func @transform_11(%arg0: i32, %arg1: i32) -> (i32, i32) {
    %c0_i32 = arith.constant 0 : i32
    %c0_i32_0 = arith.constant 0 : i32
    %c0_i32_1 = arith.constant 0 : i32
    return %c0_i32, %c0_i32_0 : i32, i32
  }
  func.func @transform_12(%arg0: i32, %arg1: i32) -> (i32, i32, i32) {
    %c0_i32 = arith.constant 0 : i32
    %c0_i32_0 = arith.constant 0 : i32
    return %arg0, %c0_i32, %arg1 : i32, i32, i32
  }
  func.func @transform_13(%arg0: i32, %arg1: i32) -> (i32, i32, i32) {
    %c0_i32 = arith.constant 0 : i32
    %c0_i32_0 = arith.constant 0 : i32
    return %arg0, %c0_i32, %arg1 : i32, i32, i32
  }
  func.func @transform_14(%arg0: i32, %arg1: i32) -> (i32, i32, i32) {
    %c0_i32 = arith.constant 0 : i32
    %c0_i32_0 = arith.constant 0 : i32
    return %arg0, %c0_i32, %arg1 : i32, i32, i32
  }
  func.func @transform_15(%arg0: i32, %arg1: i32) -> (i32, i32, i32, i32) {
    %c0_i32 = arith.constant 0 : i32
    %c0_i32_0 = arith.constant 0 : i32
    %c0_i32_1 = arith.constant 0 : i32
    return %arg0, %arg1, %c0_i32, %c0_i32_0 : i32, i32, i32, i32
  }
}

</mosaic_0001>

<llo_original>
// kernel: tpu_custom_call.1
$region0: #{tpu_custom_call.1}
  #allocation0 [shape = 'u32[]', space=smem, size = 0x4, offset = 0x4, fixed_abs, tag = 'smem constant byte address 0x4 - core index']
  #allocation1 [shape = 'u32[144,128]{1,0:T(1,128)}', space=vmem, size = 0x12000, scoped, tag = 'internal scratch']
  %s0 = inlined_call_operand.hbm [shape: f32[2,32,256], index: 0, kind: input, shape index: {}]
  %s1 = inlined_call_operand.hbm [shape: f32[2,32,256], index: 1, kind: input, shape index: {}]
  %s2 = inlined_call_operand.vmem [shape: f32[8,32], index: 2, kind: input, shape index: {}]
  %s3 = inlined_call_operand.vmem [shape: f32[8,1], index: 3, kind: input, shape index: {}]
  %s4 = inlined_call_operand.vmem [shape: f32[8,8], index: 4, kind: input, shape index: {}]
  %s5 = inlined_call_operand.vmem [shape: f32[8,1], index: 5, kind: input, shape index: {}]
  %s6 = inlined_call_operand.vmem [shape: f32[32,8], index: 6, kind: input, shape index: {}]
  %s7 = inlined_call_operand.vmem [shape: f32[8,32], index: 7, kind: input, shape index: {}]
  %s8 = inlined_call_operand.vmem [shape: f32[8,1], index: 8, kind: input, shape index: {}]
  %s9 = inlined_call_operand.vmem [shape: f32[8,8], index: 9, kind: input, shape index: {}]
  %s10 = inlined_call_operand.vmem [shape: f32[8,1], index: 10, kind: input, shape index: {}]
  %s11 = inlined_call_operand.vmem [shape: f32[32,8], index: 11, kind: input, shape index: {}]
  %s12 = inlined_call_operand.hbm [shape: f32[2,32,256], index: 12, kind: output, shape index: {0}]
  %s13 = inlined_call_operand.hbm [shape: f32[2,32,256], index: 13, kind: output, shape index: {1}]
  %s14 = inlined_call_operand.hbm [shape: f32[2,32,256], index: 14, kind: output, shape index: {2}]
  %s15 = inlined_call_operand.hbm [shape: f32[2,4,32,64], index: 15, kind: output, shape index: {3}]
  %16 = xla_tuple %s12, %s13, %s14, %s15
  %s17 = sld [smem:[#allocation0]]
  $region113: #{tpu_custom_call.1} parent=0
    _
  %s19 = ssub.s32 1, %s17
  %s20 = scalar_select 0, %s19, %s17
  $region1: #{tpu_custom_call.1} parent=0
    #allocation2 [shape = 'u8[65536]{0}', space=vmem, size = 0x10000, scoped, tag = 'input window, operand 0']
    #allocation3 [shape = 's32[2]{0}', space=sflag, size = 0x8, scoped, tag = 'scoped memory for tpu_custom_call.1']
    #allocation4 [shape = 's32[2]{0}', space=sflag, size = 0x8, scoped, tag = 'scoped memory for tpu_custom_call.1']
    #allocation5 [shape = 'u8[65536]{0}', space=vmem, size = 0x10000, scoped, tag = 'input window, operand 1']
    #allocation6 [shape = 's32[2]{0}', space=sflag, size = 0x8, scoped, tag = 'scoped memory for tpu_custom_call.1']
    #allocation7 [shape = 'u8[65536]{0}', space=vmem, size = 0x10000, scoped, tag = 'output window, operand 0']
    #allocation8 [shape = 'u8[65536]{0}', space=vmem, size = 0x10000, scoped, tag = 'output window, operand 1']
    #allocation9 [shape = 's32[2]{0}', space=sflag, size = 0x8, scoped, tag = 'scoped memory for tpu_custom_call.1']
    #allocation10 [shape = 'u8[65536]{0}', space=vmem, size = 0x10000, scoped, tag = 'output window, operand 2']
    #allocation11 [shape = 'u8[131072]{0}', space=vmem, size = 0x20000, scoped, tag = 'output window, operand 3']
    #allocation12 [shape = 's32[2]{0}', space=sflag, size = 0x8, scoped, tag = 'scoped memory for tpu_custom_call.1']
    %21 = vsyncpa [#allocation3], 0
    %s22 = scalar_lea.sflag [#allocation3], 1
    %23 = vsyncpa %s22, 0
    %24 = vsyncpa [#allocation6], 0
    %s25 = scalar_lea.sflag [#allocation6], 1
    %26 = vsyncpa %s25, 0
    %27 = vsyncpa [#allocation4], 0
    %s28 = scalar_lea.sflag [#allocation4], 1
    %29 = vsyncpa %s28, 0
    %30 = vsyncpa [#allocation9], 0
    %s31 = scalar_lea.sflag [#allocation9], 1
    %32 = vsyncpa %s31, 0
    %33 = vsyncpa [#allocation12], 0
    %s34 = scalar_lea.sflag [#allocation12], 1
    %35 = vsyncpa %s34, 0
    loop: start=0, step=1, limit=4
    $region2: #{tpu_custom_call.1} parent=1 // loop_pre_header
      _
    $region3: #{tpu_custom_call.1} parent=1 // loop_header
      %s37 = sphi 0, %s41
      %p38 = scmp.ge.s32.totalorder %s37, 4
      %s44 = sphi 0, %s56
      %s45 = sphi 0, %s52
      %s46 = sphi 0, %s44
      %s47 = sphi 0, %s45
      %s48 = sphi 0, %s46
      %s49 = sphi 0, %s47
      %s61 = sphi 0, %s63
      %s64 = sphi 0, %s61
      %s65 = sphi 0, %s64
      %s81 = sphi 0, %s65
      %s89 = sphi 0, %s91
      %s92 = sphi 0, %s89
      %s93 = sphi 0, %s92
      %s109 = sphi 0, %s93
      %s113 = sphi 0, %s113
      %s115 = sphi 0, %s113
      %s116 = sphi 0, %s115
      %s130 = sphi 0, %s116
      %s134 = sphi 0, %s134
      %s136 = sphi 0, %s134
      %s137 = sphi 0, %s136
      %s151 = sphi 0, %s137
      %s155 = sphi 0, %s155
      %s157 = sphi 0, %s155
      %s158 = sphi 0, %s157
      %s172 = sphi 0, %s158
      %s176 = sphi 0, %s176
      %s178 = sphi 0, %s176
      %s179 = sphi 0, %s178
      %s193 = sphi 0, %s179
      %s197 = sphi 0, %s197
      %s199 = sphi 0, %s197
      %s200 = sphi 0, %s199
      %s214 = sphi 0, %s200
      %s218 = sphi 0, %s218
      %s220 = sphi 0, %s218
      %s221 = sphi 0, %s220
      %s235 = sphi 0, %s221
      %s239 = sphi 0, %s239
      %s241 = sphi 0, %s239
      %s242 = sphi 0, %s241
      %s256 = sphi 0, %s242
      %s260 = sphi 0, %s260
      %s262 = sphi 0, %s260
      %s263 = sphi 0, %s262
      %s277 = sphi 0, %s263
      %s281 = sphi 0, %s281
      %s283 = sphi 0, %s281
      %s284 = sphi 0, %s283
      %s298 = sphi 0, %s284
      %s302 = sphi 0, %s302
      %s304 = sphi 0, %s302
      %s305 = sphi 0, %s304
      %s319 = sphi 0, %s305
      %s327 = sphi 0, %s329
      %s330 = sphi 0, %s327
      %s331 = sphi 0, %s330
      %s347 = sphi 0, %s331
      %s355 = sphi 0, %s357
      %s358 = sphi 0, %s355
      %s359 = sphi 0, %s358
      %s375 = sphi 0, %s359
      %s383 = sphi 0, %s385
      %s386 = sphi 0, %s383
      %s387 = sphi 0, %s386
      %s403 = sphi 0, %s387
      %s411 = sphi 0, %s413
      %s414 = sphi 0, %s411
      %s415 = sphi 0, %s414
      %s431 = sphi 0, %s415
    $region4: #{tpu_custom_call.1} parent=1 // loop_header_branch
      %40 = sbr.rel (%p38) target = $region8
    $region5: #{tpu_custom_call.1} parent=1 // loop_body
      %s42 = ssub.s32 %s37, 1
      %s43 = ssub.s32 %s37, 2
      %s50 = sadd.s32 1, %s45
      %p51 = scmp.ge.s32.totalorder %s50, 1
      %s52 = scalar_select %p51, 0, %s50
      %s53 = sadd.s32 1, %s44
      %s54 = scalar_select %p51, %s53, %s44
      %p55 = scmp.ge.s32.totalorder %s54, 2
      %s56 = scalar_select %p55, 0, %s54
      %s57 = ssub.s32 %s44, %s56
      %s58 = ssub.s32 %s45, %s52
      %s59 = sor.u32 %s57, %s58
      %p60 = scmp.eq.s32.totalorder %s59, 0
      %s62 = sadd.s32 %s61, 1
      %s63 = scalar_select %p60, %s61, %s62
      %p66 = pneg %p60
      %p67 = scmp.eq.s32.totalorder %s37, 1
      %p68 = por %p66, %p67
      %p69 = scmp.ne.s32.totalorder %s61, %s64
      %p70 = scmp.eq.s32.totalorder %s37, 0
      %p71 = por %p69, %p70
      %p72 = scmp.ne.s32.totalorder %s61, %s64
      %p73 = scmp.eq.s32.totalorder %s42, 1
      %p74 = por %p72, %p73
      %p75 = scmp.ne.s32.totalorder %s64, %s65
      %p76 = scmp.eq.s32.totalorder %s42, 0
      %p77 = por %p75, %p76
      %p78 = scmp.ne.s32.totalorder %s64, %s65
      %p79 = scmp.eq.s32.totalorder %s43, 1
      %p80 = por %p78, %p79
      %p82 = scmp.ne.s32.totalorder %s65, %s81
      %p83 = scmp.eq.s32.totalorder %s43, 0
      %p84 = por %p82, %p83
      %s85 = ssub.s32 %s44, %s56
      %s86 = ssub.s32 %s45, %s52
      %s87 = sor.u32 %s85, %s86
      %p88 = scmp.eq.s32.totalorder %s87, 0
      %s90 = sadd.s32 %s89, 1
      %s91 = scalar_select %p88, %s89, %s90
      %p94 = pneg %p88
      %p95 = scmp.eq.s32.totalorder %s37, 1
      %p96 = por %p94, %p95
      %p97 = scmp.ne.s32.totalorder %s89, %s92
      %p98 = scmp.eq.s32.totalorder %s37, 0
      %p99 = por %p97, %p98
      %p100 = scmp.ne.s32.totalorder %s89, %s92
      %p101 = scmp.eq.s32.totalorder %s42, 1
      %p102 = por %p100, %p101
      %p103 = scmp.ne.s32.totalorder %s92, %s93
      %p104 = scmp.eq.s32.totalorder %s42, 0
      %p105 = por %p103, %p104
      %p106 = scmp.ne.s32.totalorder %s92, %s93
      %p107 = scmp.eq.s32.totalorder %s43, 1
      %p108 = por %p106, %p107
      %p110 = scmp.ne.s32.totalorder %s93, %s109
      %p111 = scmp.eq.s32.totalorder %s43, 0
      %p112 = por %p110, %p111
      %s114 = sadd.s32 %s113, 1
      %p117 = scmp.eq.s32.totalorder %s37, 1
      %p118 = scmp.ne.s32.totalorder %s113, %s115
      %p119 = scmp.eq.s32.totalorder %s37, 0
      %p120 = por %p118, %p119
      %p121 = scmp.ne.s32.totalorder %s113, %s115
      %p122 = scmp.eq.s32.totalorder %s42, 1
      %p123 = por %p121, %p122
      %p124 = scmp.ne.s32.totalorder %s115, %s116
      %p125 = scmp.eq.s32.totalorder %s42, 0
      %p126 = por %p124, %p125
      %p127 = scmp.ne.s32.totalorder %s115, %s116
      %p128 = scmp.eq.s32.totalorder %s43, 1
      %p129 = por %p127, %p128
      %p131 = scmp.ne.s32.totalorder %s116, %s130
      %p132 = scmp.eq.s32.totalorder %s43, 0
      %p133 = por %p131, %p132
      %s135 = sadd.s32 %s134, 1
      %p138 = scmp.eq.s32.totalorder %s37, 1
      %p139 = scmp.ne.s32.totalorder %s134, %s136
      %p140 = scmp.eq.s32.totalorder %s37, 0
      %p141 = por %p139, %p140
      %p142 = scmp.ne.s32.totalorder %s134, %s136
      %p143 = scmp.eq.s32.totalorder %s42, 1
      %p144 = por %p142, %p143
      %p145 = scmp.ne.s32.totalorder %s136, %s137
      %p146 = scmp.eq.s32.totalorder %s42, 0
      %p147 = por %p145, %p146
      %p148 = scmp.ne.s32.totalorder %s136, %s137
      %p149 = scmp.eq.s32.totalorder %s43, 1
      %p150 = por %p148, %p149
      %p152 = scmp.ne.s32.totalorder %s137, %s151
      %p153 = scmp.eq.s32.totalorder %s43, 0
      %p154 = por %p152, %p153
      %s156 = sadd.s32 %s155, 1
      %p159 = scmp.eq.s32.totalorder %s37, 1
      %p160 = scmp.ne.s32.totalorder %s155, %s157
      %p161 = scmp.eq.s32.totalorder %s37, 0
      %p162 = por %p160, %p161
      %p163 = scmp.ne.s32.totalorder %s155, %s157
      %p164 = scmp.eq.s32.totalorder %s42, 1
      %p165 = por %p163, %p164
      %p166 = scmp.ne.s32.totalorder %s157, %s158
      %p167 = scmp.eq.s32.totalorder %s42, 0
      %p168 = por %p166, %p167
      %p169 = scmp.ne.s32.totalorder %s157, %s158
      %p170 = scmp.eq.s32.totalorder %s43, 1
      %p171 = por %p169, %p170
      %p173 = scmp.ne.s32.totalorder %s158, %s172
      %p174 = scmp.eq.s32.totalorder %s43, 0
      %p175 = por %p173, %p174
      %s177 = sadd.s32 %s176, 1
      %p180 = scmp.eq.s32.totalorder %s37, 1
      %p181 = scmp.ne.s32.totalorder %s176, %s178
      %p182 = scmp.eq.s32.totalorder %s37, 0
      %p183 = por %p181, %p182
      %p184 = scmp.ne.s32.totalorder %s176, %s178
      %p185 = scmp.eq.s32.totalorder %s42, 1
      %p186 = por %p184, %p185
      %p187 = scmp.ne.s32.totalorder %s178, %s179
      %p188 = scmp.eq.s32.totalorder %s42, 0
      %p189 = por %p187, %p188
      %p190 = scmp.ne.s32.totalorder %s178, %s179
      %p191 = scmp.eq.s32.totalorder %s43, 1
      %p192 = por %p190, %p191
      %p194 = scmp.ne.s32.totalorder %s179, %s193
      %p195 = scmp.eq.s32.totalorder %s43, 0
      %p196 = por %p194, %p195
      %s198 = sadd.s32 %s197, 1
      %p201 = scmp.eq.s32.totalorder %s37, 1
      %p202 = scmp.ne.s32.totalorder %s197, %s199
      %p203 = scmp.eq.s32.totalorder %s37, 0
      %p204 = por %p202, %p203
      %p205 = scmp.ne.s32.totalorder %s197, %s199
      %p206 = scmp.eq.s32.totalorder %s42, 1
      %p207 = por %p205, %p206
      %p208 = scmp.ne.s32.totalorder %s199, %s200
      %p209 = scmp.eq.s32.totalorder %s42, 0
      %p210 = por %p208, %p209
      %p211 = scmp.ne.s32.totalorder %s199, %s200
      %p212 = scmp.eq.s32.totalorder %s43, 1
      %p213 = por %p211, %p212
      %p215 = scmp.ne.s32.totalorder %s200, %s214
      %p216 = scmp.eq.s32.totalorder %s43, 0
      %p217 = por %p215, %p216
      %s219 = sadd.s32 %s218, 1
      %p222 = scmp.eq.s32.totalorder %s37, 1
      %p223 = scmp.ne.s32.totalorder %s218, %s220
      %p224 = scmp.eq.s32.totalorder %s37, 0
      %p225 = por %p223, %p224
      %p226 = scmp.ne.s32.totalorder %s218, %s220
      %p227 = scmp.eq.s32.totalorder %s42, 1
      %p228 = por %p226, %p227
      %p229 = scmp.ne.s32.totalorder %s220, %s221
      %p230 = scmp.eq.s32.totalorder %s42, 0
      %p231 = por %p229, %p230
      %p232 = scmp.ne.s32.totalorder %s220, %s221
      %p233 = scmp.eq.s32.totalorder %s43, 1
      %p234 = por %p232, %p233
      %p236 = scmp.ne.s32.totalorder %s221, %s235
      %p237 = scmp.eq.s32.totalorder %s43, 0
      %p238 = por %p236, %p237
      %s240 = sadd.s32 %s239, 1
      %p243 = scmp.eq.s32.totalorder %s37, 1
      %p244 = scmp.ne.s32.totalorder %s239, %s241
      %p245 = scmp.eq.s32.totalorder %s37, 0
      %p246 = por %p244, %p245
      %p247 = scmp.ne.s32.totalorder %s239, %s241
      %p248 = scmp.eq.s32.totalorder %s42, 1
      %p249 = por %p247, %p248
      %p250 = scmp.ne.s32.totalorder %s241, %s242
      %p251 = scmp.eq.s32.totalorder %s42, 0
      %p252 = por %p250, %p251
      %p253 = scmp.ne.s32.totalorder %s241, %s242
      %p254 = scmp.eq.s32.totalorder %s43, 1
      %p255 = por %p253, %p254
      %p257 = scmp.ne.s32.totalorder %s242, %s256
      %p258 = scmp.eq.s32.totalorder %s43, 0
      %p259 = por %p257, %p258
      %s261 = sadd.s32 %s260, 1
      %p264 = scmp.eq.s32.totalorder %s37, 1
      %p265 = scmp.ne.s32.totalorder %s260, %s262
      %p266 = scmp.eq.s32.totalorder %s37, 0
      %p267 = por %p265, %p266
      %p268 = scmp.ne.s32.totalorder %s260, %s262
      %p269 = scmp.eq.s32.totalorder %s42, 1
      %p270 = por %p268, %p269
      %p271 = scmp.ne.s32.totalorder %s262, %s263
      %p272 = scmp.eq.s32.totalorder %s42, 0
      %p273 = por %p271, %p272
      %p274 = scmp.ne.s32.totalorder %s262, %s263
      %p275 = scmp.eq.s32.totalorder %s43, 1
      %p276 = por %p274, %p275
      %p278 = scmp.ne.s32.totalorder %s263, %s277
      %p279 = scmp.eq.s32.totalorder %s43, 0
      %p280 = por %p278, %p279
      %s282 = sadd.s32 %s281, 1
      %p285 = scmp.eq.s32.totalorder %s37, 1
      %p286 = scmp.ne.s32.totalorder %s281, %s283
      %p287 = scmp.eq.s32.totalorder %s37, 0
      %p288 = por %p286, %p287
      %p289 = scmp.ne.s32.totalorder %s281, %s283
      %p290 = scmp.eq.s32.totalorder %s42, 1
      %p291 = por %p289, %p290
      %p292 = scmp.ne.s32.totalorder %s283, %s284
      %p293 = scmp.eq.s32.totalorder %s42, 0
      %p294 = por %p292, %p293
      %p295 = scmp.ne.s32.totalorder %s283, %s284
      %p296 = scmp.eq.s32.totalorder %s43, 1
      %p297 = por %p295, %p296
      %p299 = scmp.ne.s32.totalorder %s284, %s298
      %p300 = scmp.eq.s32.totalorder %s43, 0
      %p301 = por %p299, %p300
      %s303 = sadd.s32 %s302, 1
      %p306 = scmp.eq.s32.totalorder %s37, 1
      %p307 = scmp.ne.s32.totalorder %s302, %s304
      %p308 = scmp.eq.s32.totalorder %s37, 0
      %p309 = por %p307, %p308
      %p310 = scmp.ne.s32.totalorder %s302, %s304
      %p311 = scmp.eq.s32.totalorder %s42, 1
      %p312 = por %p310, %p311
      %p313 = scmp.ne.s32.totalorder %s304, %s305
      %p314 = scmp.eq.s32.totalorder %s42, 0
      %p315 = por %p313, %p314
      %p316 = scmp.ne.s32.totalorder %s304, %s305
      %p317 = scmp.eq.s32.totalorder %s43, 1
      %p318 = por %p316, %p317
      %p320 = scmp.ne.s32.totalorder %s305, %s319
      %p321 = scmp.eq.s32.totalorder %s43, 0
      %p322 = por %p320, %p321
      %s323 = ssub.s32 %s44, %s56
      %s324 = ssub.s32 %s45, %s52
      %s325 = sor.u32 %s323, %s324
      %p326 = scmp.eq.s32.totalorder %s325, 0
      %s328 = sadd.s32 %s327, 1
      %s329 = scalar_select %p326, %s327, %s328
      %p332 = pneg %p326
      %p333 = scmp.eq.s32.totalorder %s37, 1
      %p334 = por %p332, %p333
      %p335 = scmp.ne.s32.totalorder %s327, %s330
      %p336 = scmp.eq.s32.totalorder %s37, 0
      %p337 = por %p335, %p336
      %p338 = scmp.ne.s32.totalorder %s327, %s330
      %p339 = scmp.eq.s32.totalorder %s42, 1
      %p340 = por %p338, %p339
      %p341 = scmp.ne.s32.totalorder %s330, %s331
      %p342 = scmp.eq.s32.totalorder %s42, 0
      %p343 = por %p341, %p342
      %p344 = scmp.ne.s32.totalorder %s330, %s331
      %p345 = scmp.eq.s32.totalorder %s43, 1
      %p346 = por %p344, %p345
      %p348 = scmp.ne.s32.totalorder %s331, %s347
      %p349 = scmp.eq.s32.totalorder %s43, 0
      %p350 = por %p348, %p349
      %s351 = ssub.s32 %s44, %s56
      %s352 = ssub.s32 %s45, %s52
      %s353 = sor.u32 %s351, %s352
      %p354 = scmp.eq.s32.totalorder %s353, 0
      %s356 = sadd.s32 %s355, 1
      %s357 = scalar_select %p354, %s355, %s356
      %p360 = pneg %p354
      %p361 = scmp.eq.s32.totalorder %s37, 1
      %p362 = por %p360, %p361
      %p363 = scmp.ne.s32.totalorder %s355, %s358
      %p364 = scmp.eq.s32.totalorder %s37, 0
      %p365 = por %p363, %p364
      %p366 = scmp.ne.s32.totalorder %s355, %s358
      %p367 = scmp.eq.s32.totalorder %s42, 1
      %p368 = por %p366, %p367
      %p369 = scmp.ne.s32.totalorder %s358, %s359
      %p370 = scmp.eq.s32.totalorder %s42, 0
      %p371 = por %p369, %p370
      %p372 = scmp.ne.s32.totalorder %s358, %s359
      %p373 = scmp.eq.s32.totalorder %s43, 1
      %p374 = por %p372, %p373
      %p376 = scmp.ne.s32.totalorder %s359, %s375
      %p377 = scmp.eq.s32.totalorder %s43, 0
      %p378 = por %p376, %p377
      %s379 = ssub.s32 %s44, %s56
      %s380 = ssub.s32 %s45, %s52
      %s381 = sor.u32 %s379, %s380
      %p382 = scmp.eq.s32.totalorder %s381, 0
      %s384 = sadd.s32 %s383, 1
      %s385 = scalar_select %p382, %s383, %s384
      %p388 = pneg %p382
      %p389 = scmp.eq.s32.totalorder %s37, 1
      %p390 = por %p388, %p389
      %p391 = scmp.ne.s32.totalorder %s383, %s386
      %p392 = scmp.eq.s32.totalorder %s37, 0
      %p393 = por %p391, %p392
      %p394 = scmp.ne.s32.totalorder %s383, %s386
      %p395 = scmp.eq.s32.totalorder %s42, 1
      %p396 = por %p394, %p395
      %p397 = scmp.ne.s32.totalorder %s386, %s387
      %p398 = scmp.eq.s32.totalorder %s42, 0
      %p399 = por %p397, %p398
      %p400 = scmp.ne.s32.totalorder %s386, %s387
      %p401 = scmp.eq.s32.totalorder %s43, 1
      %p402 = por %p400, %p401
      %p404 = scmp.ne.s32.totalorder %s387, %s403
      %p405 = scmp.eq.s32.totalorder %s43, 0
      %p406 = por %p404, %p405
      %s407 = ssub.s32 %s44, %s56
      %s408 = ssub.s32 %s45, %s52
      %s409 = sor.u32 %s407, %s408
      %p410 = scmp.eq.s32.totalorder %s409, 0
      %s412 = sadd.s32 %s411, 1
      %s413 = scalar_select %p410, %s411, %s412
      %p416 = pneg %p410
      %p417 = scmp.eq.s32.totalorder %s37, 1
      %p418 = por %p416, %p417
      %p419 = scmp.ne.s32.totalorder %s411, %s414
      %p420 = scmp.eq.s32.totalorder %s37, 0
      %p421 = por %p419, %p420
      %p422 = scmp.ne.s32.totalorder %s411, %s414
      %p423 = scmp.eq.s32.totalorder %s42, 1
      %p424 = por %p422, %p423
      %p425 = scmp.ne.s32.totalorder %s414, %s415
      %p426 = scmp.eq.s32.totalorder %s42, 0
      %p427 = por %p425, %p426
      %p428 = scmp.ne.s32.totalorder %s414, %s415
      %p429 = scmp.eq.s32.totalorder %s43, 1
      %p430 = por %p428, %p429
      %p432 = scmp.ne.s32.totalorder %s415, %s431
      %p433 = scmp.eq.s32.totalorder %s43, 0
      %p434 = por %p432, %p433
      %p435 = scmp.le.s32.totalorder 1, %s37
      %p436 = scmp.lt.s32.totalorder %s37, 3
      %p437 = pnand %p435, %p436
      %p438 = pneg %p437
      // Predicated region
      $region9: #{tpu_custom_call.1} parent=5 // pred_check
        _
      $region10: #{tpu_custom_call.1} parent=5 // pred_check_branch
        %440 = sbr.rel (%p437) target = $region12
      $region11: #{tpu_custom_call.1} parent=5 // pred_region
        %s441 = ssub.s32 %s37, 1
        // Predicated region
        $region13: #{tpu_custom_call.1} parent=11 // pred_check
          %p442 = pneg %p126
        $region14: #{tpu_custom_call.1} parent=11 // pred_check_branch
          %444 = sbr.rel (%p442) target = $region16
        $region15: #{tpu_custom_call.1} parent=11 // pred_region
          _
        $region16: #{tpu_custom_call.1} parent=11 // pred_fallthru
          _
        // Predicated region
        $region17: #{tpu_custom_call.1} parent=11 // pred_check
          %p445 = pneg %p147
        $region18: #{tpu_custom_call.1} parent=11 // pred_check_branch
          %447 = sbr.rel (%p445) target = $region20
        $region19: #{tpu_custom_call.1} parent=11 // pred_region
          _
        $region20: #{tpu_custom_call.1} parent=11 // pred_fallthru
          _
        // Predicated region
        $region21: #{tpu_custom_call.1} parent=11 // pred_check
          %p448 = pneg %p168
        $region22: #{tpu_custom_call.1} parent=11 // pred_check_branch
          %450 = sbr.rel (%p448) target = $region24
        $region23: #{tpu_custom_call.1} parent=11 // pred_region
          _
        $region24: #{tpu_custom_call.1} parent=11 // pred_fallthru
          _
        // Predicated region
        $region25: #{tpu_custom_call.1} parent=11 // pred_check
          %p451 = pneg %p189
        $region26: #{tpu_custom_call.1} parent=11 // pred_check_branch
          %453 = sbr.rel (%p451) target = $region28
        $region27: #{tpu_custom_call.1} parent=11 // pred_region
          _
        $region28: #{tpu_custom_call.1} parent=11 // pred_fallthru
          _
        // Predicated region
        $region29: #{tpu_custom_call.1} parent=11 // pred_check
          %p454 = pneg %p210
        $region30: #{tpu_custom_call.1} parent=11 // pred_check_branch
          %456 = sbr.rel (%p454) target = $region32
        $region31: #{tpu_custom_call.1} parent=11 // pred_region
          _
        $region32: #{tpu_custom_call.1} parent=11 // pred_fallthru
          _
        // Predicated region
        $region33: #{tpu_custom_call.1} parent=11 // pred_check
          %p457 = pneg %p231
        $region34: #{tpu_custom_call.1} parent=11 // pred_check_branch
          %459 = sbr.rel (%p457) target = $region36
        $region35: #{tpu_custom_call.1} parent=11 // pred_region
          _
        $region36: #{tpu_custom_call.1} parent=11 // pred_fallthru
          _
        // Predicated region
        $region37: #{tpu_custom_call.1} parent=11 // pred_check
          %p460 = pneg %p252
        $region38: #{tpu_custom_call.1} parent=11 // pred_check_branch
          %462 = sbr.rel (%p460) target = $region40
        $region39: #{tpu_custom_call.1} parent=11 // pred_region
          _
        $region40: #{tpu_custom_call.1} parent=11 // pred_fallthru
          _
        // Predicated region
        $region41: #{tpu_custom_call.1} parent=11 // pred_check
          %p463 = pneg %p273
        $region42: #{tpu_custom_call.1} parent=11 // pred_check_branch
          %465 = sbr.rel (%p463) target = $region44
        $region43: #{tpu_custom_call.1} parent=11 // pred_region
          _
        $region44: #{tpu_custom_call.1} parent=11 // pred_fallthru
          _
        // Predicated region
        $region45: #{tpu_custom_call.1} parent=11 // pred_check
          %p466 = pneg %p294
        $region46: #{tpu_custom_call.1} parent=11 // pred_check_branch
          %468 = sbr.rel (%p466) target = $region48
        $region47: #{tpu_custom_call.1} parent=11 // pred_region
          _
        $region48: #{tpu_custom_call.1} parent=11 // pred_fallthru
          _
        // Predicated region
        $region49: #{tpu_custom_call.1} parent=11 // pred_check
          %p469 = pneg %p315
        $region50: #{tpu_custom_call.1} parent=11 // pred_check_branch
          %471 = sbr.rel (%p469) target = $region52
        $region51: #{tpu_custom_call.1} parent=11 // pred_region
          _
        $region52: #{tpu_custom_call.1} parent=11 // pred_fallthru
          _
      $region12: #{tpu_custom_call.1} parent=5 // pred_fallthru
        _
      %p472 = scmp.lt.s32.totalorder %s37, 2
      // Predicated region
      $region53: #{tpu_custom_call.1} parent=5 // pred_check
        %p473 = pneg %p472
      $region54: #{tpu_custom_call.1} parent=5 // pred_check_branch
        %475 = sbr.rel (%p473) target = $region56
      $region55: #{tpu_custom_call.1} parent=5 // pred_region
        // Predicated region
        $region57: #{tpu_custom_call.1} parent=55 // pred_check
          %p476 = pneg %p71
        $region58: #{tpu_custom_call.1} parent=55 // pred_check_branch
          %478 = sbr.rel (%p476) target = $region60
        $region59: #{tpu_custom_call.1} parent=55 // pred_region
          %s479 = sand.u32 %s61, 1
          %s480 = scalar_lea.sflag [#allocation3], %s479
          %s481 = sand.u32 %s61, 1
          %s482 = smul.addr %s481, 64
          %s483 = scalar_lea.vmem [#allocation2], %s482
          %s484 = smul.u32 2, %s45
          %s486 = ssub.s32 1024, 1024
          %487 = vsyncadd %s480, %s486
          %s488 = smul.addr %s44, 8
          %s489 = sadd.s32 %s484, %s488
          %s490 = smul.addr %s489, 128
          %s491 = scalar_lea.hbm %s0, %s490
          %s492 = sshll.u32 %s483, 4
          %s493 = int_to_ptr.vmem [resolvable:$true] %s492
          %498 = dma.hbm_to_vmem [thread:$0]  %s491, 1024, %s493, %s480, 256, 256, 16
        $region60: #{tpu_custom_call.1} parent=55 // pred_fallthru
          _
        // Predicated region
        $region61: #{tpu_custom_call.1} parent=55 // pred_check
          %p499 = pneg %p99
        $region62: #{tpu_custom_call.1} parent=55 // pred_check_branch
          %501 = sbr.rel (%p499) target = $region64
        $region63: #{tpu_custom_call.1} parent=55 // pred_region
          %s502 = sand.u32 %s89, 1
          %s503 = scalar_lea.sflag [#allocation6], %s502
          %s504 = sand.u32 %s89, 1
          %s505 = smul.addr %s504, 64
          %s506 = scalar_lea.vmem [#allocation5], %s505
          %s507 = smul.u32 2, %s45
          %s509 = ssub.s32 1024, 1024
          %510 = vsyncadd %s503, %s509
          %s511 = smul.addr %s44, 8
          %s512 = sadd.s32 %s507, %s511
          %s513 = smul.addr %s512, 128
          %s514 = scalar_lea.hbm %s1, %s513
          %s515 = sshll.u32 %s506, 4
          %s516 = int_to_ptr.vmem [resolvable:$true] %s515
          %521 = dma.hbm_to_vmem [thread:$0]  %s514, 1024, %s516, %s503, 256, 256, 16
        $region64: #{tpu_custom_call.1} parent=55 // pred_fallthru
          _
      $region56: #{tpu_custom_call.1} parent=5 // pred_fallthru
        _
      %p522 = scmp.le.s32.totalorder 1, %s37
      %p523 = scmp.lt.s32.totalorder %s37, 3
      %p524 = pnand %p522, %p523
      %p525 = pneg %p524
      // Predicated region
      $region65: #{tpu_custom_call.1} parent=5 // pred_check
        _
      $region66: #{tpu_custom_call.1} parent=5 // pred_check_branch
        %527 = sbr.rel (%p524) target = $region68
      $region67: #{tpu_custom_call.1} parent=5 // pred_region
        %s528 = ssub.s32 %s37, 1
        %s529 = sand.u32 %s64, 1
        %s530 = scalar_lea.sflag [#allocation3], %s529
        %s531 = sand.u32 %s64, 1
        %s532 = smul.addr %s531, 64
        %s533 = scalar_lea.vmem [#allocation2], %s532
        // Predicated region
        $region69: #{tpu_custom_call.1} parent=67 // pred_check
          %p534 = pneg %p77
        $region70: #{tpu_custom_call.1} parent=67 // pred_check_branch
          %536 = sbr.rel (%p534) target = $region72
        $region71: #{tpu_custom_call.1} parent=67 // pred_region
          %537 = dma.done %s530, 1024
        $region72: #{tpu_custom_call.1} parent=67 // pred_fallthru
          _
        %s538 = sand.u32 %s92, 1
        %s539 = scalar_lea.sflag [#allocation6], %s538
        %s540 = sand.u32 %s92, 1
        %s541 = smul.addr %s540, 64
        %s542 = scalar_lea.vmem [#allocation5], %s541
        // Predicated region
        $region73: #{tpu_custom_call.1} parent=67 // pred_check
          %p543 = pneg %p105
        $region74: #{tpu_custom_call.1} parent=67 // pred_check_branch
          %545 = sbr.rel (%p543) target = $region76
        $region75: #{tpu_custom_call.1} parent=67 // pred_region
          %546 = dma.done %s539, 1024
        $region76: #{tpu_custom_call.1} parent=67 // pred_fallthru
          _
        %s547 = sand.u32 %s64, 1
        %s548 = scalar_lea.sflag [#allocation3], %s547
        %s549 = sand.u32 %s64, 1
        %s550 = smul.addr %s549, 64
        %s551 = scalar_lea.vmem [#allocation2], %s550
        %p552 = pneg %p77
        %p553 = pneg %p74
        %s554 = sand.u32 %s92, 1
        %s555 = scalar_lea.sflag [#allocation6], %s554
        %s556 = sand.u32 %s92, 1
        %s557 = smul.addr %s556, 64
        %s558 = scalar_lea.vmem [#allocation5], %s557
        %p559 = pneg %p105
        %p560 = pneg %p102
        %p561 = pneg %p126
        %p562 = pneg %p123
        %p563 = pneg %p147
        %p564 = pneg %p144
        %p565 = pneg %p168
        %p566 = pneg %p165
        %p567 = pneg %p189
        %p568 = pneg %p186
        %p569 = pneg %p210
        %p570 = pneg %p207
        %p571 = pneg %p231
        %p572 = pneg %p228
        %p573 = pneg %p252
        %p574 = pneg %p249
        %p575 = pneg %p273
        %p576 = pneg %p270
        %p577 = pneg %p294
        %p578 = pneg %p291
        %p579 = pneg %p315
        %p580 = pneg %p312
        %p581 = pneg %p343
        %p582 = pneg %p340
        %s583 = sand.u32 %s330, 1
        %s584 = scalar_lea.sflag [#allocation4], %s583
        %s585 = sand.u32 %s330, 1
        %s586 = smul.addr %s585, 64
        %s587 = scalar_lea.vmem [#allocation7], %s586
        %p588 = pneg %p371
        %p589 = pneg %p368
        %s590 = sand.u32 %s42, 1
        %s591 = scalar_lea.sflag [#allocation9], %s590
        %s592 = sand.u32 %s358, 1
        %s593 = smul.addr %s592, 64
        %s594 = scalar_lea.vmem [#allocation8], %s593
        %p595 = pneg %p399
        %p596 = pneg %p396
        %s597 = sand.u32 %s42, 1
        %s598 = scalar_lea.sflag [#allocation9], %s597
        %s599 = sand.u32 %s386, 1
        %s600 = smul.addr %s599, 64
        %s601 = scalar_lea.vmem [#allocation10], %s600
        %p602 = pneg %p427
        %p603 = pneg %p424
        %s604 = sand.u32 %s414, 1
        %s605 = scalar_lea.sflag [#allocation12], %s604
        %s606 = sand.u32 %s414, 1
        %s607 = smul.addr %s606, 128
        %s608 = scalar_lea.vmem [#allocation11], %s607
        %s609 = smul.u32 2, %s47
        %s610 = smul.u32 2, %s47
        %s611 = smul.u32 2, %s47
        %s612 = smul.u32 2, %s47
        %s613 = smul.u32 2, %s47
        %s614 = smul.u32 4, %s47
        %v615 = vld [vmem:[%s533] sm:$0xff]
        %v616 = vld [vmem:[%s533 + $0x8] sm:$0xff]
        %v617 = vld [vmem:[%s533 + $0x10] sm:$0xff]
        %v618 = vld [vmem:[%s533 + $0x18] sm:$0xff]
        %v619 = vld [vmem:[%s533 + $0x20] sm:$0xff]
        %v620 = vld [vmem:[%s533 + $0x28] sm:$0xff]
        %v621 = vld [vmem:[%s533 + $0x30] sm:$0xff]
        %v622 = vld [vmem:[%s533 + $0x38] sm:$0xff]
        %v623 = vld [vmem:[%s542] sm:$0xff]
        %v624 = vld [vmem:[%s542 + $0x8] sm:$0xff]
        %v625 = vld [vmem:[%s542 + $0x10] sm:$0xff]
        %v626 = vld [vmem:[%s542 + $0x18] sm:$0xff]
        %v627 = vld [vmem:[%s542 + $0x20] sm:$0xff]
        %v628 = vld [vmem:[%s542 + $0x28] sm:$0xff]
        %v629 = vld [vmem:[%s542 + $0x30] sm:$0xff]
        %v630 = vld [vmem:[%s542 + $0x38] sm:$0xff]
        %v631 = vld [vmem:[%s2] sm:$0xff]
        %v632 = vld [vmem:[%s3] sm:$0xff]
        %634 = vset.pattern.permute.xlu0 0
        %635 = vperm.xlu0 %634, %v632
        %v636 = vpop.permute.xlu0 %635
        %vm638 = vcmask 261120
        %v640 = vsel %vm638, %v631, 0
        %v642 = vand.u32 %v616, 4294901760
        %643 = vmatprep.subr.mxu0 %v642
        %v644 = vand.u32 %v615, 4294901760
        %645 = vmatpush1.msra.mxu0 %v644
        %v646 = vand.u32 %v618, 4294901760
        %647 = vmatprep.subr.mxu0 %v646
        %v648 = vand.u32 %v617, 4294901760
        %649 = vmatpush1.msra.mxu0 %v648
        %v650 = vand.u32 %v620, 4294901760
        %651 = vmatprep.subr.mxu0 %v650
        %v652 = vand.u32 %v619, 4294901760
        %653 = vmatpush1.msra.mxu0 %v652
        %v654 = vand.u32 %v622, 4294901760
        %655 = vmatprep.subr.mxu0 %v654
        %v656 = vand.u32 %v621, 4294901760
        %657 = vmatpush1.msra.mxu0 %v656
        %658 = vmatprep.subr.mxu0 0.0
        %659 = vmatpush1.msra.mxu0 0.0
        %660 = vmatprep.subr.mxu0 0.0
        %661 = vmatpush1.msra.mxu0 0.0
        %662 = vmatprep.subr.mxu0 0.0
        %663 = vmatpush1.msra.mxu0 0.0
        %664 = vmatprep.subr.mxu0 0.0
        %665 = vmatpush1.msra.mxu0 0.0
        %666 = vmatprep.subr.mxu0 0.0
        %667 = vmatpush1.msra.mxu0 0.0
        %668 = vmatprep.subr.mxu0 0.0
        %669 = vmatpush1.msra.mxu0 0.0
        %670 = vmatprep.subr.mxu0 0.0
        %671 = vmatpush1.msra.mxu0 0.0
        %672 = vmatprep.subr.mxu0 0.0
        %673 = vmatpush1.msra.mxu0 0.0
        %674 = vmatprep.subr.mxu0 0.0
        %675 = vmatpush1.msra.mxu0 0.0
        %676 = vmatprep.subr.mxu0 0.0
        %677 = vmatpush1.msra.mxu0 0.0
        %678 = vmatprep.subr.mxu0 0.0
        %679 = vmatpush1.msra.mxu0 0.0
        %680 = vmatprep.subr.mxu0 0.0
        %681 = vmatpush1.msra.mxu0 0.0
        %682 = vmatprep.subr.mxu0 0.0
        %683 = vmatpush1.msra.mxu0 0.0
        %684 = vmatprep.subr.mxu0 0.0
        %685 = vmatpush1.msra.mxu0 0.0
        %686 = vmatprep.subr.mxu0 0.0
        %687 = vmatpush1.msra.mxu0 0.0
        %688 = vmatprep.subr.mxu0 0.0
        %689 = vmatpush1.msra.mxu0 0.0
        %690 = vmatprep.subr.mxu0 0.0
        %691 = vmatpush1.msra.mxu0 0.0
        %692 = vmatprep.subr.mxu0 0.0
        %693 = vmatpush1.msra.mxu0 0.0
        %694 = vmatprep.subr.mxu0 0.0
        %695 = vmatpush1.msra.mxu0 0.0
        %696 = vmatprep.subr.mxu0 0.0
        %697 = vmatpush1.msra.mxu0 0.0
        %698 = vmatprep.subr.mxu0 0.0
        %699 = vmatpush1.msra.mxu0 0.0
        %700 = vmatprep.subr.mxu0 0.0
        %701 = vmatpush1.msra.mxu0 0.0
        %702 = vmatprep.subr.mxu0 0.0
        %703 = vmatpush1.msra.mxu0 0.0
        %704 = vmatprep.subr.mxu0 0.0
        %705 = vmatpush1.msra.mxu0 0.0
        %706 = vmatprep.subr.mxu0 0.0
        %707 = vmatpush1.msra.mxu0 0.0
        %708 = vmatprep.subr.mxu0 0.0
        %709 = vmatpush1.msra.mxu0 0.0
        %710 = vmatprep.subr.mxu0 0.0
        %711 = vmatpush1.msra.mxu0 0.0
        %712 = vmatprep.subr.mxu0 0.0
        %713 = vmatpush1.msra.mxu0 0.0
        %714 = vmatprep.mubr.f32.mxu0 0.0
        %v715 = vand.u32 %v640, 4294901760
        %v716 = vsub.f32 %v640, %v715
        %v717 = vand.u32 %v716, 4294901760
        %v718 = vsub.f32 %v716, %v717
        %v719 = vand.u32 %v718, 4294901760
        %720 = vmatmul.mubr.f32.gmra.mrb[0].mxu0 %v719
        %v721 = vpop.f32.mrb[0].mxu0
        %v722 = vadd.f32 %v636, %v721
        %v723 = vpop.f32.mrb[0].mxu0
        %v724 = vadd.f32 %v636, %v723
        %725 = vdwg.mxu0
        %v726 = vand.u32 %v616, 4294901760
        %v727 = vsub.f32 %v616, %v726
        %v728 = vand.u32 %v727, 4294901760
        %v729 = vsub.f32 %v727, %v728
        %v730 = vand.u32 %v729, 4294901760
        %731 = vmatprep.subr.mxu0 %v730
        %v732 = vand.u32 %v615, 4294901760
        %v733 = vsub.f32 %v615, %v732
        %v734 = vand.u32 %v733, 4294901760
        %v735 = vsub.f32 %v733, %v734
        %v736 = vand.u32 %v735, 4294901760
        %737 = vmatpush1.msra.mxu0 %v736
        %v738 = vand.u32 %v618, 4294901760
        %v739 = vsub.f32 %v618, %v738
        %v740 = vand.u32 %v739, 4294901760
        %v741 = vsub.f32 %v739, %v740
        %v742 = vand.u32 %v741, 4294901760
        %743 = vmatprep.subr.mxu0 %v742
        %v744 = vand.u32 %v617, 4294901760
        %v745 = vsub.f32 %v617, %v744
        %v746 = vand.u32 %v745, 4294901760
        %v747 = vsub.f32 %v745, %v746
        %v748 = vand.u32 %v747, 4294901760
        %749 = vmatpush1.msra.mxu0 %v748
        %v750 = vand.u32 %v620, 4294901760
        %v751 = vsub.f32 %v620, %v750
        %v752 = vand.u32 %v751, 4294901760
        %v753 = vsub.f32 %v751, %v752
        %v754 = vand.u32 %v753, 4294901760
        %755 = vmatprep.subr.mxu0 %v754
        %v756 = vand.u32 %v619, 4294901760
        %v757 = vsub.f32 %v619, %v756
        %v758 = vand.u32 %v757, 4294901760
        %v759 = vsub.f32 %v757, %v758
        %v760 = vand.u32 %v759, 4294901760
        %761 = vmatpush1.msra.mxu0 %v760
        %v762 = vand.u32 %v622, 4294901760
        %v763 = vsub.f32 %v622, %v762
        %v764 = vand.u32 %v763, 4294901760
        %v765 = vsub.f32 %v763, %v764
        %v766 = vand.u32 %v765, 4294901760
        %767 = vmatprep.subr.mxu0 %v766
        %v768 = vand.u32 %v621, 4294901760
        %v769 = vsub.f32 %v621, %v768
        %v770 = vand.u32 %v769, 4294901760
        %v771 = vsub.f32 %v769, %v770
        %v772 = vand.u32 %v771, 4294901760
        %773 = vmatpush1.msra.mxu0 %v772
        %774 = vmatprep.subr.mxu0 0.0
        %775 = vmatpush1.msra.mxu0 0.0
        %776 = vmatprep.subr.mxu0 0.0
        %777 = vmatpush1.msra.mxu0 0.0
        %778 = vmatprep.subr.mxu0 0.0
        %779 = vmatpush1.msra.mxu0 0.0
        %780 = vmatprep.subr.mxu0 0.0
        %781 = vmatpush1.msra.mxu0 0.0
        %782 = vmatprep.subr.mxu0 0.0
        %783 = vmatpush1.msra.mxu0 0.0
        %784 = vmatprep.subr.mxu0 0.0
        %785 = vmatpush1.msra.mxu0 0.0
        %786 = vmatprep.subr.mxu0 0.0
        %787 = vmatpush1.msra.mxu0 0.0
        %788 = vmatprep.subr.mxu0 0.0
        %789 = vmatpush1.msra.mxu0 0.0
        %790 = vmatprep.subr.mxu0 0.0
        %791 = vmatpush1.msra.mxu0 0.0
        %792 = vmatprep.subr.mxu0 0.0
        %793 = vmatpush1.msra.mxu0 0.0
        %794 = vmatprep.subr.mxu0 0.0
        %795 = vmatpush1.msra.mxu0 0.0
        %796 = vmatprep.subr.mxu0 0.0
        %797 = vmatpush1.msra.mxu0 0.0
        %798 = vmatprep.subr.mxu0 0.0
        %799 = vmatpush1.msra.mxu0 0.0
        %800 = vmatprep.subr.mxu0 0.0
        %801 = vmatpush1.msra.mxu0 0.0
        %802 = vmatprep.subr.mxu0 0.0
        %803 = vmatpush1.msra.mxu0 0.0
        %804 = vmatprep.subr.mxu0 0.0
        %805 = vmatpush1.msra.mxu0 0.0
        %806 = vmatprep.subr.mxu0 0.0
        %807 = vmatpush1.msra.mxu0 0.0
        %808 = vmatprep.subr.mxu0 0.0
        %809 = vmatpush1.msra.mxu0 0.0
        %810 = vmatprep.subr.mxu0 0.0
        %811 = vmatpush1.msra.mxu0 0.0
        %812 = vmatprep.subr.mxu0 0.0
        %813 = vmatpush1.msra.mxu0 0.0
        %814 = vmatprep.subr.mxu0 0.0
        %815 = vmatpush1.msra.mxu0 0.0
        %816 = vmatprep.subr.mxu0 0.0
        %817 = vmatpush1.msra.mxu0 0.0
        %818 = vmatprep.subr.mxu0 0.0
        %819 = vmatpush1.msra.mxu0 0.0
        %820 = vmatprep.subr.mxu0 0.0
        %821 = vmatpush1.msra.mxu0 0.0
        %822 = vmatprep.subr.mxu0 0.0
        %823 = vmatpush1.msra.mxu0 0.0
        %824 = vmatprep.subr.mxu0 0.0
        %825 = vmatpush1.msra.mxu0 0.0
        %826 = vmatprep.subr.mxu0 0.0
        %827 = vmatpush1.msra.mxu0 0.0
        %828 = vmatprep.subr.mxu0 0.0
        %829 = vmatpush1.msra.mxu0 0.0
        %830 = vmatprep.mubr.f32.mxu0 0.0
        %v831 = vand.u32 %v640, 4294901760
        %832 = vmatmul.mubr.f32.gmra.mrb[0].mxu0 %v831
        %v833 = vpop.f32.mrb[0].mxu0
        %v834 = vadd.f32 %v722, %v833
        %v835 = vpop.f32.mrb[0].mxu0
        %v836 = vadd.f32 %v724, %v835
        %837 = vdwg.mxu0
        %v838 = vand.u32 %v616, 4294901760
        %v839 = vsub.f32 %v616, %v838
        %840 = vmatprep.subr.mxu0 %v839
        %v841 = vand.u32 %v615, 4294901760
        %v842 = vsub.f32 %v615, %v841
        %843 = vmatpush1.msra.mxu0 %v842
        %v844 = vand.u32 %v618, 4294901760
        %v845 = vsub.f32 %v618, %v844
        %846 = vmatprep.subr.mxu0 %v845
        %v847 = vand.u32 %v617, 4294901760
        %v848 = vsub.f32 %v617, %v847
        %849 = vmatpush1.msra.mxu0 %v848
        %v850 = vand.u32 %v620, 4294901760
        %v851 = vsub.f32 %v620, %v850
        %852 = vmatprep.subr.mxu0 %v851
        %v853 = vand.u32 %v619, 4294901760
        %v854 = vsub.f32 %v619, %v853
        %855 = vmatpush1.msra.mxu0 %v854
        %v856 = vand.u32 %v622, 4294901760
        %v857 = vsub.f32 %v622, %v856
        %858 = vmatprep.subr.mxu0 %v857
        %v859 = vand.u32 %v621, 4294901760
        %v860 = vsub.f32 %v621, %v859
        %861 = vmatpush1.msra.mxu0 %v860
        %862 = vmatprep.subr.mxu0 0.0
        %863 = vmatpush1.msra.mxu0 0.0
        %864 = vmatprep.subr.mxu0 0.0
        %865 = vmatpush1.msra.mxu0 0.0
        %866 = vmatprep.subr.mxu0 0.0
        %867 = vmatpush1.msra.mxu0 0.0
        %868 = vmatprep.subr.mxu0 0.0
        %869 = vmatpush1.msra.mxu0 0.0
        %870 = vmatprep.subr.mxu0 0.0
        %871 = vmatpush1.msra.mxu0 0.0
        %872 = vmatprep.subr.mxu0 0.0
        %873 = vmatpush1.msra.mxu0 0.0
        %874 = vmatprep.subr.mxu0 0.0
        %875 = vmatpush1.msra.mxu0 0.0
        %876 = vmatprep.subr.mxu0 0.0
        %877 = vmatpush1.msra.mxu0 0.0
        %878 = vmatprep.subr.mxu0 0.0
        %879 = vmatpush1.msra.mxu0 0.0
        %880 = vmatprep.subr.mxu0 0.0
        %881 = vmatpush1.msra.mxu0 0.0
        %882 = vmatprep.subr.mxu0 0.0
        %883 = vmatpush1.msra.mxu0 0.0
        %884 = vmatprep.subr.mxu0 0.0
        %885 = vmatpush1.msra.mxu0 0.0
        %886 = vmatprep.subr.mxu0 0.0
        %887 = vmatpush1.msra.mxu0 0.0
        %888 = vmatprep.subr.mxu0 0.0
        %889 = vmatpush1.msra.mxu0 0.0
        %890 = vmatprep.subr.mxu0 0.0
        %891 = vmatpush1.msra.mxu0 0.0
        %892 = vmatprep.subr.mxu0 0.0
        %893 = vmatpush1.msra.mxu0 0.0
        %894 = vmatprep.subr.mxu0 0.0
        %895 = vmatpush1.msra.mxu0 0.0
        %896 = vmatprep.subr.mxu0 0.0
        %897 = vmatpush1.msra.mxu0 0.0
        %898 = vmatprep.subr.mxu0 0.0
        %899 = vmatpush1.msra.mxu0 0.0
        %900 = vmatprep.subr.mxu0 0.0
        %901 = vmatpush1.msra.mxu0 0.0
        %902 = vmatprep.subr.mxu0 0.0
        %903 = vmatpush1.msra.mxu0 0.0
        %904 = vmatprep.subr.mxu0 0.0
        %905 = vmatpush1.msra.mxu0 0.0
        %906 = vmatprep.subr.mxu0 0.0
        %907 = vmatpush1.msra.mxu0 0.0
        %908 = vmatprep.subr.mxu0 0.0
        %909 = vmatpush1.msra.mxu0 0.0
        %910 = vmatprep.subr.mxu0 0.0
        %911 = vmatpush1.msra.mxu0 0.0
        %912 = vmatprep.subr.mxu0 0.0
        %913 = vmatpush1.msra.mxu0 0.0
        %914 = vmatprep.subr.mxu0 0.0
        %915 = vmatpush1.msra.mxu0 0.0
        %916 = vmatprep.subr.mxu0 0.0
        %917 = vmatpush1.msra.mxu0 0.0
        %918 = vmatprep.mubr.f32.mxu0 0.0
        %v919 = vand.u32 %v640, 4294901760
        %v920 = vsub.f32 %v640, %v919
        %921 = vmatmul.mubr.f32.gmra.mrb[0].mxu0 %v920
        %v922 = vpop.f32.mrb[0].mxu0
        %v923 = vadd.f32 %v834, %v922
        %v924 = vpop.f32.mrb[0].mxu0
        %v925 = vadd.f32 %v836, %v924
        %926 = vdwg.mxu0
        %v927 = vand.u32 %v616, 4294901760
        %928 = vmatprep.subr.mxu0 %v927
        %v929 = vand.u32 %v615, 4294901760
        %930 = vmatpush1.msra.mxu0 %v929
        %v931 = vand.u32 %v618, 4294901760
        %932 = vmatprep.subr.mxu0 %v931
        %v933 = vand.u32 %v617, 4294901760
        %934 = vmatpush1.msra.mxu0 %v933
        %v935 = vand.u32 %v620, 4294901760
        %936 = vmatprep.subr.mxu0 %v935
        %v937 = vand.u32 %v619, 4294901760
        %938 = vmatpush1.msra.mxu0 %v937
        %v939 = vand.u32 %v622, 4294901760
        %940 = vmatprep.subr.mxu0 %v939
        %v941 = vand.u32 %v621, 4294901760
        %942 = vmatpush1.msra.mxu0 %v941
        %943 = vmatprep.subr.mxu0 0.0
        %944 = vmatpush1.msra.mxu0 0.0
        %945 = vmatprep.subr.mxu0 0.0
        %946 = vmatpush1.msra.mxu0 0.0
        %947 = vmatprep.subr.mxu0 0.0
        %948 = vmatpush1.msra.mxu0 0.0
        %949 = vmatprep.subr.mxu0 0.0
        %950 = vmatpush1.msra.mxu0 0.0
        %951 = vmatprep.subr.mxu0 0.0
        %952 = vmatpush1.msra.mxu0 0.0
        %953 = vmatprep.subr.mxu0 0.0
        %954 = vmatpush1.msra.mxu0 0.0
        %955 = vmatprep.subr.mxu0 0.0
        %956 = vmatpush1.msra.mxu0 0.0
        %957 = vmatprep.subr.mxu0 0.0
        %958 = vmatpush1.msra.mxu0 0.0
        %959 = vmatprep.subr.mxu0 0.0
        %960 = vmatpush1.msra.mxu0 0.0
        %961 = vmatprep.subr.mxu0 0.0
        %962 = vmatpush1.msra.mxu0 0.0
        %963 = vmatprep.subr.mxu0 0.0
        %964 = vmatpush1.msra.mxu0 0.0
        %965 = vmatprep.subr.mxu0 0.0
        %966 = vmatpush1.msra.mxu0 0.0
        %967 = vmatprep.subr.mxu0 0.0
        %968 = vmatpush1.msra.mxu0 0.0
        %969 = vmatprep.subr.mxu0 0.0
        %970 = vmatpush1.msra.mxu0 0.0
        %971 = vmatprep.subr.mxu0 0.0
        %972 = vmatpush1.msra.mxu0 0.0
        %973 = vmatprep.subr.mxu0 0.0
        %974 = vmatpush1.msra.mxu0 0.0
        %975 = vmatprep.subr.mxu0 0.0
        %976 = vmatpush1.msra.mxu0 0.0
        %977 = vmatprep.subr.mxu0 0.0
        %978 = vmatpush1.msra.mxu0 0.0
        %979 = vmatprep.subr.mxu0 0.0
        %980 = vmatpush1.msra.mxu0 0.0
        %981 = vmatprep.subr.mxu0 0.0
        %982 = vmatpush1.msra.mxu0 0.0
        %983 = vmatprep.subr.mxu0 0.0
        %984 = vmatpush1.msra.mxu0 0.0
        %985 = vmatprep.subr.mxu0 0.0
        %986 = vmatpush1.msra.mxu0 0.0
        %987 = vmatprep.subr.mxu0 0.0
        %988 = vmatpush1.msra.mxu0 0.0
        %989 = vmatprep.subr.mxu0 0.0
        %990 = vmatpush1.msra.mxu0 0.0
        %991 = vmatprep.subr.mxu0 0.0
        %992 = vmatpush1.msra.mxu0 0.0
        %993 = vmatprep.subr.mxu0 0.0
        %994 = vmatpush1.msra.mxu0 0.0
        %995 = vmatprep.subr.mxu0 0.0
        %996 = vmatpush1.msra.mxu0 0.0
        %997 = vmatprep.subr.mxu0 0.0
        %998 = vmatpush1.msra.mxu0 0.0
        %999 = vmatprep.mubr.f32.mxu0 0.0
        %v1000 = vand.u32 %v640, 4294901760
        %v1001 = vsub.f32 %v640, %v1000
        %v1002 = vand.u32 %v1001, 4294901760
        %1003 = vmatmul.mubr.f32.gmra.mrb[0].mxu0 %v1002
        %v1004 = vpop.f32.mrb[0].mxu0
        %v1005 = vadd.f32 %v923, %v1004
        %v1006 = vpop.f32.mrb[0].mxu0
        %v1007 = vadd.f32 %v925, %v1006
        %1008 = vdwg.mxu0
        %v1009 = vand.u32 %v616, 4294901760
        %v1010 = vsub.f32 %v616, %v1009
        %v1011 = vand.u32 %v1010, 4294901760
        %1012 = vmatprep.subr.mxu0 %v1011
        %v1013 = vand.u32 %v615, 4294901760
        %v1014 = vsub.f32 %v615, %v1013
        %v1015 = vand.u32 %v1014, 4294901760
        %1016 = vmatpush1.msra.mxu0 %v1015
        %v1017 = vand.u32 %v618, 4294901760
        %v1018 = vsub.f32 %v618, %v1017
        %v1019 = vand.u32 %v1018, 4294901760
        %1020 = vmatprep.subr.mxu0 %v1019
        %v1021 = vand.u32 %v617, 4294901760
        %v1022 = vsub.f32 %v617, %v1021
        %v1023 = vand.u32 %v1022, 4294901760
        %1024 = vmatpush1.msra.mxu0 %v1023
        %v1025 = vand.u32 %v620, 4294901760
        %v1026 = vsub.f32 %v620, %v1025
        %v1027 = vand.u32 %v1026, 4294901760
        %1028 = vmatprep.subr.mxu0 %v1027
        %v1029 = vand.u32 %v619, 4294901760
        %v1030 = vsub.f32 %v619, %v1029
        %v1031 = vand.u32 %v1030, 4294901760
        %1032 = vmatpush1.msra.mxu0 %v1031
        %v1033 = vand.u32 %v622, 4294901760
        %v1034 = vsub.f32 %v622, %v1033
        %v1035 = vand.u32 %v1034, 4294901760
        %1036 = vmatprep.subr.mxu0 %v1035
        %v1037 = vand.u32 %v621, 4294901760
        %v1038 = vsub.f32 %v621, %v1037
        %v1039 = vand.u32 %v1038, 4294901760
        %1040 = vmatpush1.msra.mxu0 %v1039
        %1041 = vmatprep.subr.mxu0 0.0
        %1042 = vmatpush1.msra.mxu0 0.0
        %1043 = vmatprep.subr.mxu0 0.0
        %1044 = vmatpush1.msra.mxu0 0.0
        %1045 = vmatprep.subr.mxu0 0.0
        %1046 = vmatpush1.msra.mxu0 0.0
        %1047 = vmatprep.subr.mxu0 0.0
        %1048 = vmatpush1.msra.mxu0 0.0
        %1049 = vmatprep.subr.mxu0 0.0
        %1050 = vmatpush1.msra.mxu0 0.0
        %1051 = vmatprep.subr.mxu0 0.0
        %1052 = vmatpush1.msra.mxu0 0.0
        %1053 = vmatprep.subr.mxu0 0.0
        %1054 = vmatpush1.msra.mxu0 0.0
        %1055 = vmatprep.subr.mxu0 0.0
        %1056 = vmatpush1.msra.mxu0 0.0
        %1057 = vmatprep.subr.mxu0 0.0
        %1058 = vmatpush1.msra.mxu0 0.0
        %1059 = vmatprep.subr.mxu0 0.0
        %1060 = vmatpush1.msra.mxu0 0.0
        %1061 = vmatprep.subr.mxu0 0.0
        %1062 = vmatpush1.msra.mxu0 0.0
        %1063 = vmatprep.subr.mxu0 0.0
        %1064 = vmatpush1.msra.mxu0 0.0
        %1065 = vmatprep.subr.mxu0 0.0
        %1066 = vmatpush1.msra.mxu0 0.0
        %1067 = vmatprep.subr.mxu0 0.0
        %1068 = vmatpush1.msra.mxu0 0.0
        %1069 = vmatprep.subr.mxu0 0.0
        %1070 = vmatpush1.msra.mxu0 0.0
        %1071 = vmatprep.subr.mxu0 0.0
        %1072 = vmatpush1.msra.mxu0 0.0
        %1073 = vmatprep.subr.mxu0 0.0
        %1074 = vmatpush1.msra.mxu0 0.0
        %1075 = vmatprep.subr.mxu0 0.0
        %1076 = vmatpush1.msra.mxu0 0.0
        %1077 = vmatprep.subr.mxu0 0.0
        %1078 = vmatpush1.msra.mxu0 0.0
        %1079 = vmatprep.subr.mxu0 0.0
        %1080 = vmatpush1.msra.mxu0 0.0
        %1081 = vmatprep.subr.mxu0 0.0
        %1082 = vmatpush1.msra.mxu0 0.0
        %1083 = vmatprep.subr.mxu0 0.0
        %1084 = vmatpush1.msra.mxu0 0.0
        %1085 = vmatprep.subr.mxu0 0.0
        %1086 = vmatpush1.msra.mxu0 0.0
        %1087 = vmatprep.subr.mxu0 0.0
        %1088 = vmatpush1.msra.mxu0 0.0
        %1089 = vmatprep.subr.mxu0 0.0
        %1090 = vmatpush1.msra.mxu0 0.0
        %1091 = vmatprep.subr.mxu0 0.0
        %1092 = vmatpush1.msra.mxu0 0.0
        %1093 = vmatprep.subr.mxu0 0.0
        %1094 = vmatpush1.msra.mxu0 0.0
        %1095 = vmatprep.subr.mxu0 0.0
        %1096 = vmatpush1.msra.mxu0 0.0
        %1097 = vmatprep.mubr.f32.mxu0 0.0
        %v1098 = vand.u32 %v640, 4294901760
        %1099 = vmatmul.mubr.f32.gmra.mrb[0].mxu0 %v1098
        %v1100 = vpop.f32.mrb[0].mxu0
        %v1101 = vadd.f32 %v1005, %v1100
        %v1102 = vpop.f32.mrb[0].mxu0
        %v1103 = vadd.f32 %v1007, %v1102
        %1104 = vdwg.mxu0
        %v1105 = vand.u32 %v616, 4294901760
        %1106 = vmatprep.subr.mxu0 %v1105
        %v1107 = vand.u32 %v615, 4294901760
        %1108 = vmatpush1.msra.mxu0 %v1107
        %v1109 = vand.u32 %v618, 4294901760
        %1110 = vmatprep.subr.mxu0 %v1109
        %v1111 = vand.u32 %v617, 4294901760
        %1112 = vmatpush1.msra.mxu0 %v1111
        %v1113 = vand.u32 %v620, 4294901760
        %1114 = vmatprep.subr.mxu0 %v1113
        %v1115 = vand.u32 %v619, 4294901760
        %1116 = vmatpush1.msra.mxu0 %v1115
        %v1117 = vand.u32 %v622, 4294901760
        %1118 = vmatprep.subr.mxu0 %v1117
        %v1119 = vand.u32 %v621, 4294901760
        %1120 = vmatpush1.msra.mxu0 %v1119
        %1121 = vmatprep.subr.mxu0 0.0
        %1122 = vmatpush1.msra.mxu0 0.0
        %1123 = vmatprep.subr.mxu0 0.0
        %1124 = vmatpush1.msra.mxu0 0.0
        %1125 = vmatprep.subr.mxu0 0.0
        %1126 = vmatpush1.msra.mxu0 0.0
        %1127 = vmatprep.subr.mxu0 0.0
        %1128 = vmatpush1.msra.mxu0 0.0
        %1129 = vmatprep.subr.mxu0 0.0
        %1130 = vmatpush1.msra.mxu0 0.0
        %1131 = vmatprep.subr.mxu0 0.0
        %1132 = vmatpush1.msra.mxu0 0.0
        %1133 = vmatprep.subr.mxu0 0.0
        %1134 = vmatpush1.msra.mxu0 0.0
        %1135 = vmatprep.subr.mxu0 0.0
        %1136 = vmatpush1.msra.mxu0 0.0
        %1137 = vmatprep.subr.mxu0 0.0
        %1138 = vmatpush1.msra.mxu0 0.0
        %1139 = vmatprep.subr.mxu0 0.0
        %1140 = vmatpush1.msra.mxu0 0.0
        %1141 = vmatprep.subr.mxu0 0.0
        %1142 = vmatpush1.msra.mxu0 0.0
        %1143 = vmatprep.subr.mxu0 0.0
        %1144 = vmatpush1.msra.mxu0 0.0
        %1145 = vmatprep.subr.mxu0 0.0
        %1146 = vmatpush1.msra.mxu0 0.0
        %1147 = vmatprep.subr.mxu0 0.0
        %1148 = vmatpush1.msra.mxu0 0.0
        %1149 = vmatprep.subr.mxu0 0.0
        %1150 = vmatpush1.msra.mxu0 0.0
        %1151 = vmatprep.subr.mxu0 0.0
        %1152 = vmatpush1.msra.mxu0 0.0
        %1153 = vmatprep.subr.mxu0 0.0
        %1154 = vmatpush1.msra.mxu0 0.0
        %1155 = vmatprep.subr.mxu0 0.0
        %1156 = vmatpush1.msra.mxu0 0.0
        %1157 = vmatprep.subr.mxu0 0.0
        %1158 = vmatpush1.msra.mxu0 0.0
        %1159 = vmatprep.subr.mxu0 0.0
        %1160 = vmatpush1.msra.mxu0 0.0
        %1161 = vmatprep.subr.mxu0 0.0
        %1162 = vmatpush1.msra.mxu0 0.0
        %1163 = vmatprep.subr.mxu0 0.0
        %1164 = vmatpush1.msra.mxu0 0.0
        %1165 = vmatprep.subr.mxu0 0.0
        %1166 = vmatpush1.msra.mxu0 0.0
        %1167 = vmatprep.subr.mxu0 0.0
        %1168 = vmatpush1.msra.mxu0 0.0
        %1169 = vmatprep.subr.mxu0 0.0
        %1170 = vmatpush1.msra.mxu0 0.0
        %1171 = vmatprep.subr.mxu0 0.0
        %1172 = vmatpush1.msra.mxu0 0.0
        %1173 = vmatprep.subr.mxu0 0.0
        %1174 = vmatpush1.msra.mxu0 0.0
        %1175 = vmatprep.subr.mxu0 0.0
        %1176 = vmatpush1.msra.mxu0 0.0
        %1177 = vmatprep.mubr.f32.mxu0 0.0
        %v1178 = vand.u32 %v640, 4294901760
        %1179 = vmatmul.mubr.f32.gmra.mrb[0].mxu0 %v1178
        %v1180 = vpop.f32.mrb[0].mxu0
        %v1181 = vadd.f32 %v1101, %v1180
        %v1182 = vpop.f32.mrb[0].mxu0
        %v1183 = vadd.f32 %v1103, %v1182
        %1184 = vdwg.mxu0
        %v1185 = vmax.f32 %v1181, 0.0
        %v1186 = vmax.f32 %v1183, 0.0
        %v1187 = vld [vmem:[%s4] sm:$0xff]
        %v1188 = vld [vmem:[%s5] sm:$0xff]
        %1190 = vset.pattern.permute.xlu0 0
        %1191 = vperm.xlu0 %1190, %v1188
        %v1192 = vpop.permute.xlu0 %1191
        %vm1194 = vcmask 64512
        %v1196 = vsel %vm1194, %v1187, 0
        %v1198 = vand.u32 %v1186, 4294901760
        %1199 = vmatprep.subr.mxu0 %v1198
        %v1200 = vand.u32 %v1185, 4294901760
        %1201 = vmatpush1.msra.mxu0 %v1200
        %1202 = vmatprep.subr.mxu0 0.0
        %1203 = vmatpush1.msra.mxu0 0.0
        %1204 = vmatprep.subr.mxu0 0.0
        %1205 = vmatpush1.msra.mxu0 0.0
        %1206 = vmatprep.subr.mxu0 0.0
        %1207 = vmatpush1.msra.mxu0 0.0
        %1208 = vmatprep.subr.mxu0 0.0
        %1209 = vmatpush1.msra.mxu0 0.0
        %1210 = vmatprep.subr.mxu0 0.0
        %1211 = vmatpush1.msra.mxu0 0.0
        %1212 = vmatprep.subr.mxu0 0.0
        %1213 = vmatpush1.msra.mxu0 0.0
        %1214 = vmatprep.subr.mxu0 0.0
        %1215 = vmatpush1.msra.mxu0 0.0
        %1216 = vmatprep.subr.mxu0 0.0
        %1217 = vmatpush1.msra.mxu0 0.0
        %1218 = vmatprep.subr.mxu0 0.0
        %1219 = vmatpush1.msra.mxu0 0.0
        %1220 = vmatprep.subr.mxu0 0.0
        %1221 = vmatpush1.msra.mxu0 0.0
        %1222 = vmatprep.subr.mxu0 0.0
        %1223 = vmatpush1.msra.mxu0 0.0
        %1224 = vmatprep.subr.mxu0 0.0
        %1225 = vmatpush1.msra.mxu0 0.0
        %1226 = vmatprep.subr.mxu0 0.0
        %1227 = vmatpush1.msra.mxu0 0.0
        %1228 = vmatprep.subr.mxu0 0.0
        %1229 = vmatpush1.msra.mxu0 0.0
        %1230 = vmatprep.subr.mxu0 0.0
        %1231 = vmatpush1.msra.mxu0 0.0
        %1232 = vmatprep.subr.mxu0 0.0
        %1233 = vmatpush1.msra.mxu0 0.0
        %1234 = vmatprep.subr.mxu0 0.0
        %1235 = vmatpush1.msra.mxu0 0.0
        %1236 = vmatprep.subr.mxu0 0.0
        %1237 = vmatpush1.msra.mxu0 0.0
        %1238 = vmatprep.subr.mxu0 0.0
        %1239 = vmatpush1.msra.mxu0 0.0
        %1240 = vmatprep.subr.mxu0 0.0
        %1241 = vmatpush1.msra.mxu0 0.0
        %1242 = vmatprep.subr.mxu0 0.0
        %1243 = vmatpush1.msra.mxu0 0.0
        %1244 = vmatprep.subr.mxu0 0.0
        %1245 = vmatpush1.msra.mxu0 0.0
        %1246 = vmatprep.subr.mxu0 0.0
        %1247 = vmatpush1.msra.mxu0 0.0
        %1248 = vmatprep.subr.mxu0 0.0
        %1249 = vmatpush1.msra.mxu0 0.0
        %1250 = vmatprep.subr.mxu0 0.0
        %1251 = vmatpush1.msra.mxu0 0.0
        %1252 = vmatprep.subr.mxu0 0.0
        %1253 = vmatpush1.msra.mxu0 0.0
        %1254 = vmatprep.subr.mxu0 0.0
        %1255 = vmatpush1.msra.mxu0 0.0
        %1256 = vmatprep.subr.mxu0 0.0
        %1257 = vmatpush1.msra.mxu0 0.0
        %1258 = vmatprep.subr.mxu0 0.0
        %1259 = vmatpush1.msra.mxu0 0.0
        %1260 = vmatprep.subr.mxu0 0.0
        %1261 = vmatpush1.msra.mxu0 0.0
        %1262 = vmatprep.subr.mxu0 0.0
        %1263 = vmatpush1.msra.mxu0 0.0
        %1264 = vmatprep.mubr.f32.mxu0 0.0
        %v1265 = vand.u32 %v1196, 4294901760
        %v1266 = vsub.f32 %v1196, %v1265
        %v1267 = vand.u32 %v1266, 4294901760
        %v1268 = vsub.f32 %v1266, %v1267
        %v1269 = vand.u32 %v1268, 4294901760
        %1270 = vmatmul.mubr.f32.gmra.mrb[0].mxu0 %v1269
        %v1271 = vpop.f32.mrb[0].mxu0
        %v1272 = vadd.f32 %v1192, %v1271
        %v1273 = vpop.f32.mrb[0].mxu0
        %v1274 = vadd.f32 %v1192, %v1273
        %1275 = vdwg.mxu0
        %v1276 = vand.u32 %v1186, 4294901760
        %v1277 = vsub.f32 %v1186, %v1276
        %v1278 = vand.u32 %v1277, 4294901760
        %v1279 = vsub.f32 %v1277, %v1278
        %v1280 = vand.u32 %v1279, 4294901760
        %1281 = vmatprep.subr.mxu0 %v1280
        %v1282 = vand.u32 %v1185, 4294901760
        %v1283 = vsub.f32 %v1185, %v1282
        %v1284 = vand.u32 %v1283, 4294901760
        %v1285 = vsub.f32 %v1283, %v1284
        %v1286 = vand.u32 %v1285, 4294901760
        %1287 = vmatpush1.msra.mxu0 %v1286
        %1288 = vmatprep.subr.mxu0 0.0
        %1289 = vmatpush1.msra.mxu0 0.0
        %1290 = vmatprep.subr.mxu0 0.0
        %1291 = vmatpush1.msra.mxu0 0.0
        %1292 = vmatprep.subr.mxu0 0.0
        %1293 = vmatpush1.msra.mxu0 0.0
        %1294 = vmatprep.subr.mxu0 0.0
        %1295 = vmatpush1.msra.mxu0 0.0
        %1296 = vmatprep.subr.mxu0 0.0
        %1297 = vmatpush1.msra.mxu0 0.0
        %1298 = vmatprep.subr.mxu0 0.0
        %1299 = vmatpush1.msra.mxu0 0.0
        %1300 = vmatprep.subr.mxu0 0.0
        %1301 = vmatpush1.msra.mxu0 0.0
        %1302 = vmatprep.subr.mxu0 0.0
        %1303 = vmatpush1.msra.mxu0 0.0
        %1304 = vmatprep.subr.mxu0 0.0
        %1305 = vmatpush1.msra.mxu0 0.0
        %1306 = vmatprep.subr.mxu0 0.0
        %1307 = vmatpush1.msra.mxu0 0.0
        %1308 = vmatprep.subr.mxu0 0.0
        %1309 = vmatpush1.msra.mxu0 0.0
        %1310 = vmatprep.subr.mxu0 0.0
        %1311 = vmatpush1.msra.mxu0 0.0
        %1312 = vmatprep.subr.mxu0 0.0
        %1313 = vmatpush1.msra.mxu0 0.0
        %1314 = vmatprep.subr.mxu0 0.0
        %1315 = vmatpush1.msra.mxu0 0.0
        %1316 = vmatprep.subr.mxu0 0.0
        %1317 = vmatpush1.msra.mxu0 0.0
        %1318 = vmatprep.subr.mxu0 0.0
        %1319 = vmatpush1.msra.mxu0 0.0
        %1320 = vmatprep.subr.mxu0 0.0
        %1321 = vmatpush1.msra.mxu0 0.0
        %1322 = vmatprep.subr.mxu0 0.0
        %1323 = vmatpush1.msra.mxu0 0.0
        %1324 = vmatprep.subr.mxu0 0.0
        %1325 = vmatpush1.msra.mxu0 0.0
        %1326 = vmatprep.subr.mxu0 0.0
        %1327 = vmatpush1.msra.mxu0 0.0
        %1328 = vmatprep.subr.mxu0 0.0
        %1329 = vmatpush1.msra.mxu0 0.0
        %1330 = vmatprep.subr.mxu0 0.0
        %1331 = vmatpush1.msra.mxu0 0.0
        %1332 = vmatprep.subr.mxu0 0.0
        %1333 = vmatpush1.msra.mxu0 0.0
        %1334 = vmatprep.subr.mxu0 0.0
        %1335 = vmatpush1.msra.mxu0 0.0
        %1336 = vmatprep.subr.mxu0 0.0
        %1337 = vmatpush1.msra.mxu0 0.0
        %1338 = vmatprep.subr.mxu0 0.0
        %1339 = vmatpush1.msra.mxu0 0.0
        %1340 = vmatprep.subr.mxu0 0.0
        %1341 = vmatpush1.msra.mxu0 0.0
        %1342 = vmatprep.subr.mxu0 0.0
        %1343 = vmatpush1.msra.mxu0 0.0
        %1344 = vmatprep.subr.mxu0 0.0
        %1345 = vmatpush1.msra.mxu0 0.0
        %1346 = vmatprep.subr.mxu0 0.0
        %1347 = vmatpush1.msra.mxu0 0.0
        %1348 = vmatprep.subr.mxu0 0.0
        %1349 = vmatpush1.msra.mxu0 0.0
        %1350 = vmatprep.mubr.f32.mxu0 0.0
        %v1351 = vand.u32 %v1196, 4294901760
        %1352 = vmatmul.mubr.f32.gmra.mrb[0].mxu0 %v1351
        %v1353 = vpop.f32.mrb[0].mxu0
        %v1354 = vadd.f32 %v1272, %v1353
        %v1355 = vpop.f32.mrb[0].mxu0
        %v1356 = vadd.f32 %v1274, %v1355
        %1357 = vdwg.mxu0
        %v1358 = vand.u32 %v1186, 4294901760
        %v1359 = vsub.f32 %v1186, %v1358
        %1360 = vmatprep.subr.mxu0 %v1359
        %v1361 = vand.u32 %v1185, 4294901760
        %v1362 = vsub.f32 %v1185, %v1361
        %1363 = vmatpush1.msra.mxu0 %v1362
        %1364 = vmatprep.subr.mxu0 0.0
        %1365 = vmatpush1.msra.mxu0 0.0
        %1366 = vmatprep.subr.mxu0 0.0
        %1367 = vmatpush1.msra.mxu0 0.0
        %1368 = vmatprep.subr.mxu0 0.0
        %1369 = vmatpush1.msra.mxu0 0.0
        %1370 = vmatprep.subr.mxu0 0.0
        %1371 = vmatpush1.msra.mxu0 0.0
        %1372 = vmatprep.subr.mxu0 0.0
        %1373 = vmatpush1.msra.mxu0 0.0
        %1374 = vmatprep.subr.mxu0 0.0
        %1375 = vmatpush1.msra.mxu0 0.0
        %1376 = vmatprep.subr.mxu0 0.0
        %1377 = vmatpush1.msra.mxu0 0.0
        %1378 = vmatprep.subr.mxu0 0.0
        %1379 = vmatpush1.msra.mxu0 0.0
        %1380 = vmatprep.subr.mxu0 0.0
        %1381 = vmatpush1.msra.mxu0 0.0
        %1382 = vmatprep.subr.mxu0 0.0
        %1383 = vmatpush1.msra.mxu0 0.0
        %1384 = vmatprep.subr.mxu0 0.0
        %1385 = vmatpush1.msra.mxu0 0.0
        %1386 = vmatprep.subr.mxu0 0.0
        %1387 = vmatpush1.msra.mxu0 0.0
        %1388 = vmatprep.subr.mxu0 0.0
        %1389 = vmatpush1.msra.mxu0 0.0
        %1390 = vmatprep.subr.mxu0 0.0
        %1391 = vmatpush1.msra.mxu0 0.0
        %1392 = vmatprep.subr.mxu0 0.0
        %1393 = vmatpush1.msra.mxu0 0.0
        %1394 = vmatprep.subr.mxu0 0.0
        %1395 = vmatpush1.msra.mxu0 0.0
        %1396 = vmatprep.subr.mxu0 0.0
        %1397 = vmatpush1.msra.mxu0 0.0
        %1398 = vmatprep.subr.mxu0 0.0
        %1399 = vmatpush1.msra.mxu0 0.0
        %1400 = vmatprep.subr.mxu0 0.0
        %1401 = vmatpush1.msra.mxu0 0.0
        %1402 = vmatprep.subr.mxu0 0.0
        %1403 = vmatpush1.msra.mxu0 0.0
        %1404 = vmatprep.subr.mxu0 0.0
        %1405 = vmatpush1.msra.mxu0 0.0
        %1406 = vmatprep.subr.mxu0 0.0
        %1407 = vmatpush1.msra.mxu0 0.0
        %1408 = vmatprep.subr.mxu0 0.0
        %1409 = vmatpush1.msra.mxu0 0.0
        %1410 = vmatprep.subr.mxu0 0.0
        %1411 = vmatpush1.msra.mxu0 0.0
        %1412 = vmatprep.subr.mxu0 0.0
        %1413 = vmatpush1.msra.mxu0 0.0
        %1414 = vmatprep.subr.mxu0 0.0
        %1415 = vmatpush1.msra.mxu0 0.0
        %1416 = vmatprep.subr.mxu0 0.0
        %1417 = vmatpush1.msra.mxu0 0.0
        %1418 = vmatprep.subr.mxu0 0.0
        %1419 = vmatpush1.msra.mxu0 0.0
        %1420 = vmatprep.subr.mxu0 0.0
        %1421 = vmatpush1.msra.mxu0 0.0
        %1422 = vmatprep.subr.mxu0 0.0
        %1423 = vmatpush1.msra.mxu0 0.0
        %1424 = vmatprep.subr.mxu0 0.0
        %1425 = vmatpush1.msra.mxu0 0.0
        %1426 = vmatprep.mubr.f32.mxu0 0.0
        %v1427 = vand.u32 %v1196, 4294901760
        %v1428 = vsub.f32 %v1196, %v1427
        %1429 = vmatmul.mubr.f32.gmra.mrb[0].mxu0 %v1428
        %v1430 = vpop.f32.mrb[0].mxu0
        %v1431 = vadd.f32 %v1354, %v1430
        %v1432 = vpop.f32.mrb[0].mxu0
        %v1433 = vadd.f32 %v1356, %v1432
        %1434 = vdwg.mxu0
        %v1435 = vand.u32 %v1186, 4294901760
        %1436 = vmatprep.subr.mxu0 %v1435
        %v1437 = vand.u32 %v1185, 4294901760
        %1438 = vmatpush1.msra.mxu0 %v1437
        %1439 = vmatprep.subr.mxu0 0.0
        %1440 = vmatpush1.msra.mxu0 0.0
        %1441 = vmatprep.subr.mxu0 0.0
        %1442 = vmatpush1.msra.mxu0 0.0
        %1443 = vmatprep.subr.mxu0 0.0
        %1444 = vmatpush1.msra.mxu0 0.0
        %1445 = vmatprep.subr.mxu0 0.0
        %1446 = vmatpush1.msra.mxu0 0.0
        %1447 = vmatprep.subr.mxu0 0.0
        %1448 = vmatpush1.msra.mxu0 0.0
        %1449 = vmatprep.subr.mxu0 0.0
        %1450 = vmatpush1.msra.mxu0 0.0
        %1451 = vmatprep.subr.mxu0 0.0
        %1452 = vmatpush1.msra.mxu0 0.0
        %1453 = vmatprep.subr.mxu0 0.0
        %1454 = vmatpush1.msra.mxu0 0.0
        %1455 = vmatprep.subr.mxu0 0.0
        %1456 = vmatpush1.msra.mxu0 0.0
        %1457 = vmatprep.subr.mxu0 0.0
        %1458 = vmatpush1.msra.mxu0 0.0
        %1459 = vmatprep.subr.mxu0 0.0
        %1460 = vmatpush1.msra.mxu0 0.0
        %1461 = vmatprep.subr.mxu0 0.0
        %1462 = vmatpush1.msra.mxu0 0.0
        %1463 = vmatprep.subr.mxu0 0.0
        %1464 = vmatpush1.msra.mxu0 0.0
        %1465 = vmatprep.subr.mxu0 0.0
        %1466 = vmatpush1.msra.mxu0 0.0
        %1467 = vmatprep.subr.mxu0 0.0
        %1468 = vmatpush1.msra.mxu0 0.0
        %1469 = vmatprep.subr.mxu0 0.0
        %1470 = vmatpush1.msra.mxu0 0.0
        %1471 = vmatprep.subr.mxu0 0.0
        %1472 = vmatpush1.msra.mxu0 0.0
        %1473 = vmatprep.subr.mxu0 0.0
        %1474 = vmatpush1.msra.mxu0 0.0
        %1475 = vmatprep.subr.mxu0 0.0
        %1476 = vmatpush1.msra.mxu0 0.0
        %1477 = vmatprep.subr.mxu0 0.0
        %1478 = vmatpush1.msra.mxu0 0.0
        %1479 = vmatprep.subr.mxu0 0.0
        %1480 = vmatpush1.msra.mxu0 0.0
        %1481 = vmatprep.subr.mxu0 0.0
        %1482 = vmatpush1.msra.mxu0 0.0
        %1483 = vmatprep.subr.mxu0 0.0
        %1484 = vmatpush1.msra.mxu0 0.0
        %1485 = vmatprep.subr.mxu0 0.0
        %1486 = vmatpush1.msra.mxu0 0.0
        %1487 = vmatprep.subr.mxu0 0.0
        %1488 = vmatpush1.msra.mxu0 0.0
        %1489 = vmatprep.subr.mxu0 0.0
        %1490 = vmatpush1.msra.mxu0 0.0
        %1491 = vmatprep.subr.mxu0 0.0
        %1492 = vmatpush1.msra.mxu0 0.0
        %1493 = vmatprep.subr.mxu0 0.0
        %1494 = vmatpush1.msra.mxu0 0.0
        %1495 = vmatprep.subr.mxu0 0.0
        %1496 = vmatpush1.msra.mxu0 0.0
        %1497 = vmatprep.subr.mxu0 0.0
        %1498 = vmatpush1.msra.mxu0 0.0
        %1499 = vmatprep.subr.mxu0 0.0
        %1500 = vmatpush1.msra.mxu0 0.0
        %1501 = vmatprep.mubr.f32.mxu0 0.0
        %v1502 = vand.u32 %v1196, 4294901760
        %v1503 = vsub.f32 %v1196, %v1502
        %v1504 = vand.u32 %v1503, 4294901760
        %1505 = vmatmul.mubr.f32.gmra.mrb[0].mxu0 %v1504
        %v1506 = vpop.f32.mrb[0].mxu0
        %v1507 = vadd.f32 %v1431, %v1506
        %v1508 = vpop.f32.mrb[0].mxu0
        %v1509 = vadd.f32 %v1433, %v1508
        %1510 = vdwg.mxu0
        %v1511 = vand.u32 %v1186, 4294901760
        %v1512 = vsub.f32 %v1186, %v1511
        %v1513 = vand.u32 %v1512, 4294901760
        %1514 = vmatprep.subr.mxu0 %v1513
        %v1515 = vand.u32 %v1185, 4294901760
        %v1516 = vsub.f32 %v1185, %v1515
        %v1517 = vand.u32 %v1516, 4294901760
        %1518 = vmatpush1.msra.mxu0 %v1517
        %1519 = vmatprep.subr.mxu0 0.0
        %1520 = vmatpush1.msra.mxu0 0.0
        %1521 = vmatprep.subr.mxu0 0.0
        %1522 = vmatpush1.msra.mxu0 0.0
        %1523 = vmatprep.subr.mxu0 0.0
        %1524 = vmatpush1.msra.mxu0 0.0
        %1525 = vmatprep.subr.mxu0 0.0
        %1526 = vmatpush1.msra.mxu0 0.0
        %1527 = vmatprep.subr.mxu0 0.0
        %1528 = vmatpush1.msra.mxu0 0.0
        %1529 = vmatprep.subr.mxu0 0.0
        %1530 = vmatpush1.msra.mxu0 0.0
        %1531 = vmatprep.subr.mxu0 0.0
        %1532 = vmatpush1.msra.mxu0 0.0
        %1533 = vmatprep.subr.mxu0 0.0
        %1534 = vmatpush1.msra.mxu0 0.0
        %1535 = vmatprep.subr.mxu0 0.0
        %1536 = vmatpush1.msra.mxu0 0.0
        %1537 = vmatprep.subr.mxu0 0.0
        %1538 = vmatpush1.msra.mxu0 0.0
        %1539 = vmatprep.subr.mxu0 0.0
        %1540 = vmatpush1.msra.mxu0 0.0
        %1541 = vmatprep.subr.mxu0 0.0
        %1542 = vmatpush1.msra.mxu0 0.0
        %1543 = vmatprep.subr.mxu0 0.0
        %1544 = vmatpush1.msra.mxu0 0.0
        %1545 = vmatprep.subr.mxu0 0.0
        %1546 = vmatpush1.msra.mxu0 0.0
        %1547 = vmatprep.subr.mxu0 0.0
        %1548 = vmatpush1.msra.mxu0 0.0
        %1549 = vmatprep.subr.mxu0 0.0
        %1550 = vmatpush1.msra.mxu0 0.0
        %1551 = vmatprep.subr.mxu0 0.0
        %1552 = vmatpush1.msra.mxu0 0.0
        %1553 = vmatprep.subr.mxu0 0.0
        %1554 = vmatpush1.msra.mxu0 0.0
        %1555 = vmatprep.subr.mxu0 0.0
        %1556 = vmatpush1.msra.mxu0 0.0
        %1557 = vmatprep.subr.mxu0 0.0
        %1558 = vmatpush1.msra.mxu0 0.0
        %1559 = vmatprep.subr.mxu0 0.0
        %1560 = vmatpush1.msra.mxu0 0.0
        %1561 = vmatprep.subr.mxu0 0.0
        %1562 = vmatpush1.msra.mxu0 0.0
        %1563 = vmatprep.subr.mxu0 0.0
        %1564 = vmatpush1.msra.mxu0 0.0
        %1565 = vmatprep.subr.mxu0 0.0
        %1566 = vmatpush1.msra.mxu0 0.0
        %1567 = vmatprep.subr.mxu0 0.0
        %1568 = vmatpush1.msra.mxu0 0.0
        %1569 = vmatprep.subr.mxu0 0.0
        %1570 = vmatpush1.msra.mxu0 0.0
        %1571 = vmatprep.subr.mxu0 0.0
        %1572 = vmatpush1.msra.mxu0 0.0
        %1573 = vmatprep.subr.mxu0 0.0
        %1574 = vmatpush1.msra.mxu0 0.0
        %1575 = vmatprep.subr.mxu0 0.0
        %1576 = vmatpush1.msra.mxu0 0.0
        %1577 = vmatprep.subr.mxu0 0.0
        %1578 = vmatpush1.msra.mxu0 0.0
        %1579 = vmatprep.subr.mxu0 0.0
        %1580 = vmatpush1.msra.mxu0 0.0
        %1581 = vmatprep.mubr.f32.mxu0 0.0
        %v1582 = vand.u32 %v1196, 4294901760
        %1583 = vmatmul.mubr.f32.gmra.mrb[0].mxu0 %v1582
        %v1584 = vpop.f32.mrb[0].mxu0
        %v1585 = vadd.f32 %v1507, %v1584
        %v1586 = vpop.f32.mrb[0].mxu0
        %v1587 = vadd.f32 %v1509, %v1586
        %1588 = vdwg.mxu0
        %v1589 = vand.u32 %v1186, 4294901760
        %1590 = vmatprep.subr.mxu0 %v1589
        %v1591 = vand.u32 %v1185, 4294901760
        %1592 = vmatpush1.msra.mxu0 %v1591
        %1593 = vmatprep.subr.mxu0 0.0
        %1594 = vmatpush1.msra.mxu0 0.0
        %1595 = vmatprep.subr.mxu0 0.0
        %1596 = vmatpush1.msra.mxu0 0.0
        %1597 = vmatprep.subr.mxu0 0.0
        %1598 = vmatpush1.msra.mxu0 0.0
        %1599 = vmatprep.subr.mxu0 0.0
        %1600 = vmatpush1.msra.mxu0 0.0
        %1601 = vmatprep.subr.mxu0 0.0
        %1602 = vmatpush1.msra.mxu0 0.0
        %1603 = vmatprep.subr.mxu0 0.0
        %1604 = vmatpush1.msra.mxu0 0.0
        %1605 = vmatprep.subr.mxu0 0.0
        %1606 = vmatpush1.msra.mxu0 0.0
        %1607 = vmatprep.subr.mxu0 0.0
        %1608 = vmatpush1.msra.mxu0 0.0
        %1609 = vmatprep.subr.mxu0 0.0
        %1610 = vmatpush1.msra.mxu0 0.0
        %1611 = vmatprep.subr.mxu0 0.0
        %1612 = vmatpush1.msra.mxu0 0.0
        %1613 = vmatprep.subr.mxu0 0.0
        %1614 = vmatpush1.msra.mxu0 0.0
        %1615 = vmatprep.subr.mxu0 0.0
        %1616 = vmatpush1.msra.mxu0 0.0
        %1617 = vmatprep.subr.mxu0 0.0
        %1618 = vmatpush1.msra.mxu0 0.0
        %1619 = vmatprep.subr.mxu0 0.0
        %1620 = vmatpush1.msra.mxu0 0.0
        %1621 = vmatprep.subr.mxu0 0.0
        %1622 = vmatpush1.msra.mxu0 0.0
        %1623 = vmatprep.subr.mxu0 0.0
        %1624 = vmatpush1.msra.mxu0 0.0
        %1625 = vmatprep.subr.mxu0 0.0
        %1626 = vmatpush1.msra.mxu0 0.0
        %1627 = vmatprep.subr.mxu0 0.0
        %1628 = vmatpush1.msra.mxu0 0.0
        %1629 = vmatprep.subr.mxu0 0.0
        %1630 = vmatpush1.msra.mxu0 0.0
        %1631 = vmatprep.subr.mxu0 0.0
        %1632 = vmatpush1.msra.mxu0 0.0
        %1633 = vmatprep.subr.mxu0 0.0
        %1634 = vmatpush1.msra.mxu0 0.0
        %1635 = vmatprep.subr.mxu0 0.0
        %1636 = vmatpush1.msra.mxu0 0.0
        %1637 = vmatprep.subr.mxu0 0.0
        %1638 = vmatpush1.msra.mxu0 0.0
        %1639 = vmatprep.subr.mxu0 0.0
        %1640 = vmatpush1.msra.mxu0 0.0
        %1641 = vmatprep.subr.mxu0 0.0
        %1642 = vmatpush1.msra.mxu0 0.0
        %1643 = vmatprep.subr.mxu0 0.0
        %1644 = vmatpush1.msra.mxu0 0.0
        %1645 = vmatprep.subr.mxu0 0.0
        %1646 = vmatpush1.msra.mxu0 0.0
        %1647 = vmatprep.subr.mxu0 0.0
        %1648 = vmatpush1.msra.mxu0 0.0
        %1649 = vmatprep.subr.mxu0 0.0
        %1650 = vmatpush1.msra.mxu0 0.0
        %1651 = vmatprep.subr.mxu0 0.0
        %1652 = vmatpush1.msra.mxu0 0.0
        %1653 = vmatprep.subr.mxu0 0.0
        %1654 = vmatpush1.msra.mxu0 0.0
        %1655 = vmatprep.mubr.f32.mxu0 0.0
        %v1656 = vand.u32 %v1196, 4294901760
        %1657 = vmatmul.mubr.f32.gmra.mrb[0].mxu0 %v1656
        %v1658 = vpop.f32.mrb[0].mxu0
        %v1659 = vadd.f32 %v1585, %v1658
        %v1660 = vpop.f32.mrb[0].mxu0
        %v1661 = vadd.f32 %v1587, %v1660
        %1662 = vdwg.mxu0
        %v1663 = vmax.f32 %v1659, 0.0
        %v1664 = vmax.f32 %v1661, 0.0
        %v1665 = vld [vmem:[%s7] sm:$0xff]
        %v1666 = vld [vmem:[%s8] sm:$0xff]
        %1668 = vset.pattern.permute.xlu0 0
        %1669 = vperm.xlu0 %1668, %v1666
        %v1670 = vpop.permute.xlu0 %1669
        %v1673 = vsel %vm638, %v1665, 0
        %v1675 = vand.u32 %v624, 4294901760
        %1676 = vmatprep.subr.mxu0 %v1675
        %v1677 = vand.u32 %v623, 4294901760
        %1678 = vmatpush1.msra.mxu0 %v1677
        %v1679 = vand.u32 %v626, 4294901760
        %1680 = vmatprep.subr.mxu0 %v1679
        %v1681 = vand.u32 %v625, 4294901760
        %1682 = vmatpush1.msra.mxu0 %v1681
        %v1683 = vand.u32 %v628, 4294901760
        %1684 = vmatprep.subr.mxu0 %v1683
        %v1685 = vand.u32 %v627, 4294901760
        %1686 = vmatpush1.msra.mxu0 %v1685
        %v1687 = vand.u32 %v630, 4294901760
        %1688 = vmatprep.subr.mxu0 %v1687
        %v1689 = vand.u32 %v629, 4294901760
        %1690 = vmatpush1.msra.mxu0 %v1689
        %1691 = vmatprep.subr.mxu0 0.0
        %1692 = vmatpush1.msra.mxu0 0.0
        %1693 = vmatprep.subr.mxu0 0.0
        %1694 = vmatpush1.msra.mxu0 0.0
        %1695 = vmatprep.subr.mxu0 0.0
        %1696 = vmatpush1.msra.mxu0 0.0
        %1697 = vmatprep.subr.mxu0 0.0
        %1698 = vmatpush1.msra.mxu0 0.0
        %1699 = vmatprep.subr.mxu0 0.0
        %1700 = vmatpush1.msra.mxu0 0.0
        %1701 = vmatprep.subr.mxu0 0.0
        %1702 = vmatpush1.msra.mxu0 0.0
        %1703 = vmatprep.subr.mxu0 0.0
        %1704 = vmatpush1.msra.mxu0 0.0
        %1705 = vmatprep.subr.mxu0 0.0
        %1706 = vmatpush1.msra.mxu0 0.0
        %1707 = vmatprep.subr.mxu0 0.0
        %1708 = vmatpush1.msra.mxu0 0.0
        %1709 = vmatprep.subr.mxu0 0.0
        %1710 = vmatpush1.msra.mxu0 0.0
        %1711 = vmatprep.subr.mxu0 0.0
        %1712 = vmatpush1.msra.mxu0 0.0
        %1713 = vmatprep.subr.mxu0 0.0
        %1714 = vmatpush1.msra.mxu0 0.0
        %1715 = vmatprep.subr.mxu0 0.0
        %1716 = vmatpush1.msra.mxu0 0.0
        %1717 = vmatprep.subr.mxu0 0.0
        %1718 = vmatpush1.msra.mxu0 0.0
        %1719 = vmatprep.subr.mxu0 0.0
        %1720 = vmatpush1.msra.mxu0 0.0
        %1721 = vmatprep.subr.mxu0 0.0
        %1722 = vmatpush1.msra.mxu0 0.0
        %1723 = vmatprep.subr.mxu0 0.0
        %1724 = vmatpush1.msra.mxu0 0.0
        %1725 = vmatprep.subr.mxu0 0.0
        %1726 = vmatpush1.msra.mxu0 0.0
        %1727 = vmatprep.subr.mxu0 0.0
        %1728 = vmatpush1.msra.mxu0 0.0
        %1729 = vmatprep.subr.mxu0 0.0
        %1730 = vmatpush1.msra.mxu0 0.0
        %1731 = vmatprep.subr.mxu0 0.0
        %1732 = vmatpush1.msra.mxu0 0.0
        %1733 = vmatprep.subr.mxu0 0.0
        %1734 = vmatpush1.msra.mxu0 0.0
        %1735 = vmatprep.subr.mxu0 0.0
        %1736 = vmatpush1.msra.mxu0 0.0
        %1737 = vmatprep.subr.mxu0 0.0
        %1738 = vmatpush1.msra.mxu0 0.0
        %1739 = vmatprep.subr.mxu0 0.0
        %1740 = vmatpush1.msra.mxu0 0.0
        %1741 = vmatprep.subr.mxu0 0.0
        %1742 = vmatpush1.msra.mxu0 0.0
        %1743 = vmatprep.subr.mxu0 0.0
        %1744 = vmatpush1.msra.mxu0 0.0
        %1745 = vmatprep.subr.mxu0 0.0
        %1746 = vmatpush1.msra.mxu0 0.0
        %1747 = vmatprep.mubr.f32.mxu0 0.0
        %v1748 = vand.u32 %v1673, 4294901760
        %v1749 = vsub.f32 %v1673, %v1748
        %v1750 = vand.u32 %v1749, 4294901760
        %v1751 = vsub.f32 %v1749, %v1750
        %v1752 = vand.u32 %v1751, 4294901760
        %1753 = vmatmul.mubr.f32.gmra.mrb[0].mxu0 %v1752
        %v1754 = vpop.f32.mrb[0].mxu0
        %v1755 = vadd.f32 %v1670, %v1754
        %v1756 = vpop.f32.mrb[0].mxu0
        %v1757 = vadd.f32 %v1670, %v1756
        %1758 = vdwg.mxu0
        %v1759 = vand.u32 %v624, 4294901760
        %v1760 = vsub.f32 %v624, %v1759
        %v1761 = vand.u32 %v1760, 4294901760
        %v1762 = vsub.f32 %v1760, %v1761
        %v1763 = vand.u32 %v1762, 4294901760
        %1764 = vmatprep.subr.mxu0 %v1763
        %v1765 = vand.u32 %v623, 4294901760
        %v1766 = vsub.f32 %v623, %v1765
        %v1767 = vand.u32 %v1766, 4294901760
        %v1768 = vsub.f32 %v1766, %v1767
        %v1769 = vand.u32 %v1768, 4294901760
        %1770 = vmatpush1.msra.mxu0 %v1769
        %v1771 = vand.u32 %v626, 4294901760
        %v1772 = vsub.f32 %v626, %v1771
        %v1773 = vand.u32 %v1772, 4294901760
        %v1774 = vsub.f32 %v1772, %v1773
        %v1775 = vand.u32 %v1774, 4294901760
        %1776 = vmatprep.subr.mxu0 %v1775
        %v1777 = vand.u32 %v625, 4294901760
        %v1778 = vsub.f32 %v625, %v1777
        %v1779 = vand.u32 %v1778, 4294901760
        %v1780 = vsub.f32 %v1778, %v1779
        %v1781 = vand.u32 %v1780, 4294901760
        %1782 = vmatpush1.msra.mxu0 %v1781
        %v1783 = vand.u32 %v628, 4294901760
        %v1784 = vsub.f32 %v628, %v1783
        %v1785 = vand.u32 %v1784, 4294901760
        %v1786 = vsub.f32 %v1784, %v1785
        %v1787 = vand.u32 %v1786, 4294901760
        %1788 = vmatprep.subr.mxu0 %v1787
        %v1789 = vand.u32 %v627, 4294901760
        %v1790 = vsub.f32 %v627, %v1789
        %v1791 = vand.u32 %v1790, 4294901760
        %v1792 = vsub.f32 %v1790, %v1791
        %v1793 = vand.u32 %v1792, 4294901760
        %1794 = vmatpush1.msra.mxu0 %v1793
        %v1795 = vand.u32 %v630, 4294901760
        %v1796 = vsub.f32 %v630, %v1795
        %v1797 = vand.u32 %v1796, 4294901760
        %v1798 = vsub.f32 %v1796, %v1797
        %v1799 = vand.u32 %v1798, 4294901760
        %1800 = vmatprep.subr.mxu0 %v1799
        %v1801 = vand.u32 %v629, 4294901760
        %v1802 = vsub.f32 %v629, %v1801
        %v1803 = vand.u32 %v1802, 4294901760
        %v1804 = vsub.f32 %v1802, %v1803
        %v1805 = vand.u32 %v1804, 4294901760
        %1806 = vmatpush1.msra.mxu0 %v1805
        %1807 = vmatprep.subr.mxu0 0.0
        %1808 = vmatpush1.msra.mxu0 0.0
        %1809 = vmatprep.subr.mxu0 0.0
        %1810 = vmatpush1.msra.mxu0 0.0
        %1811 = vmatprep.subr.mxu0 0.0
        %1812 = vmatpush1.msra.mxu0 0.0
        %1813 = vmatprep.subr.mxu0 0.0
        %1814 = vmatpush1.msra.mxu0 0.0
        %1815 = vmatprep.subr.mxu0 0.0
        %1816 = vmatpush1.msra.mxu0 0.0
        %1817 = vmatprep.subr.mxu0 0.0
        %1818 = vmatpush1.msra.mxu0 0.0
        %1819 = vmatprep.subr.mxu0 0.0
        %1820 = vmatpush1.msra.mxu0 0.0
        %1821 = vmatprep.subr.mxu0 0.0
        %1822 = vmatpush1.msra.mxu0 0.0
        %1823 = vmatprep.subr.mxu0 0.0
        %1824 = vmatpush1.msra.mxu0 0.0
        %1825 = vmatprep.subr.mxu0 0.0
        %1826 = vmatpush1.msra.mxu0 0.0
        %1827 = vmatprep.subr.mxu0 0.0
        %1828 = vmatpush1.msra.mxu0 0.0
        %1829 = vmatprep.subr.mxu0 0.0
        %1830 = vmatpush1.msra.mxu0 0.0
        %1831 = vmatprep.subr.mxu0 0.0
        %1832 = vmatpush1.msra.mxu0 0.0
        %1833 = vmatprep.subr.mxu0 0.0
        %1834 = vmatpush1.msra.mxu0 0.0
        %1835 = vmatprep.subr.mxu0 0.0
        %1836 = vmatpush1.msra.mxu0 0.0
        %1837 = vmatprep.subr.mxu0 0.0
        %1838 = vmatpush1.msra.mxu0 0.0
        %1839 = vmatprep.subr.mxu0 0.0
        %1840 = vmatpush1.msra.mxu0 0.0
        %1841 = vmatprep.subr.mxu0 0.0
        %1842 = vmatpush1.msra.mxu0 0.0
        %1843 = vmatprep.subr.mxu0 0.0
        %1844 = vmatpush1.msra.mxu0 0.0
        %1845 = vmatprep.subr.mxu0 0.0
        %1846 = vmatpush1.msra.mxu0 0.0
        %1847 = vmatprep.subr.mxu0 0.0
        %1848 = vmatpush1.msra.mxu0 0.0
        %1849 = vmatprep.subr.mxu0 0.0
        %1850 = vmatpush1.msra.mxu0 0.0
        %1851 = vmatprep.subr.mxu0 0.0
        %1852 = vmatpush1.msra.mxu0 0.0
        %1853 = vmatprep.subr.mxu0 0.0
        %1854 = vmatpush1.msra.mxu0 0.0
        %1855 = vmatprep.subr.mxu0 0.0
        %1856 = vmatpush1.msra.mxu0 0.0
        %1857 = vmatprep.subr.mxu0 0.0
        %1858 = vmatpush1.msra.mxu0 0.0
        %1859 = vmatprep.subr.mxu0 0.0
        %1860 = vmatpush1.msra.mxu0 0.0
        %1861 = vmatprep.subr.mxu0 0.0
        %1862 = vmatpush1.msra.mxu0 0.0
        %1863 = vmatprep.mubr.f32.mxu0 0.0
        %v1864 = vand.u32 %v1673, 4294901760
        %1865 = vmatmul.mubr.f32.gmra.mrb[0].mxu0 %v1864
        %v1866 = vpop.f32.mrb[0].mxu0
        %v1867 = vadd.f32 %v1755, %v1866
        %v1868 = vpop.f32.mrb[0].mxu0
        %v1869 = vadd.f32 %v1757, %v1868
        %1870 = vdwg.mxu0
        %v1871 = vand.u32 %v624, 4294901760
        %v1872 = vsub.f32 %v624, %v1871
        %1873 = vmatprep.subr.mxu0 %v1872
        %v1874 = vand.u32 %v623, 4294901760
        %v1875 = vsub.f32 %v623, %v1874
        %1876 = vmatpush1.msra.mxu0 %v1875
        %v1877 = vand.u32 %v626, 4294901760
        %v1878 = vsub.f32 %v626, %v1877
        %1879 = vmatprep.subr.mxu0 %v1878
        %v1880 = vand.u32 %v625, 4294901760
        %v1881 = vsub.f32 %v625, %v1880
        %1882 = vmatpush1.msra.mxu0 %v1881
        %v1883 = vand.u32 %v628, 4294901760
        %v1884 = vsub.f32 %v628, %v1883
        %1885 = vmatprep.subr.mxu0 %v1884
        %v1886 = vand.u32 %v627, 4294901760
        %v1887 = vsub.f32 %v627, %v1886
        %1888 = vmatpush1.msra.mxu0 %v1887
        %v1889 = vand.u32 %v630, 4294901760
        %v1890 = vsub.f32 %v630, %v1889
        %1891 = vmatprep.subr.mxu0 %v1890
        %v1892 = vand.u32 %v629, 4294901760
        %v1893 = vsub.f32 %v629, %v1892
        %1894 = vmatpush1.msra.mxu0 %v1893
        %1895 = vmatprep.subr.mxu0 0.0
        %1896 = vmatpush1.msra.mxu0 0.0
        %1897 = vmatprep.subr.mxu0 0.0
        %1898 = vmatpush1.msra.mxu0 0.0
        %1899 = vmatprep.subr.mxu0 0.0
        %1900 = vmatpush1.msra.mxu0 0.0
        %1901 = vmatprep.subr.mxu0 0.0
        %1902 = vmatpush1.msra.mxu0 0.0
        %1903 = vmatprep.subr.mxu0 0.0
        %1904 = vmatpush1.msra.mxu0 0.0
        %1905 = vmatprep.subr.mxu0 0.0
        %1906 = vmatpush1.msra.mxu0 0.0
        %1907 = vmatprep.subr.mxu0 0.0
        %1908 = vmatpush1.msra.mxu0 0.0
        %1909 = vmatprep.subr.mxu0 0.0
        %1910 = vmatpush1.msra.mxu0 0.0
        %1911 = vmatprep.subr.mxu0 0.0
        %1912 = vmatpush1.msra.mxu0 0.0
        %1913 = vmatprep.subr.mxu0 0.0
        %1914 = vmatpush1.msra.mxu0 0.0
        %1915 = vmatprep.subr.mxu0 0.0
        %1916 = vmatpush1.msra.mxu0 0.0
        %1917 = vmatprep.subr.mxu0 0.0
        %1918 = vmatpush1.msra.mxu0 0.0
        %1919 = vmatprep.subr.mxu0 0.0
        %1920 = vmatpush1.msra.mxu0 0.0
        %1921 = vmatprep.subr.mxu0 0.0
        %1922 = vmatpush1.msra.mxu0 0.0
        %1923 = vmatprep.subr.mxu0 0.0
        %1924 = vmatpush1.msra.mxu0 0.0
        %1925 = vmatprep.subr.mxu0 0.0
        %1926 = vmatpush1.msra.mxu0 0.0
        %1927 = vmatprep.subr.mxu0 0.0
        %1928 = vmatpush1.msra.mxu0 0.0
        %1929 = vmatprep.subr.mxu0 0.0
        %1930 = vmatpush1.msra.mxu0 0.0
        %1931 = vmatprep.subr.mxu0 0.0
        %1932 = vmatpush1.msra.mxu0 0.0
        %1933 = vmatprep.subr.mxu0 0.0
        %1934 = vmatpush1.msra.mxu0 0.0
        %1935 = vmatprep.subr.mxu0 0.0
        %1936 = vmatpush1.msra.mxu0 0.0
        %1937 = vmatprep.subr.mxu0 0.0
        %1938 = vmatpush1.msra.mxu0 0.0
        %1939 = vmatprep.subr.mxu0 0.0
        %1940 = vmatpush1.msra.mxu0 0.0
        %1941 = vmatprep.subr.mxu0 0.0
        %1942 = vmatpush1.msra.mxu0 0.0
        %1943 = vmatprep.subr.mxu0 0.0
        %1944 = vmatpush1.msra.mxu0 0.0
        %1945 = vmatprep.subr.mxu0 0.0
        %1946 = vmatpush1.msra.mxu0 0.0
        %1947 = vmatprep.subr.mxu0 0.0
        %1948 = vmatpush1.msra.mxu0 0.0
        %1949 = vmatprep.subr.mxu0 0.0
        %1950 = vmatpush1.msra.mxu0 0.0
        %1951 = vmatprep.mubr.f32.mxu0 0.0
        %v1952 = vand.u32 %v1673, 4294901760
        %v1953 = vsub.f32 %v1673, %v1952
        %1954 = vmatmul.mubr.f32.gmra.mrb[0].mxu0 %v1953
        %v1955 = vpop.f32.mrb[0].mxu0
        %v1956 = vadd.f32 %v1867, %v1955
        %v1957 = vpop.f32.mrb[0].mxu0
        %v1958 = vadd.f32 %v1869, %v1957
        %1959 = vdwg.mxu0
        %v1960 = vand.u32 %v624, 4294901760
        %1961 = vmatprep.subr.mxu0 %v1960
        %v1962 = vand.u32 %v623, 4294901760
        %1963 = vmatpush1.msra.mxu0 %v1962
        %v1964 = vand.u32 %v626, 4294901760
        %1965 = vmatprep.subr.mxu0 %v1964
        %v1966 = vand.u32 %v625, 4294901760
        %1967 = vmatpush1.msra.mxu0 %v1966
        %v1968 = vand.u32 %v628, 4294901760
        %1969 = vmatprep.subr.mxu0 %v1968
        %v1970 = vand.u32 %v627, 4294901760
        %1971 = vmatpush1.msra.mxu0 %v1970
        %v1972 = vand.u32 %v630, 4294901760
        %1973 = vmatprep.subr.mxu0 %v1972
        %v1974 = vand.u32 %v629, 4294901760
        %1975 = vmatpush1.msra.mxu0 %v1974
        %1976 = vmatprep.subr.mxu0 0.0
        %1977 = vmatpush1.msra.mxu0 0.0
        %1978 = vmatprep.subr.mxu0 0.0
        %1979 = vmatpush1.msra.mxu0 0.0
        %1980 = vmatprep.subr.mxu0 0.0
        %1981 = vmatpush1.msra.mxu0 0.0
        %1982 = vmatprep.subr.mxu0 0.0
        %1983 = vmatpush1.msra.mxu0 0.0
        %1984 = vmatprep.subr.mxu0 0.0
        %1985 = vmatpush1.msra.mxu0 0.0
        %1986 = vmatprep.subr.mxu0 0.0
        %1987 = vmatpush1.msra.mxu0 0.0
        %1988 = vmatprep.subr.mxu0 0.0
        %1989 = vmatpush1.msra.mxu0 0.0
        %1990 = vmatprep.subr.mxu0 0.0
        %1991 = vmatpush1.msra.mxu0 0.0
        %1992 = vmatprep.subr.mxu0 0.0
        %1993 = vmatpush1.msra.mxu0 0.0
        %1994 = vmatprep.subr.mxu0 0.0
        %1995 = vmatpush1.msra.mxu0 0.0
        %1996 = vmatprep.subr.mxu0 0.0
        %1997 = vmatpush1.msra.mxu0 0.0
        %1998 = vmatprep.subr.mxu0 0.0
        %1999 = vmatpush1.msra.mxu0 0.0
        %2000 = vmatprep.subr.mxu0 0.0
        %2001 = vmatpush1.msra.mxu0 0.0
        %2002 = vmatprep.subr.mxu0 0.0
        %2003 = vmatpush1.msra.mxu0 0.0
        %2004 = vmatprep.subr.mxu0 0.0
        %2005 = vmatpush1.msra.mxu0 0.0
        %2006 = vmatprep.subr.mxu0 0.0
        %2007 = vmatpush1.msra.mxu0 0.0
        %2008 = vmatprep.subr.mxu0 0.0
        %2009 = vmatpush1.msra.mxu0 0.0
        %2010 = vmatprep.subr.mxu0 0.0
        %2011 = vmatpush1.msra.mxu0 0.0
        %2012 = vmatprep.subr.mxu0 0.0
        %2013 = vmatpush1.msra.mxu0 0.0
        %2014 = vmatprep.subr.mxu0 0.0
        %2015 = vmatpush1.msra.mxu0 0.0
        %2016 = vmatprep.subr.mxu0 0.0
        %2017 = vmatpush1.msra.mxu0 0.0
        %2018 = vmatprep.subr.mxu0 0.0
        %2019 = vmatpush1.msra.mxu0 0.0
        %2020 = vmatprep.subr.mxu0 0.0
        %2021 = vmatpush1.msra.mxu0 0.0
        %2022 = vmatprep.subr.mxu0 0.0
        %2023 = vmatpush1.msra.mxu0 0.0
        %2024 = vmatprep.subr.mxu0 0.0
        %2025 = vmatpush1.msra.mxu0 0.0
        %2026 = vmatprep.subr.mxu0 0.0
        %2027 = vmatpush1.msra.mxu0 0.0
        %2028 = vmatprep.subr.mxu0 0.0
        %2029 = vmatpush1.msra.mxu0 0.0
        %2030 = vmatprep.subr.mxu0 0.0
        %2031 = vmatpush1.msra.mxu0 0.0
        %2032 = vmatprep.mubr.f32.mxu0 0.0
        %v2033 = vand.u32 %v1673, 4294901760
        %v2034 = vsub.f32 %v1673, %v2033
        %v2035 = vand.u32 %v2034, 4294901760
        %2036 = vmatmul.mubr.f32.gmra.mrb[0].mxu0 %v2035
        %v2037 = vpop.f32.mrb[0].mxu0
        %v2038 = vadd.f32 %v1956, %v2037
        %v2039 = vpop.f32.mrb[0].mxu0
        %v2040 = vadd.f32 %v1958, %v2039
        %2041 = vdwg.mxu0
        %v2042 = vand.u32 %v624, 4294901760
        %v2043 = vsub.f32 %v624, %v2042
        %v2044 = vand.u32 %v2043, 4294901760
        %2045 = vmatprep.subr.mxu0 %v2044
        %v2046 = vand.u32 %v623, 4294901760
        %v2047 = vsub.f32 %v623, %v2046
        %v2048 = vand.u32 %v2047, 4294901760
        %2049 = vmatpush1.msra.mxu0 %v2048
        %v2050 = vand.u32 %v626, 4294901760
        %v2051 = vsub.f32 %v626, %v2050
        %v2052 = vand.u32 %v2051, 4294901760
        %2053 = vmatprep.subr.mxu0 %v2052
        %v2054 = vand.u32 %v625, 4294901760
        %v2055 = vsub.f32 %v625, %v2054
        %v2056 = vand.u32 %v2055, 4294901760
        %2057 = vmatpush1.msra.mxu0 %v2056
        %v2058 = vand.u32 %v628, 4294901760
        %v2059 = vsub.f32 %v628, %v2058
        %v2060 = vand.u32 %v2059, 4294901760
        %2061 = vmatprep.subr.mxu0 %v2060
        %v2062 = vand.u32 %v627, 4294901760
        %v2063 = vsub.f32 %v627, %v2062
        %v2064 = vand.u32 %v2063, 4294901760
        %2065 = vmatpush1.msra.mxu0 %v2064
        %v2066 = vand.u32 %v630, 4294901760
        %v2067 = vsub.f32 %v630, %v2066
        %v2068 = vand.u32 %v2067, 4294901760
        %2069 = vmatprep.subr.mxu0 %v2068
        %v2070 = vand.u32 %v629, 4294901760
        %v2071 = vsub.f32 %v629, %v2070
        %v2072 = vand.u32 %v2071, 4294901760
        %2073 = vmatpush1.msra.mxu0 %v2072
        %2074 = vmatprep.subr.mxu0 0.0
        %2075 = vmatpush1.msra.mxu0 0.0
        %2076 = vmatprep.subr.mxu0 0.0
        %2077 = vmatpush1.msra.mxu0 0.0
        %2078 = vmatprep.subr.mxu0 0.0
        %2079 = vmatpush1.msra.mxu0 0.0
        %2080 = vmatprep.subr.mxu0 0.0
        %2081 = vmatpush1.msra.mxu0 0.0
        %2082 = vmatprep.subr.mxu0 0.0
        %2083 = vmatpush1.msra.mxu0 0.0
        %2084 = vmatprep.subr.mxu0 0.0
        %2085 = vmatpush1.msra.mxu0 0.0
        %2086 = vmatprep.subr.mxu0 0.0
        %2087 = vmatpush1.msra.mxu0 0.0
        %2088 = vmatprep.subr.mxu0 0.0
        %2089 = vmatpush1.msra.mxu0 0.0
        %2090 = vmatprep.subr.mxu0 0.0
        %2091 = vmatpush1.msra.mxu0 0.0
        %2092 = vmatprep.subr.mxu0 0.0
        %2093 = vmatpush1.msra.mxu0 0.0
        %2094 = vmatprep.subr.mxu0 0.0
        %2095 = vmatpush1.msra.mxu0 0.0
        %2096 = vmatprep.subr.mxu0 0.0
        %2097 = vmatpush1.msra.mxu0 0.0
        %2098 = vmatprep.subr.mxu0 0.0
        %2099 = vmatpush1.msra.mxu0 0.0
        %2100 = vmatprep.subr.mxu0 0.0
        %2101 = vmatpush1.msra.mxu0 0.0
        %2102 = vmatprep.subr.mxu0 0.0
        %2103 = vmatpush1.msra.mxu0 0.0
        %2104 = vmatprep.subr.mxu0 0.0
        %2105 = vmatpush1.msra.mxu0 0.0
        %2106 = vmatprep.subr.mxu0 0.0
        %2107 = vmatpush1.msra.mxu0 0.0
        %2108 = vmatprep.subr.mxu0 0.0
        %2109 = vmatpush1.msra.mxu0 0.0
        %2110 = vmatprep.subr.mxu0 0.0
        %2111 = vmatpush1.msra.mxu0 0.0
        %2112 = vmatprep.subr.mxu0 0.0
        %2113 = vmatpush1.msra.mxu0 0.0
        %2114 = vmatprep.subr.mxu0 0.0
        %2115 = vmatpush1.msra.mxu0 0.0
        %2116 = vmatprep.subr.mxu0 0.0
        %2117 = vmatpush1.msra.mxu0 0.0
        %2118 = vmatprep.subr.mxu0 0.0
        %2119 = vmatpush1.msra.mxu0 0.0
        %2120 = vmatprep.subr.mxu0 0.0
        %2121 = vmatpush1.msra.mxu0 0.0
        %2122 = vmatprep.subr.mxu0 0.0
        %2123 = vmatpush1.msra.mxu0 0.0
        %2124 = vmatprep.subr.mxu0 0.0
        %2125 = vmatpush1.msra.mxu0 0.0
        %2126 = vmatprep.subr.mxu0 0.0
        %2127 = vmatpush1.msra.mxu0 0.0
        %2128 = vmatprep.subr.mxu0 0.0
        %2129 = vmatpush1.msra.mxu0 0.0
        %2130 = vmatprep.mubr.f32.mxu0 0.0
        %v2131 = vand.u32 %v1673, 4294901760
        %2132 = vmatmul.mubr.f32.gmra.mrb[0].mxu0 %v2131
        %v2133 = vpop.f32.mrb[0].mxu0
        %v2134 = vadd.f32 %v2038, %v2133
        %v2135 = vpop.f32.mrb[0].mxu0
        %v2136 = vadd.f32 %v2040, %v2135
        %2137 = vdwg.mxu0
        %v2138 = vand.u32 %v624, 4294901760
        %2139 = vmatprep.subr.mxu0 %v2138
        %v2140 = vand.u32 %v623, 4294901760
        %2141 = vmatpush1.msra.mxu0 %v2140
        %v2142 = vand.u32 %v626, 4294901760
        %2143 = vmatprep.subr.mxu0 %v2142
        %v2144 = vand.u32 %v625, 4294901760
        %2145 = vmatpush1.msra.mxu0 %v2144
        %v2146 = vand.u32 %v628, 4294901760
        %2147 = vmatprep.subr.mxu0 %v2146
        %v2148 = vand.u32 %v627, 4294901760
        %2149 = vmatpush1.msra.mxu0 %v2148
        %v2150 = vand.u32 %v630, 4294901760
        %2151 = vmatprep.subr.mxu0 %v2150
        %v2152 = vand.u32 %v629, 4294901760
        %2153 = vmatpush1.msra.mxu0 %v2152
        %2154 = vmatprep.subr.mxu0 0.0
        %2155 = vmatpush1.msra.mxu0 0.0
        %2156 = vmatprep.subr.mxu0 0.0
        %2157 = vmatpush1.msra.mxu0 0.0
        %2158 = vmatprep.subr.mxu0 0.0
        %2159 = vmatpush1.msra.mxu0 0.0
        %2160 = vmatprep.subr.mxu0 0.0
        %2161 = vmatpush1.msra.mxu0 0.0
        %2162 = vmatprep.subr.mxu0 0.0
        %2163 = vmatpush1.msra.mxu0 0.0
        %2164 = vmatprep.subr.mxu0 0.0
        %2165 = vmatpush1.msra.mxu0 0.0
        %2166 = vmatprep.subr.mxu0 0.0
        %2167 = vmatpush1.msra.mxu0 0.0
        %2168 = vmatprep.subr.mxu0 0.0
        %2169 = vmatpush1.msra.mxu0 0.0
        %2170 = vmatprep.subr.mxu0 0.0
        %2171 = vmatpush1.msra.mxu0 0.0
        %2172 = vmatprep.subr.mxu0 0.0
        %2173 = vmatpush1.msra.mxu0 0.0
        %2174 = vmatprep.subr.mxu0 0.0
        %2175 = vmatpush1.msra.mxu0 0.0
        %2176 = vmatprep.subr.mxu0 0.0
        %2177 = vmatpush1.msra.mxu0 0.0
        %2178 = vmatprep.subr.mxu0 0.0
        %2179 = vmatpush1.msra.mxu0 0.0
        %2180 = vmatprep.subr.mxu0 0.0
        %2181 = vmatpush1.msra.mxu0 0.0
        %2182 = vmatprep.subr.mxu0 0.0
        %2183 = vmatpush1.msra.mxu0 0.0
        %2184 = vmatprep.subr.mxu0 0.0
        %2185 = vmatpush1.msra.mxu0 0.0
        %2186 = vmatprep.subr.mxu0 0.0
        %2187 = vmatpush1.msra.mxu0 0.0
        %2188 = vmatprep.subr.mxu0 0.0
        %2189 = vmatpush1.msra.mxu0 0.0
        %2190 = vmatprep.subr.mxu0 0.0
        %2191 = vmatpush1.msra.mxu0 0.0
        %2192 = vmatprep.subr.mxu0 0.0
        %2193 = vmatpush1.msra.mxu0 0.0
        %2194 = vmatprep.subr.mxu0 0.0
        %2195 = vmatpush1.msra.mxu0 0.0
        %2196 = vmatprep.subr.mxu0 0.0
        %2197 = vmatpush1.msra.mxu0 0.0
        %2198 = vmatprep.subr.mxu0 0.0
        %2199 = vmatpush1.msra.mxu0 0.0
        %2200 = vmatprep.subr.mxu0 0.0
        %2201 = vmatpush1.msra.mxu0 0.0
        %2202 = vmatprep.subr.mxu0 0.0
        %2203 = vmatpush1.msra.mxu0 0.0
        %2204 = vmatprep.subr.mxu0 0.0
        %2205 = vmatpush1.msra.mxu0 0.0
        %2206 = vmatprep.subr.mxu0 0.0
        %2207 = vmatpush1.msra.mxu0 0.0
        %2208 = vmatprep.subr.mxu0 0.0
        %2209 = vmatpush1.msra.mxu0 0.0
        %2210 = vmatprep.mubr.f32.mxu0 0.0
        %v2211 = vand.u32 %v1673, 4294901760
        %2212 = vmatmul.mubr.f32.gmra.mrb[0].mxu0 %v2211
        %v2213 = vpop.f32.mrb[0].mxu0
        %v2214 = vadd.f32 %v2134, %v2213
        %v2215 = vpop.f32.mrb[0].mxu0
        %v2216 = vadd.f32 %v2136, %v2215
        %2217 = vdwg.mxu0
        %v2218 = vmax.f32 %v2214, 0.0
        %v2219 = vmax.f32 %v2216, 0.0
        %v2220 = vld [vmem:[%s9] sm:$0xff]
        %v2221 = vld [vmem:[%s10] sm:$0xff]
        %2223 = vset.pattern.permute.xlu0 0
        %2224 = vperm.xlu0 %2223, %v2221
        %v2225 = vpop.permute.xlu0 %2224
        %v2228 = vsel %vm1194, %v2220, 0
        %v2230 = vand.u32 %v2219, 4294901760
        %2231 = vmatprep.subr.mxu0 %v2230
        %v2232 = vand.u32 %v2218, 4294901760
        %2233 = vmatpush1.msra.mxu0 %v2232
        %2234 = vmatprep.subr.mxu0 0.0
        %2235 = vmatpush1.msra.mxu0 0.0
        %2236 = vmatprep.subr.mxu0 0.0
        %2237 = vmatpush1.msra.mxu0 0.0
        %2238 = vmatprep.subr.mxu0 0.0
        %2239 = vmatpush1.msra.mxu0 0.0
        %2240 = vmatprep.subr.mxu0 0.0
        %2241 = vmatpush1.msra.mxu0 0.0
        %2242 = vmatprep.subr.mxu0 0.0
        %2243 = vmatpush1.msra.mxu0 0.0
        %2244 = vmatprep.subr.mxu0 0.0
        %2245 = vmatpush1.msra.mxu0 0.0
        %2246 = vmatprep.subr.mxu0 0.0
        %2247 = vmatpush1.msra.mxu0 0.0
        %2248 = vmatprep.subr.mxu0 0.0
        %2249 = vmatpush1.msra.mxu0 0.0
        %2250 = vmatprep.subr.mxu0 0.0
        %2251 = vmatpush1.msra.mxu0 0.0
        %2252 = vmatprep.subr.mxu0 0.0
        %2253 = vmatpush1.msra.mxu0 0.0
        %2254 = vmatprep.subr.mxu0 0.0
        %2255 = vmatpush1.msra.mxu0 0.0
        %2256 = vmatprep.subr.mxu0 0.0
        %2257 = vmatpush1.msra.mxu0 0.0
        %2258 = vmatprep.subr.mxu0 0.0
        %2259 = vmatpush1.msra.mxu0 0.0
        %2260 = vmatprep.subr.mxu0 0.0
        %2261 = vmatpush1.msra.mxu0 0.0
        %2262 = vmatprep.subr.mxu0 0.0
        %2263 = vmatpush1.msra.mxu0 0.0
        %2264 = vmatprep.subr.mxu0 0.0
        %2265 = vmatpush1.msra.mxu0 0.0
        %2266 = vmatprep.subr.mxu0 0.0
        %2267 = vmatpush1.msra.mxu0 0.0
        %2268 = vmatprep.subr.mxu0 0.0
        %2269 = vmatpush1.msra.mxu0 0.0
        %2270 = vmatprep.subr.mxu0 0.0
        %2271 = vmatpush1.msra.mxu0 0.0
        %2272 = vmatprep.subr.mxu0 0.0
        %2273 = vmatpush1.msra.mxu0 0.0
        %2274 = vmatprep.subr.mxu0 0.0
        %2275 = vmatpush1.msra.mxu0 0.0
        %2276 = vmatprep.subr.mxu0 0.0
        %2277 = vmatpush1.msra.mxu0 0.0
        %2278 = vmatprep.subr.mxu0 0.0
        %2279 = vmatpush1.msra.mxu0 0.0
        %2280 = vmatprep.subr.mxu0 0.0
        %2281 = vmatpush1.msra.mxu0 0.0
        %2282 = vmatprep.subr.mxu0 0.0
        %2283 = vmatpush1.msra.mxu0 0.0
        %2284 = vmatprep.subr.mxu0 0.0
        %2285 = vmatpush1.msra.mxu0 0.0
        %2286 = vmatprep.subr.mxu0 0.0
        %2287 = vmatpush1.msra.mxu0 0.0
        %2288 = vmatprep.subr.mxu0 0.0
        %2289 = vmatpush1.msra.mxu0 0.0
        %2290 = vmatprep.subr.mxu0 0.0
        %2291 = vmatpush1.msra.mxu0 0.0
        %2292 = vmatprep.subr.mxu0 0.0
        %2293 = vmatpush1.msra.mxu0 0.0
        %2294 = vmatprep.subr.mxu0 0.0
        %2295 = vmatpush1.msra.mxu0 0.0
        %2296 = vmatprep.mubr.f32.mxu0 0.0
        %v2297 = vand.u32 %v2228, 4294901760
        %v2298 = vsub.f32 %v2228, %v2297
        %v2299 = vand.u32 %v2298, 4294901760
        %v2300 = vsub.f32 %v2298, %v2299
        %v2301 = vand.u32 %v2300, 4294901760
        %2302 = vmatmul.mubr.f32.gmra.mrb[0].mxu0 %v2301
        %v2303 = vpop.f32.mrb[0].mxu0
        %v2304 = vadd.f32 %v2225, %v2303
        %v2305 = vpop.f32.mrb[0].mxu0
        %v2306 = vadd.f32 %v2225, %v2305
        %2307 = vdwg.mxu0
        %v2308 = vand.u32 %v2219, 4294901760
        %v2309 = vsub.f32 %v2219, %v2308
        %v2310 = vand.u32 %v2309, 4294901760
        %v2311 = vsub.f32 %v2309, %v2310
        %v2312 = vand.u32 %v2311, 4294901760
        %2313 = vmatprep.subr.mxu0 %v2312
        %v2314 = vand.u32 %v2218, 4294901760
        %v2315 = vsub.f32 %v2218, %v2314
        %v2316 = vand.u32 %v2315, 4294901760
        %v2317 = vsub.f32 %v2315, %v2316
        %v2318 = vand.u32 %v2317, 4294901760
        %2319 = vmatpush1.msra.mxu0 %v2318
        %2320 = vmatprep.subr.mxu0 0.0
        %2321 = vmatpush1.msra.mxu0 0.0
        %2322 = vmatprep.subr.mxu0 0.0
        %2323 = vmatpush1.msra.mxu0 0.0
        %2324 = vmatprep.subr.mxu0 0.0
        %2325 = vmatpush1.msra.mxu0 0.0
        %2326 = vmatprep.subr.mxu0 0.0
        %2327 = vmatpush1.msra.mxu0 0.0
        %2328 = vmatprep.subr.mxu0 0.0
        %2329 = vmatpush1.msra.mxu0 0.0
        %2330 = vmatprep.subr.mxu0 0.0
        %2331 = vmatpush1.msra.mxu0 0.0
        %2332 = vmatprep.subr.mxu0 0.0
        %2333 = vmatpush1.msra.mxu0 0.0
        %2334 = vmatprep.subr.mxu0 0.0
        %2335 = vmatpush1.msra.mxu0 0.0
        %2336 = vmatprep.subr.mxu0 0.0
        %2337 = vmatpush1.msra.mxu0 0.0
        %2338 = vmatprep.subr.mxu0 0.0
        %2339 = vmatpush1.msra.mxu0 0.0
        %2340 = vmatprep.subr.mxu0 0.0
        %2341 = vmatpush1.msra.mxu0 0.0
        %2342 = vmatprep.subr.mxu0 0.0
        %2343 = vmatpush1.msra.mxu0 0.0
        %2344 = vmatprep.subr.mxu0 0.0
        %2345 = vmatpush1.msra.mxu0 0.0
        %2346 = vmatprep.subr.mxu0 0.0
        %2347 = vmatpush1.msra.mxu0 0.0
        %2348 = vmatprep.subr.mxu0 0.0
        %2349 = vmatpush1.msra.mxu0 0.0
        %2350 = vmatprep.subr.mxu0 0.0
        %2351 = vmatpush1.msra.mxu0 0.0
        %2352 = vmatprep.subr.mxu0 0.0
        %2353 = vmatpush1.msra.mxu0 0.0
        %2354 = vmatprep.subr.mxu0 0.0
        %2355 = vmatpush1.msra.mxu0 0.0
        %2356 = vmatprep.subr.mxu0 0.0
        %2357 = vmatpush1.msra.mxu0 0.0
        %2358 = vmatprep.subr.mxu0 0.0
        %2359 = vmatpush1.msra.mxu0 0.0
        %2360 = vmatprep.subr.mxu0 0.0
        %2361 = vmatpush1.msra.mxu0 0.0
        %2362 = vmatprep.subr.mxu0 0.0
        %2363 = vmatpush1.msra.mxu0 0.0
        %2364 = vmatprep.subr.mxu0 0.0
        %2365 = vmatpush1.msra.mxu0 0.0
        %2366 = vmatprep.subr.mxu0 0.0
        %2367 = vmatpush1.msra.mxu0 0.0
        %2368 = vmatprep.subr.mxu0 0.0
        %2369 = vmatpush1.msra.mxu0 0.0
        %2370 = vmatprep.subr.mxu0 0.0
        %2371 = vmatpush1.msra.mxu0 0.0
        %2372 = vmatprep.subr.mxu0 0.0
        %2373 = vmatpush1.msra.mxu0 0.0
        %2374 = vmatprep.subr.mxu0 0.0
        %2375 = vmatpush1.msra.mxu0 0.0
        %2376 = vmatprep.subr.mxu0 0.0
        %2377 = vmatpush1.msra.mxu0 0.0
        %2378 = vmatprep.subr.mxu0 0.0
        %2379 = vmatpush1.msra.mxu0 0.0
        %2380 = vmatprep.subr.mxu0 0.0
        %2381 = vmatpush1.msra.mxu0 0.0
        %2382 = vmatprep.mubr.f32.mxu0 0.0
        %v2383 = vand.u32 %v2228, 4294901760
        %2384 = vmatmul.mubr.f32.gmra.mrb[0].mxu0 %v2383
        %v2385 = vpop.f32.mrb[0].mxu0
        %v2386 = vadd.f32 %v2304, %v2385
        %v2387 = vpop.f32.mrb[0].mxu0
        %v2388 = vadd.f32 %v2306, %v2387
        %2389 = vdwg.mxu0
        %v2390 = vand.u32 %v2219, 4294901760
        %v2391 = vsub.f32 %v2219, %v2390
        %2392 = vmatprep.subr.mxu0 %v2391
        %v2393 = vand.u32 %v2218, 4294901760
        %v2394 = vsub.f32 %v2218, %v2393
        %2395 = vmatpush1.msra.mxu0 %v2394
        %2396 = vmatprep.subr.mxu0 0.0
        %2397 = vmatpush1.msra.mxu0 0.0
        %2398 = vmatprep.subr.mxu0 0.0
        %2399 = vmatpush1.msra.mxu0 0.0
        %2400 = vmatprep.subr.mxu0 0.0
        %2401 = vmatpush1.msra.mxu0 0.0
        %2402 = vmatprep.subr.mxu0 0.0
        %2403 = vmatpush1.msra.mxu0 0.0
        %2404 = vmatprep.subr.mxu0 0.0
        %2405 = vmatpush1.msra.mxu0 0.0
        %2406 = vmatprep.subr.mxu0 0.0
        %2407 = vmatpush1.msra.mxu0 0.0
        %2408 = vmatprep.subr.mxu0 0.0
        %2409 = vmatpush1.msra.mxu0 0.0
        %2410 = vmatprep.subr.mxu0 0.0
        %2411 = vmatpush1.msra.mxu0 0.0
        %2412 = vmatprep.subr.mxu0 0.0
        %2413 = vmatpush1.msra.mxu0 0.0
        %2414 = vmatprep.subr.mxu0 0.0
        %2415 = vmatpush1.msra.mxu0 0.0
        %2416 = vmatprep.subr.mxu0 0.0
        %2417 = vmatpush1.msra.mxu0 0.0
        %2418 = vmatprep.subr.mxu0 0.0
        %2419 = vmatpush1.msra.mxu0 0.0
        %2420 = vmatprep.subr.mxu0 0.0
        %2421 = vmatpush1.msra.mxu0 0.0
        %2422 = vmatprep.subr.mxu0 0.0
        %2423 = vmatpush1.msra.mxu0 0.0
        %2424 = vmatprep.subr.mxu0 0.0
        %2425 = vmatpush1.msra.mxu0 0.0
        %2426 = vmatprep.subr.mxu0 0.0
        %2427 = vmatpush1.msra.mxu0 0.0
        %2428 = vmatprep.subr.mxu0 0.0
        %2429 = vmatpush1.msra.mxu0 0.0
        %2430 = vmatprep.subr.mxu0 0.0
        %2431 = vmatpush1.msra.mxu0 0.0
        %2432 = vmatprep.subr.mxu0 0.0
        %2433 = vmatpush1.msra.mxu0 0.0
        %2434 = vmatprep.subr.mxu0 0.0
        %2435 = vmatpush1.msra.mxu0 0.0
        %2436 = vmatprep.subr.mxu0 0.0
        %2437 = vmatpush1.msra.mxu0 0.0
        %2438 = vmatprep.subr.mxu0 0.0
        %2439 = vmatpush1.msra.mxu0 0.0
        %2440 = vmatprep.subr.mxu0 0.0
        %2441 = vmatpush1.msra.mxu0 0.0
        %2442 = vmatprep.subr.mxu0 0.0
        %2443 = vmatpush1.msra.mxu0 0.0
        %2444 = vmatprep.subr.mxu0 0.0
        %2445 = vmatpush1.msra.mxu0 0.0
        %2446 = vmatprep.subr.mxu0 0.0
        %2447 = vmatpush1.msra.mxu0 0.0
        %2448 = vmatprep.subr.mxu0 0.0
        %2449 = vmatpush1.msra.mxu0 0.0
        %2450 = vmatprep.subr.mxu0 0.0
        %2451 = vmatpush1.msra.mxu0 0.0
        %2452 = vmatprep.subr.mxu0 0.0
        %2453 = vmatpush1.msra.mxu0 0.0
        %2454 = vmatprep.subr.mxu0 0.0
        %2455 = vmatpush1.msra.mxu0 0.0
        %2456 = vmatprep.subr.mxu0 0.0
        %2457 = vmatpush1.msra.mxu0 0.0
        %2458 = vmatprep.mubr.f32.mxu0 0.0
        %v2459 = vand.u32 %v2228, 4294901760
        %v2460 = vsub.f32 %v2228, %v2459
        %2461 = vmatmul.mubr.f32.gmra.mrb[0].mxu0 %v2460
        %v2462 = vpop.f32.mrb[0].mxu0
        %v2463 = vadd.f32 %v2386, %v2462
        %v2464 = vpop.f32.mrb[0].mxu0
        %v2465 = vadd.f32 %v2388, %v2464
        %2466 = vdwg.mxu0
        %v2467 = vand.u32 %v2219, 4294901760
        %2468 = vmatprep.subr.mxu0 %v2467
        %v2469 = vand.u32 %v2218, 4294901760
        %2470 = vmatpush1.msra.mxu0 %v2469
        %2471 = vmatprep.subr.mxu0 0.0
        %2472 = vmatpush1.msra.mxu0 0.0
        %2473 = vmatprep.subr.mxu0 0.0
        %2474 = vmatpush1.msra.mxu0 0.0
        %2475 = vmatprep.subr.mxu0 0.0
        %2476 = vmatpush1.msra.mxu0 0.0
        %2477 = vmatprep.subr.mxu0 0.0
        %2478 = vmatpush1.msra.mxu0 0.0
        %2479 = vmatprep.subr.mxu0 0.0
        %2480 = vmatpush1.msra.mxu0 0.0
        %2481 = vmatprep.subr.mxu0 0.0
        %2482 = vmatpush1.msra.mxu0 0.0
        %2483 = vmatprep.subr.mxu0 0.0
        %2484 = vmatpush1.msra.mxu0 0.0
        %2485 = vmatprep.subr.mxu0 0.0
        %2486 = vmatpush1.msra.mxu0 0.0
        %2487 = vmatprep.subr.mxu0 0.0
        %2488 = vmatpush1.msra.mxu0 0.0
        %2489 = vmatprep.subr.mxu0 0.0
        %2490 = vmatpush1.msra.mxu0 0.0
        %2491 = vmatprep.subr.mxu0 0.0
        %2492 = vmatpush1.msra.mxu0 0.0
        %2493 = vmatprep.subr.mxu0 0.0
        %2494 = vmatpush1.msra.mxu0 0.0
        %2495 = vmatprep.subr.mxu0 0.0
        %2496 = vmatpush1.msra.mxu0 0.0
        %2497 = vmatprep.subr.mxu0 0.0
        %2498 = vmatpush1.msra.mxu0 0.0
        %2499 = vmatprep.subr.mxu0 0.0
        %2500 = vmatpush1.msra.mxu0 0.0
        %2501 = vmatprep.subr.mxu0 0.0
        %2502 = vmatpush1.msra.mxu0 0.0
        %2503 = vmatprep.subr.mxu0 0.0
        %2504 = vmatpush1.msra.mxu0 0.0
        %2505 = vmatprep.subr.mxu0 0.0
        %2506 = vmatpush1.msra.mxu0 0.0
        %2507 = vmatprep.subr.mxu0 0.0
        %2508 = vmatpush1.msra.mxu0 0.0
        %2509 = vmatprep.subr.mxu0 0.0
        %2510 = vmatpush1.msra.mxu0 0.0
        %2511 = vmatprep.subr.mxu0 0.0
        %2512 = vmatpush1.msra.mxu0 0.0
        %2513 = vmatprep.subr.mxu0 0.0
        %2514 = vmatpush1.msra.mxu0 0.0
        %2515 = vmatprep.subr.mxu0 0.0
        %2516 = vmatpush1.msra.mxu0 0.0
        %2517 = vmatprep.subr.mxu0 0.0
        %2518 = vmatpush1.msra.mxu0 0.0
        %2519 = vmatprep.subr.mxu0 0.0
        %2520 = vmatpush1.msra.mxu0 0.0
        %2521 = vmatprep.subr.mxu0 0.0
        %2522 = vmatpush1.msra.mxu0 0.0
        %2523 = vmatprep.subr.mxu0 0.0
        %2524 = vmatpush1.msra.mxu0 0.0
        %2525 = vmatprep.subr.mxu0 0.0
        %2526 = vmatpush1.msra.mxu0 0.0
        %2527 = vmatprep.subr.mxu0 0.0
        %2528 = vmatpush1.msra.mxu0 0.0
        %2529 = vmatprep.subr.mxu0 0.0
        %2530 = vmatpush1.msra.mxu0 0.0
        %2531 = vmatprep.subr.mxu0 0.0
        %2532 = vmatpush1.msra.mxu0 0.0
        %2533 = vmatprep.mubr.f32.mxu0 0.0
        %v2534 = vand.u32 %v2228, 4294901760
        %v2535 = vsub.f32 %v2228, %v2534
        %v2536 = vand.u32 %v2535, 4294901760
        %2537 = vmatmul.mubr.f32.gmra.mrb[0].mxu0 %v2536
        %v2538 = vpop.f32.mrb[0].mxu0
        %v2539 = vadd.f32 %v2463, %v2538
        %v2540 = vpop.f32.mrb[0].mxu0
        %v2541 = vadd.f32 %v2465, %v2540
        %2542 = vdwg.mxu0
        %v2543 = vand.u32 %v2219, 4294901760
        %v2544 = vsub.f32 %v2219, %v2543
        %v2545 = vand.u32 %v2544, 4294901760
        %2546 = vmatprep.subr.mxu0 %v2545
        %v2547 = vand.u32 %v2218, 4294901760
        %v2548 = vsub.f32 %v2218, %v2547
        %v2549 = vand.u32 %v2548, 4294901760
        %2550 = vmatpush1.msra.mxu0 %v2549
        %2551 = vmatprep.subr.mxu0 0.0
        %2552 = vmatpush1.msra.mxu0 0.0
        %2553 = vmatprep.subr.mxu0 0.0
        %2554 = vmatpush1.msra.mxu0 0.0
        %2555 = vmatprep.subr.mxu0 0.0
        %2556 = vmatpush1.msra.mxu0 0.0
        %2557 = vmatprep.subr.mxu0 0.0
        %2558 = vmatpush1.msra.mxu0 0.0
        %2559 = vmatprep.subr.mxu0 0.0
        %2560 = vmatpush1.msra.mxu0 0.0
        %2561 = vmatprep.subr.mxu0 0.0
        %2562 = vmatpush1.msra.mxu0 0.0
        %2563 = vmatprep.subr.mxu0 0.0
        %2564 = vmatpush1.msra.mxu0 0.0
        %2565 = vmatprep.subr.mxu0 0.0
        %2566 = vmatpush1.msra.mxu0 0.0
        %2567 = vmatprep.subr.mxu0 0.0
        %2568 = vmatpush1.msra.mxu0 0.0
        %2569 = vmatprep.subr.mxu0 0.0
        %2570 = vmatpush1.msra.mxu0 0.0
        %2571 = vmatprep.subr.mxu0 0.0
        %2572 = vmatpush1.msra.mxu0 0.0
        %2573 = vmatprep.subr.mxu0 0.0
        %2574 = vmatpush1.msra.mxu0 0.0
        %2575 = vmatprep.subr.mxu0 0.0
        %2576 = vmatpush1.msra.mxu0 0.0
        %2577 = vmatprep.subr.mxu0 0.0
        %2578 = vmatpush1.msra.mxu0 0.0
        %2579 = vmatprep.subr.mxu0 0.0
        %2580 = vmatpush1.msra.mxu0 0.0
        %2581 = vmatprep.subr.mxu0 0.0
        %2582 = vmatpush1.msra.mxu0 0.0
        %2583 = vmatprep.subr.mxu0 0.0
        %2584 = vmatpush1.msra.mxu0 0.0
        %2585 = vmatprep.subr.mxu0 0.0
        %2586 = vmatpush1.msra.mxu0 0.0
        %2587 = vmatprep.subr.mxu0 0.0
        %2588 = vmatpush1.msra.mxu0 0.0
        %2589 = vmatprep.subr.mxu0 0.0
        %2590 = vmatpush1.msra.mxu0 0.0
        %2591 = vmatprep.subr.mxu0 0.0
        %2592 = vmatpush1.msra.mxu0 0.0
        %2593 = vmatprep.subr.mxu0 0.0
        %2594 = vmatpush1.msra.mxu0 0.0
        %2595 = vmatprep.subr.mxu0 0.0
        %2596 = vmatpush1.msra.mxu0 0.0
        %2597 = vmatprep.subr.mxu0 0.0
        %2598 = vmatpush1.msra.mxu0 0.0
        %2599 = vmatprep.subr.mxu0 0.0
        %2600 = vmatpush1.msra.mxu0 0.0
        %2601 = vmatprep.subr.mxu0 0.0
        %2602 = vmatpush1.msra.mxu0 0.0
        %2603 = vmatprep.subr.mxu0 0.0
        %2604 = vmatpush1.msra.mxu0 0.0
        %2605 = vmatprep.subr.mxu0 0.0
        %2606 = vmatpush1.msra.mxu0 0.0
        %2607 = vmatprep.subr.mxu0 0.0
        %2608 = vmatpush1.msra.mxu0 0.0
        %2609 = vmatprep.subr.mxu0 0.0
        %2610 = vmatpush1.msra.mxu0 0.0
        %2611 = vmatprep.subr.mxu0 0.0
        %2612 = vmatpush1.msra.mxu0 0.0
        %2613 = vmatprep.mubr.f32.mxu0 0.0
        %v2614 = vand.u32 %v2228, 4294901760
        %2615 = vmatmul.mubr.f32.gmra.mrb[0].mxu0 %v2614
        %v2616 = vpop.f32.mrb[0].mxu0
        %v2617 = vadd.f32 %v2539, %v2616
        %v2618 = vpop.f32.mrb[0].mxu0
        %v2619 = vadd.f32 %v2541, %v2618
        %2620 = vdwg.mxu0
        %v2621 = vand.u32 %v2219, 4294901760
        %2622 = vmatprep.subr.mxu0 %v2621
        %v2623 = vand.u32 %v2218, 4294901760
        %2624 = vmatpush1.msra.mxu0 %v2623
        %2625 = vmatprep.subr.mxu0 0.0
        %2626 = vmatpush1.msra.mxu0 0.0
        %2627 = vmatprep.subr.mxu0 0.0
        %2628 = vmatpush1.msra.mxu0 0.0
        %2629 = vmatprep.subr.mxu0 0.0
        %2630 = vmatpush1.msra.mxu0 0.0
        %2631 = vmatprep.subr.mxu0 0.0
        %2632 = vmatpush1.msra.mxu0 0.0
        %2633 = vmatprep.subr.mxu0 0.0
        %2634 = vmatpush1.msra.mxu0 0.0
        %2635 = vmatprep.subr.mxu0 0.0
        %2636 = vmatpush1.msra.mxu0 0.0
        %2637 = vmatprep.subr.mxu0 0.0
        %2638 = vmatpush1.msra.mxu0 0.0
        %2639 = vmatprep.subr.mxu0 0.0
        %2640 = vmatpush1.msra.mxu0 0.0
        %2641 = vmatprep.subr.mxu0 0.0
        %2642 = vmatpush1.msra.mxu0 0.0
        %2643 = vmatprep.subr.mxu0 0.0
        %2644 = vmatpush1.msra.mxu0 0.0
        %2645 = vmatprep.subr.mxu0 0.0
        %2646 = vmatpush1.msra.mxu0 0.0
        %2647 = vmatprep.subr.mxu0 0.0
        %2648 = vmatpush1.msra.mxu0 0.0
        %2649 = vmatprep.subr.mxu0 0.0
        %2650 = vmatpush1.msra.mxu0 0.0
        %2651 = vmatprep.subr.mxu0 0.0
        %2652 = vmatpush1.msra.mxu0 0.0
        %2653 = vmatprep.subr.mxu0 0.0
        %2654 = vmatpush1.msra.mxu0 0.0
        %2655 = vmatprep.subr.mxu0 0.0
        %2656 = vmatpush1.msra.mxu0 0.0
        %2657 = vmatprep.subr.mxu0 0.0
        %2658 = vmatpush1.msra.mxu0 0.0
        %2659 = vmatprep.subr.mxu0 0.0
        %2660 = vmatpush1.msra.mxu0 0.0
        %2661 = vmatprep.subr.mxu0 0.0
        %2662 = vmatpush1.msra.mxu0 0.0
        %2663 = vmatprep.subr.mxu0 0.0
        %2664 = vmatpush1.msra.mxu0 0.0
        %2665 = vmatprep.subr.mxu0 0.0
        %2666 = vmatpush1.msra.mxu0 0.0
        %2667 = vmatprep.subr.mxu0 0.0
        %2668 = vmatpush1.msra.mxu0 0.0
        %2669 = vmatprep.subr.mxu0 0.0
        %2670 = vmatpush1.msra.mxu0 0.0
        %2671 = vmatprep.subr.mxu0 0.0
        %2672 = vmatpush1.msra.mxu0 0.0
        %2673 = vmatprep.subr.mxu0 0.0
        %2674 = vmatpush1.msra.mxu0 0.0
        %2675 = vmatprep.subr.mxu0 0.0
        %2676 = vmatpush1.msra.mxu0 0.0
        %2677 = vmatprep.subr.mxu0 0.0
        %2678 = vmatpush1.msra.mxu0 0.0
        %2679 = vmatprep.subr.mxu0 0.0
        %2680 = vmatpush1.msra.mxu0 0.0
        %2681 = vmatprep.subr.mxu0 0.0
        %2682 = vmatpush1.msra.mxu0 0.0
        %2683 = vmatprep.subr.mxu0 0.0
        %2684 = vmatpush1.msra.mxu0 0.0
        %2685 = vmatprep.subr.mxu0 0.0
        %2686 = vmatpush1.msra.mxu0 0.0
        %2687 = vmatprep.mubr.f32.mxu0 0.0
        %v2688 = vand.u32 %v2228, 4294901760
        %2689 = vmatmul.mubr.f32.gmra.mrb[0].mxu0 %v2688
        %v2690 = vpop.f32.mrb[0].mxu0
        %v2691 = vadd.f32 %v2617, %v2690
        %v2692 = vpop.f32.mrb[0].mxu0
        %v2693 = vadd.f32 %v2619, %v2692
        %2694 = vdwg.mxu0
        %v2695 = vmax.f32 %v2691, 0.0
        %v2696 = vmax.f32 %v2693, 0.0
        %v2697 = vld [vmem:[%s6] sm:$0xff]
        %v2698 = vld [vmem:[%s6 + $0x8] sm:$0xff]
        %v2699 = vld [vmem:[%s6 + $0x10] sm:$0xff]
        %v2700 = vld [vmem:[%s6 + $0x18] sm:$0xff]
        %v2702 = vsel %vm1194, %v2697, 0
        %v2705 = vsel %vm1194, %v2698, 0
        %v2708 = vsel %vm1194, %v2699, 0
        %v2711 = vsel %vm1194, %v2700, 0
        %v2713 = vand.u32 %v1664, 4294901760
        %2714 = vmatprep.subr.mxu0 %v2713
        %v2715 = vand.u32 %v1663, 4294901760
        %2716 = vmatpush1.msra.mxu0 %v2715
        %2717 = vmatprep.subr.mxu0 0.0
        %2718 = vmatpush1.msra.mxu0 0.0
        %2719 = vmatprep.subr.mxu0 0.0
        %2720 = vmatpush1.msra.mxu0 0.0
        %2721 = vmatprep.subr.mxu0 0.0
        %2722 = vmatpush1.msra.mxu0 0.0
        %2723 = vmatprep.subr.mxu0 0.0
        %2724 = vmatpush1.msra.mxu0 0.0
        %2725 = vmatprep.subr.mxu0 0.0
        %2726 = vmatpush1.msra.mxu0 0.0
        %2727 = vmatprep.subr.mxu0 0.0
        %2728 = vmatpush1.msra.mxu0 0.0
        %2729 = vmatprep.subr.mxu0 0.0
        %2730 = vmatpush1.msra.mxu0 0.0
        %2731 = vmatprep.subr.mxu0 0.0
        %2732 = vmatpush1.msra.mxu0 0.0
        %2733 = vmatprep.subr.mxu0 0.0
        %2734 = vmatpush1.msra.mxu0 0.0
        %2735 = vmatprep.subr.mxu0 0.0
        %2736 = vmatpush1.msra.mxu0 0.0
        %2737 = vmatprep.subr.mxu0 0.0
        %2738 = vmatpush1.msra.mxu0 0.0
        %2739 = vmatprep.subr.mxu0 0.0
        %2740 = vmatpush1.msra.mxu0 0.0
        %2741 = vmatprep.subr.mxu0 0.0
        %2742 = vmatpush1.msra.mxu0 0.0
        %2743 = vmatprep.subr.mxu0 0.0
        %2744 = vmatpush1.msra.mxu0 0.0
        %2745 = vmatprep.subr.mxu0 0.0
        %2746 = vmatpush1.msra.mxu0 0.0
        %2747 = vmatprep.subr.mxu0 0.0
        %2748 = vmatpush1.msra.mxu0 0.0
        %2749 = vmatprep.subr.mxu0 0.0
        %2750 = vmatpush1.msra.mxu0 0.0
        %2751 = vmatprep.subr.mxu0 0.0
        %2752 = vmatpush1.msra.mxu0 0.0
        %2753 = vmatprep.subr.mxu0 0.0
        %2754 = vmatpush1.msra.mxu0 0.0
        %2755 = vmatprep.subr.mxu0 0.0
        %2756 = vmatpush1.msra.mxu0 0.0
        %2757 = vmatprep.subr.mxu0 0.0
        %2758 = vmatpush1.msra.mxu0 0.0
        %2759 = vmatprep.subr.mxu0 0.0
        %2760 = vmatpush1.msra.mxu0 0.0
        %2761 = vmatprep.subr.mxu0 0.0
        %2762 = vmatpush1.msra.mxu0 0.0
        %2763 = vmatprep.subr.mxu0 0.0
        %2764 = vmatpush1.msra.mxu0 0.0
        %2765 = vmatprep.subr.mxu0 0.0
        %2766 = vmatpush1.msra.mxu0 0.0
        %2767 = vmatprep.subr.mxu0 0.0
        %2768 = vmatpush1.msra.mxu0 0.0
        %2769 = vmatprep.subr.mxu0 0.0
        %2770 = vmatpush1.msra.mxu0 0.0
        %2771 = vmatprep.subr.mxu0 0.0
        %2772 = vmatpush1.msra.mxu0 0.0
        %2773 = vmatprep.subr.mxu0 0.0
        %2774 = vmatpush1.msra.mxu0 0.0
        %2775 = vmatprep.subr.mxu0 0.0
        %2776 = vmatpush1.msra.mxu0 0.0
        %2777 = vmatprep.subr.mxu0 0.0
        %2778 = vmatpush1.msra.mxu0 0.0
        %2779 = vmatprep.mubr.f32.mxu0 0.0
        %v2780 = vand.u32 %v2702, 4294901760
        %v2781 = vsub.f32 %v2702, %v2780
        %v2782 = vand.u32 %v2781, 4294901760
        %v2783 = vsub.f32 %v2781, %v2782
        %v2784 = vand.u32 %v2783, 4294901760
        %2785 = vmatmul.mubr.f32.gmra.mrb[0].mxu0 %v2784
        %v2786 = vpop.f32.mrb[0].mxu0
        %v2787 = vadd.f32 0.0, %v2786
        %v2788 = vpop.f32.mrb[0].mxu0
        %v2789 = vadd.f32 0.0, %v2788
        %2790 = vmatprep.mubr.f32.mxu0 0.0
        %v2791 = vand.u32 %v2705, 4294901760
        %v2792 = vsub.f32 %v2705, %v2791
        %v2793 = vand.u32 %v2792, 4294901760
        %v2794 = vsub.f32 %v2792, %v2793
        %v2795 = vand.u32 %v2794, 4294901760
        %2796 = vmatmul.mubr.f32.gmra.mrb[0].mxu0 %v2795
        %v2797 = vpop.f32.mrb[0].mxu0
        %v2798 = vadd.f32 0.0, %v2797
        %v2799 = vpop.f32.mrb[0].mxu0
        %v2800 = vadd.f32 0.0, %v2799
        %2801 = vmatprep.mubr.f32.mxu0 0.0
        %v2802 = vand.u32 %v2708, 4294901760
        %v2803 = vsub.f32 %v2708, %v2802
        %v2804 = vand.u32 %v2803, 4294901760
        %v2805 = vsub.f32 %v2803, %v2804
        %v2806 = vand.u32 %v2805, 4294901760
        %2807 = vmatmul.mubr.f32.gmra.mrb[0].mxu0 %v2806
        %v2808 = vpop.f32.mrb[0].mxu0
        %v2809 = vadd.f32 0.0, %v2808
        %v2810 = vpop.f32.mrb[0].mxu0
        %v2811 = vadd.f32 0.0, %v2810
        %2812 = vmatprep.mubr.f32.mxu0 0.0
        %v2813 = vand.u32 %v2711, 4294901760
        %v2814 = vsub.f32 %v2711, %v2813
        %v2815 = vand.u32 %v2814, 4294901760
        %v2816 = vsub.f32 %v2814, %v2815
        %v2817 = vand.u32 %v2816, 4294901760
        %2818 = vmatmul.mubr.f32.gmra.mrb[0].mxu0 %v2817
        %v2819 = vpop.f32.mrb[0].mxu0
        %v2820 = vadd.f32 0.0, %v2819
        %v2821 = vpop.f32.mrb[0].mxu0
        %v2822 = vadd.f32 0.0, %v2821
        %2823 = vdwg.mxu0
        %v2824 = vand.u32 %v1664, 4294901760
        %v2825 = vsub.f32 %v1664, %v2824
        %v2826 = vand.u32 %v2825, 4294901760
        %v2827 = vsub.f32 %v2825, %v2826
        %v2828 = vand.u32 %v2827, 4294901760
        %2829 = vmatprep.subr.mxu0 %v2828
        %v2830 = vand.u32 %v1663, 4294901760
        %v2831 = vsub.f32 %v1663, %v2830
        %v2832 = vand.u32 %v2831, 4294901760
        %v2833 = vsub.f32 %v2831, %v2832
        %v2834 = vand.u32 %v2833, 4294901760
        %2835 = vmatpush1.msra.mxu0 %v2834
        %2836 = vmatprep.subr.mxu0 0.0
        %2837 = vmatpush1.msra.mxu0 0.0
        %2838 = vmatprep.subr.mxu0 0.0
        %2839 = vmatpush1.msra.mxu0 0.0
        %2840 = vmatprep.subr.mxu0 0.0
        %2841 = vmatpush1.msra.mxu0 0.0
        %2842 = vmatprep.subr.mxu0 0.0
        %2843 = vmatpush1.msra.mxu0 0.0
        %2844 = vmatprep.subr.mxu0 0.0
        %2845 = vmatpush1.msra.mxu0 0.0
        %2846 = vmatprep.subr.mxu0 0.0
        %2847 = vmatpush1.msra.mxu0 0.0
        %2848 = vmatprep.subr.mxu0 0.0
        %2849 = vmatpush1.msra.mxu0 0.0
        %2850 = vmatprep.subr.mxu0 0.0
        %2851 = vmatpush1.msra.mxu0 0.0
        %2852 = vmatprep.subr.mxu0 0.0
        %2853 = vmatpush1.msra.mxu0 0.0
        %2854 = vmatprep.subr.mxu0 0.0
        %2855 = vmatpush1.msra.mxu0 0.0
        %2856 = vmatprep.subr.mxu0 0.0
        %2857 = vmatpush1.msra.mxu0 0.0
        %2858 = vmatprep.subr.mxu0 0.0
        %2859 = vmatpush1.msra.mxu0 0.0
        %2860 = vmatprep.subr.mxu0 0.0
        %2861 = vmatpush1.msra.mxu0 0.0
        %2862 = vmatprep.subr.mxu0 0.0
        %2863 = vmatpush1.msra.mxu0 0.0
        %2864 = vmatprep.subr.mxu0 0.0
        %2865 = vmatpush1.msra.mxu0 0.0
        %2866 = vmatprep.subr.mxu0 0.0
        %2867 = vmatpush1.msra.mxu0 0.0
        %2868 = vmatprep.subr.mxu0 0.0
        %2869 = vmatpush1.msra.mxu0 0.0
        %2870 = vmatprep.subr.mxu0 0.0
        %2871 = vmatpush1.msra.mxu0 0.0
        %2872 = vmatprep.subr.mxu0 0.0
        %2873 = vmatpush1.msra.mxu0 0.0
        %2874 = vmatprep.subr.mxu0 0.0
        %2875 = vmatpush1.msra.mxu0 0.0
        %2876 = vmatprep.subr.mxu0 0.0
        %2877 = vmatpush1.msra.mxu0 0.0
        %2878 = vmatprep.subr.mxu0 0.0
        %2879 = vmatpush1.msra.mxu0 0.0
        %2880 = vmatprep.subr.mxu0 0.0
        %2881 = vmatpush1.msra.mxu0 0.0
        %2882 = vmatprep.subr.mxu0 0.0
        %2883 = vmatpush1.msra.mxu0 0.0
        %2884 = vmatprep.subr.mxu0 0.0
        %2885 = vmatpush1.msra.mxu0 0.0
        %2886 = vmatprep.subr.mxu0 0.0
        %2887 = vmatpush1.msra.mxu0 0.0
        %2888 = vmatprep.subr.mxu0 0.0
        %2889 = vmatpush1.msra.mxu0 0.0
        %2890 = vmatprep.subr.mxu0 0.0
        %2891 = vmatpush1.msra.mxu0 0.0
        %2892 = vmatprep.subr.mxu0 0.0
        %2893 = vmatpush1.msra.mxu0 0.0
        %2894 = vmatprep.subr.mxu0 0.0
        %2895 = vmatpush1.msra.mxu0 0.0
        %2896 = vmatprep.subr.mxu0 0.0
        %2897 = vmatpush1.msra.mxu0 0.0
        %2898 = vmatprep.mubr.f32.mxu0 0.0
        %v2899 = vand.u32 %v2702, 4294901760
        %2900 = vmatmul.mubr.f32.gmra.mrb[0].mxu0 %v2899
        %v2901 = vpop.f32.mrb[0].mxu0
        %v2902 = vadd.f32 %v2787, %v2901
        %v2903 = vpop.f32.mrb[0].mxu0
        %v2904 = vadd.f32 %v2789, %v2903
        %2905 = vmatprep.mubr.f32.mxu0 0.0
        %v2906 = vand.u32 %v2705, 4294901760
        %2907 = vmatmul.mubr.f32.gmra.mrb[0].mxu0 %v2906
        %v2908 = vpop.f32.mrb[0].mxu0
        %v2909 = vadd.f32 %v2798, %v2908
        %v2910 = vpop.f32.mrb[0].mxu0
        %v2911 = vadd.f32 %v2800, %v2910
        %2912 = vmatprep.mubr.f32.mxu0 0.0
        %v2913 = vand.u32 %v2708, 4294901760
        %2914 = vmatmul.mubr.f32.gmra.mrb[0].mxu0 %v2913
        %v2915 = vpop.f32.mrb[0].mxu0
        %v2916 = vadd.f32 %v2809, %v2915
        %v2917 = vpop.f32.mrb[0].mxu0
        %v2918 = vadd.f32 %v2811, %v2917
        %2919 = vmatprep.mubr.f32.mxu0 0.0
        %v2920 = vand.u32 %v2711, 4294901760
        %2921 = vmatmul.mubr.f32.gmra.mrb[0].mxu0 %v2920
        %v2922 = vpop.f32.mrb[0].mxu0
        %v2923 = vadd.f32 %v2820, %v2922
        %v2924 = vpop.f32.mrb[0].mxu0
        %v2925 = vadd.f32 %v2822, %v2924
        %2926 = vdwg.mxu0
        %v2927 = vand.u32 %v1664, 4294901760
        %v2928 = vsub.f32 %v1664, %v2927
        %2929 = vmatprep.subr.mxu0 %v2928
        %v2930 = vand.u32 %v1663, 4294901760
        %v2931 = vsub.f32 %v1663, %v2930
        %2932 = vmatpush1.msra.mxu0 %v2931
        %2933 = vmatprep.subr.mxu0 0.0
        %2934 = vmatpush1.msra.mxu0 0.0
        %2935 = vmatprep.subr.mxu0 0.0
        %2936 = vmatpush1.msra.mxu0 0.0
        %2937 = vmatprep.subr.mxu0 0.0
        %2938 = vmatpush1.msra.mxu0 0.0
        %2939 = vmatprep.subr.mxu0 0.0
        %2940 = vmatpush1.msra.mxu0 0.0
        %2941 = vmatprep.subr.mxu0 0.0
        %2942 = vmatpush1.msra.mxu0 0.0
        %2943 = vmatprep.subr.mxu0 0.0
        %2944 = vmatpush1.msra.mxu0 0.0
        %2945 = vmatprep.subr.mxu0 0.0
        %2946 = vmatpush1.msra.mxu0 0.0
        %2947 = vmatprep.subr.mxu0 0.0
        %2948 = vmatpush1.msra.mxu0 0.0
        %2949 = vmatprep.subr.mxu0 0.0
        %2950 = vmatpush1.msra.mxu0 0.0
        %2951 = vmatprep.subr.mxu0 0.0
        %2952 = vmatpush1.msra.mxu0 0.0
        %2953 = vmatprep.subr.mxu0 0.0
        %2954 = vmatpush1.msra.mxu0 0.0
        %2955 = vmatprep.subr.mxu0 0.0
        %2956 = vmatpush1.msra.mxu0 0.0
        %2957 = vmatprep.subr.mxu0 0.0
        %2958 = vmatpush1.msra.mxu0 0.0
        %2959 = vmatprep.subr.mxu0 0.0
        %2960 = vmatpush1.msra.mxu0 0.0
        %2961 = vmatprep.subr.mxu0 0.0
        %2962 = vmatpush1.msra.mxu0 0.0
        %2963 = vmatprep.subr.mxu0 0.0
        %2964 = vmatpush1.msra.mxu0 0.0
        %2965 = vmatprep.subr.mxu0 0.0
        %2966 = vmatpush1.msra.mxu0 0.0
        %2967 = vmatprep.subr.mxu0 0.0
        %2968 = vmatpush1.msra.mxu0 0.0
        %2969 = vmatprep.subr.mxu0 0.0
        %2970 = vmatpush1.msra.mxu0 0.0
        %2971 = vmatprep.subr.mxu0 0.0
        %2972 = vmatpush1.msra.mxu0 0.0
        %2973 = vmatprep.subr.mxu0 0.0
        %2974 = vmatpush1.msra.mxu0 0.0
        %2975 = vmatprep.subr.mxu0 0.0
        %2976 = vmatpush1.msra.mxu0 0.0
        %2977 = vmatprep.subr.mxu0 0.0
        %2978 = vmatpush1.msra.mxu0 0.0
        %2979 = vmatprep.subr.mxu0 0.0
        %2980 = vmatpush1.msra.mxu0 0.0
        %2981 = vmatprep.subr.mxu0 0.0
        %2982 = vmatpush1.msra.mxu0 0.0
        %2983 = vmatprep.subr.mxu0 0.0
        %2984 = vmatpush1.msra.mxu0 0.0
        %2985 = vmatprep.subr.mxu0 0.0
        %2986 = vmatpush1.msra.mxu0 0.0
        %2987 = vmatprep.subr.mxu0 0.0
        %2988 = vmatpush1.msra.mxu0 0.0
        %2989 = vmatprep.subr.mxu0 0.0
        %2990 = vmatpush1.msra.mxu0 0.0
        %2991 = vmatprep.subr.mxu0 0.0
        %2992 = vmatpush1.msra.mxu0 0.0
        %2993 = vmatprep.subr.mxu0 0.0
        %2994 = vmatpush1.msra.mxu0 0.0
        %2995 = vmatprep.mubr.f32.mxu0 0.0
        %v2996 = vand.u32 %v2702, 4294901760
        %v2997 = vsub.f32 %v2702, %v2996
        %2998 = vmatmul.mubr.f32.gmra.mrb[0].mxu0 %v2997
        %v2999 = vpop.f32.mrb[0].mxu0
        %v3000 = vadd.f32 %v2902, %v2999
        %v3001 = vpop.f32.mrb[0].mxu0
        %v3002 = vadd.f32 %v2904, %v3001
        %3003 = vmatprep.mubr.f32.mxu0 0.0
        %v3004 = vand.u32 %v2705, 4294901760
        %v3005 = vsub.f32 %v2705, %v3004
        %3006 = vmatmul.mubr.f32.gmra.mrb[0].mxu0 %v3005
        %v3007 = vpop.f32.mrb[0].mxu0
        %v3008 = vadd.f32 %v2909, %v3007
        %v3009 = vpop.f32.mrb[0].mxu0
        %v3010 = vadd.f32 %v2911, %v3009
        %3011 = vmatprep.mubr.f32.mxu0 0.0
        %v3012 = vand.u32 %v2708, 4294901760
        %v3013 = vsub.f32 %v2708, %v3012
        %3014 = vmatmul.mubr.f32.gmra.mrb[0].mxu0 %v3013
        %v3015 = vpop.f32.mrb[0].mxu0
        %v3016 = vadd.f32 %v2916, %v3015
        %v3017 = vpop.f32.mrb[0].mxu0
        %v3018 = vadd.f32 %v2918, %v3017
        %3019 = vmatprep.mubr.f32.mxu0 0.0
        %v3020 = vand.u32 %v2711, 4294901760
        %v3021 = vsub.f32 %v2711, %v3020
        %3022 = vmatmul.mubr.f32.gmra.mrb[0].mxu0 %v3021
        %v3023 = vpop.f32.mrb[0].mxu0
        %v3024 = vadd.f32 %v2923, %v3023
        %v3025 = vpop.f32.mrb[0].mxu0
        %v3026 = vadd.f32 %v2925, %v3025
        %3027 = vdwg.mxu0
        %v3028 = vand.u32 %v1664, 4294901760
        %3029 = vmatprep.subr.mxu0 %v3028
        %v3030 = vand.u32 %v1663, 4294901760
        %3031 = vmatpush1.msra.mxu0 %v3030
        %3032 = vmatprep.subr.mxu0 0.0
        %3033 = vmatpush1.msra.mxu0 0.0
        %3034 = vmatprep.subr.mxu0 0.0
        %3035 = vmatpush1.msra.mxu0 0.0
        %3036 = vmatprep.subr.mxu0 0.0
        %3037 = vmatpush1.msra.mxu0 0.0
        %3038 = vmatprep.subr.mxu0 0.0
        %3039 = vmatpush1.msra.mxu0 0.0
        %3040 = vmatprep.subr.mxu0 0.0
        %3041 = vmatpush1.msra.mxu0 0.0
        %3042 = vmatprep.subr.mxu0 0.0
        %3043 = vmatpush1.msra.mxu0 0.0
        %3044 = vmatprep.subr.mxu0 0.0
        %3045 = vmatpush1.msra.mxu0 0.0
        %3046 = vmatprep.subr.mxu0 0.0
        %3047 = vmatpush1.msra.mxu0 0.0
        %3048 = vmatprep.subr.mxu0 0.0
        %3049 = vmatpush1.msra.mxu0 0.0
        %3050 = vmatprep.subr.mxu0 0.0
        %3051 = vmatpush1.msra.mxu0 0.0
        %3052 = vmatprep.subr.mxu0 0.0
        %3053 = vmatpush1.msra.mxu0 0.0
        %3054 = vmatprep.subr.mxu0 0.0
        %3055 = vmatpush1.msra.mxu0 0.0
        %3056 = vmatprep.subr.mxu0 0.0
        %3057 = vmatpush1.msra.mxu0 0.0
        %3058 = vmatprep.subr.mxu0 0.0
        %3059 = vmatpush1.msra.mxu0 0.0
        %3060 = vmatprep.subr.mxu0 0.0
        %3061 = vmatpush1.msra.mxu0 0.0
        %3062 = vmatprep.subr.mxu0 0.0
        %3063 = vmatpush1.msra.mxu0 0.0
        %3064 = vmatprep.subr.mxu0 0.0
        %3065 = vmatpush1.msra.mxu0 0.0
        %3066 = vmatprep.subr.mxu0 0.0
        %3067 = vmatpush1.msra.mxu0 0.0
        %3068 = vmatprep.subr.mxu0 0.0
        %3069 = vmatpush1.msra.mxu0 0.0
        %3070 = vmatprep.subr.mxu0 0.0
        %3071 = vmatpush1.msra.mxu0 0.0
        %3072 = vmatprep.subr.mxu0 0.0
        %3073 = vmatpush1.msra.mxu0 0.0
        %3074 = vmatprep.subr.mxu0 0.0
        %3075 = vmatpush1.msra.mxu0 0.0
        %3076 = vmatprep.subr.mxu0 0.0
        %3077 = vmatpush1.msra.mxu0 0.0
        %3078 = vmatprep.subr.mxu0 0.0
        %3079 = vmatpush1.msra.mxu0 0.0
        %3080 = vmatprep.subr.mxu0 0.0
        %3081 = vmatpush1.msra.mxu0 0.0
        %3082 = vmatprep.subr.mxu0 0.0
        %3083 = vmatpush1.msra.mxu0 0.0
        %3084 = vmatprep.subr.mxu0 0.0
        %3085 = vmatpush1.msra.mxu0 0.0
        %3086 = vmatprep.subr.mxu0 0.0
        %3087 = vmatpush1.msra.mxu0 0.0
        %3088 = vmatprep.subr.mxu0 0.0
        %3089 = vmatpush1.msra.mxu0 0.0
        %3090 = vmatprep.subr.mxu0 0.0
        %3091 = vmatpush1.msra.mxu0 0.0
        %3092 = vmatprep.subr.mxu0 0.0
        %3093 = vmatpush1.msra.mxu0 0.0
        %3094 = vmatprep.mubr.f32.mxu0 0.0
        %v3095 = vand.u32 %v2702, 4294901760
        %v3096 = vsub.f32 %v2702, %v3095
        %v3097 = vand.u32 %v3096, 4294901760
        %3098 = vmatmul.mubr.f32.gmra.mrb[0].mxu0 %v3097
        %v3099 = vpop.f32.mrb[0].mxu0
        %v3100 = vadd.f32 %v3000, %v3099
        %v3101 = vpop.f32.mrb[0].mxu0
        %v3102 = vadd.f32 %v3002, %v3101
        %3103 = vmatprep.mubr.f32.mxu0 0.0
        %v3104 = vand.u32 %v2705, 4294901760
        %v3105 = vsub.f32 %v2705, %v3104
        %v3106 = vand.u32 %v3105, 4294901760
        %3107 = vmatmul.mubr.f32.gmra.mrb[0].mxu0 %v3106
        %v3108 = vpop.f32.mrb[0].mxu0
        %v3109 = vadd.f32 %v3008, %v3108
        %v3110 = vpop.f32.mrb[0].mxu0
        %v3111 = vadd.f32 %v3010, %v3110
        %3112 = vmatprep.mubr.f32.mxu0 0.0
        %v3113 = vand.u32 %v2708, 4294901760
        %v3114 = vsub.f32 %v2708, %v3113
        %v3115 = vand.u32 %v3114, 4294901760
        %3116 = vmatmul.mubr.f32.gmra.mrb[0].mxu0 %v3115
        %v3117 = vpop.f32.mrb[0].mxu0
        %v3118 = vadd.f32 %v3016, %v3117
        %v3119 = vpop.f32.mrb[0].mxu0
        %v3120 = vadd.f32 %v3018, %v3119
        %3121 = vmatprep.mubr.f32.mxu0 0.0
        %v3122 = vand.u32 %v2711, 4294901760
        %v3123 = vsub.f32 %v2711, %v3122
        %v3124 = vand.u32 %v3123, 4294901760
        %3125 = vmatmul.mubr.f32.gmra.mrb[0].mxu0 %v3124
        %v3126 = vpop.f32.mrb[0].mxu0
        %v3127 = vadd.f32 %v3024, %v3126
        %v3128 = vpop.f32.mrb[0].mxu0
        %v3129 = vadd.f32 %v3026, %v3128
        %3130 = vdwg.mxu0
        %v3131 = vand.u32 %v1664, 4294901760
        %v3132 = vsub.f32 %v1664, %v3131
        %v3133 = vand.u32 %v3132, 4294901760
        %3134 = vmatprep.subr.mxu0 %v3133
        %v3135 = vand.u32 %v1663, 4294901760
        %v3136 = vsub.f32 %v1663, %v3135
        %v3137 = vand.u32 %v3136, 4294901760
        %3138 = vmatpush1.msra.mxu0 %v3137
        %3139 = vmatprep.subr.mxu0 0.0
        %3140 = vmatpush1.msra.mxu0 0.0
        %3141 = vmatprep.subr.mxu0 0.0
        %3142 = vmatpush1.msra.mxu0 0.0
        %3143 = vmatprep.subr.mxu0 0.0
        %3144 = vmatpush1.msra.mxu0 0.0
        %3145 = vmatprep.subr.mxu0 0.0
        %3146 = vmatpush1.msra.mxu0 0.0
        %3147 = vmatprep.subr.mxu0 0.0
        %3148 = vmatpush1.msra.mxu0 0.0
        %3149 = vmatprep.subr.mxu0 0.0
        %3150 = vmatpush1.msra.mxu0 0.0
        %3151 = vmatprep.subr.mxu0 0.0
        %3152 = vmatpush1.msra.mxu0 0.0
        %3153 = vmatprep.subr.mxu0 0.0
        %3154 = vmatpush1.msra.mxu0 0.0
        %3155 = vmatprep.subr.mxu0 0.0
        %3156 = vmatpush1.msra.mxu0 0.0
        %3157 = vmatprep.subr.mxu0 0.0
        %3158 = vmatpush1.msra.mxu0 0.0
        %3159 = vmatprep.subr.mxu0 0.0
        %3160 = vmatpush1.msra.mxu0 0.0
        %3161 = vmatprep.subr.mxu0 0.0
        %3162 = vmatpush1.msra.mxu0 0.0
        %3163 = vmatprep.subr.mxu0 0.0
        %3164 = vmatpush1.msra.mxu0 0.0
        %3165 = vmatprep.subr.mxu0 0.0
        %3166 = vmatpush1.msra.mxu0 0.0
        %3167 = vmatprep.subr.mxu0 0.0
        %3168 = vmatpush1.msra.mxu0 0.0
        %3169 = vmatprep.subr.mxu0 0.0
        %3170 = vmatpush1.msra.mxu0 0.0
        %3171 = vmatprep.subr.mxu0 0.0
        %3172 = vmatpush1.msra.mxu0 0.0
        %3173 = vmatprep.subr.mxu0 0.0
        %3174 = vmatpush1.msra.mxu0 0.0
        %3175 = vmatprep.subr.mxu0 0.0
        %3176 = vmatpush1.msra.mxu0 0.0
        %3177 = vmatprep.subr.mxu0 0.0
        %3178 = vmatpush1.msra.mxu0 0.0
        %3179 = vmatprep.subr.mxu0 0.0
        %3180 = vmatpush1.msra.mxu0 0.0
        %3181 = vmatprep.subr.mxu0 0.0
        %3182 = vmatpush1.msra.mxu0 0.0
        %3183 = vmatprep.subr.mxu0 0.0
        %3184 = vmatpush1.msra.mxu0 0.0
        %3185 = vmatprep.subr.mxu0 0.0
        %3186 = vmatpush1.msra.mxu0 0.0
        %3187 = vmatprep.subr.mxu0 0.0
        %3188 = vmatpush1.msra.mxu0 0.0
        %3189 = vmatprep.subr.mxu0 0.0
        %3190 = vmatpush1.msra.mxu0 0.0
        %3191 = vmatprep.subr.mxu0 0.0
        %3192 = vmatpush1.msra.mxu0 0.0
        %3193 = vmatprep.subr.mxu0 0.0
        %3194 = vmatpush1.msra.mxu0 0.0
        %3195 = vmatprep.subr.mxu0 0.0
        %3196 = vmatpush1.msra.mxu0 0.0
        %3197 = vmatprep.subr.mxu0 0.0
        %3198 = vmatpush1.msra.mxu0 0.0
        %3199 = vmatprep.subr.mxu0 0.0
        %3200 = vmatpush1.msra.mxu0 0.0
        %3201 = vmatprep.mubr.f32.mxu0 0.0
        %v3202 = vand.u32 %v2702, 4294901760
        %3203 = vmatmul.mubr.f32.gmra.mrb[0].mxu0 %v3202
        %v3204 = vpop.f32.mrb[0].mxu0
        %v3205 = vadd.f32 %v3100, %v3204
        %v3206 = vpop.f32.mrb[0].mxu0
        %v3207 = vadd.f32 %v3102, %v3206
        %3208 = vmatprep.mubr.f32.mxu0 0.0
        %v3209 = vand.u32 %v2705, 4294901760
        %3210 = vmatmul.mubr.f32.gmra.mrb[0].mxu0 %v3209
        %v3211 = vpop.f32.mrb[0].mxu0
        %v3212 = vadd.f32 %v3109, %v3211
        %v3213 = vpop.f32.mrb[0].mxu0
        %v3214 = vadd.f32 %v3111, %v3213
        %3215 = vmatprep.mubr.f32.mxu0 0.0
        %v3216 = vand.u32 %v2708, 4294901760
        %3217 = vmatmul.mubr.f32.gmra.mrb[0].mxu0 %v3216
        %v3218 = vpop.f32.mrb[0].mxu0
        %v3219 = vadd.f32 %v3118, %v3218
        %v3220 = vpop.f32.mrb[0].mxu0
        %v3221 = vadd.f32 %v3120, %v3220
        %3222 = vmatprep.mubr.f32.mxu0 0.0
        %v3223 = vand.u32 %v2711, 4294901760
        %3224 = vmatmul.mubr.f32.gmra.mrb[0].mxu0 %v3223
        %v3225 = vpop.f32.mrb[0].mxu0
        %v3226 = vadd.f32 %v3127, %v3225
        %v3227 = vpop.f32.mrb[0].mxu0
        %v3228 = vadd.f32 %v3129, %v3227
        %3229 = vdwg.mxu0
        %v3230 = vand.u32 %v1664, 4294901760
        %3231 = vmatprep.subr.mxu0 %v3230
        %v3232 = vand.u32 %v1663, 4294901760
        %3233 = vmatpush1.msra.mxu0 %v3232
        %3234 = vmatprep.subr.mxu0 0.0
        %3235 = vmatpush1.msra.mxu0 0.0
        %3236 = vmatprep.subr.mxu0 0.0
        %3237 = vmatpush1.msra.mxu0 0.0
        %3238 = vmatprep.subr.mxu0 0.0
        %3239 = vmatpush1.msra.mxu0 0.0
        %3240 = vmatprep.subr.mxu0 0.0
        %3241 = vmatpush1.msra.mxu0 0.0
        %3242 = vmatprep.subr.mxu0 0.0
        %3243 = vmatpush1.msra.mxu0 0.0
        %3244 = vmatprep.subr.mxu0 0.0
        %3245 = vmatpush1.msra.mxu0 0.0
        %3246 = vmatprep.subr.mxu0 0.0
        %3247 = vmatpush1.msra.mxu0 0.0
        %3248 = vmatprep.subr.mxu0 0.0
        %3249 = vmatpush1.msra.mxu0 0.0
        %3250 = vmatprep.subr.mxu0 0.0
        %3251 = vmatpush1.msra.mxu0 0.0
        %3252 = vmatprep.subr.mxu0 0.0
        %3253 = vmatpush1.msra.mxu0 0.0
        %3254 = vmatprep.subr.mxu0 0.0
        %3255 = vmatpush1.msra.mxu0 0.0
        %3256 = vmatprep.subr.mxu0 0.0
        %3257 = vmatpush1.msra.mxu0 0.0
        %3258 = vmatprep.subr.mxu0 0.0
        %3259 = vmatpush1.msra.mxu0 0.0
        %3260 = vmatprep.subr.mxu0 0.0
        %3261 = vmatpush1.msra.mxu0 0.0
        %3262 = vmatprep.subr.mxu0 0.0
        %3263 = vmatpush1.msra.mxu0 0.0
        %3264 = vmatprep.subr.mxu0 0.0
        %3265 = vmatpush1.msra.mxu0 0.0
        %3266 = vmatprep.subr.mxu0 0.0
        %3267 = vmatpush1.msra.mxu0 0.0
        %3268 = vmatprep.subr.mxu0 0.0
        %3269 = vmatpush1.msra.mxu0 0.0
        %3270 = vmatprep.subr.mxu0 0.0
        %3271 = vmatpush1.msra.mxu0 0.0
        %3272 = vmatprep.subr.mxu0 0.0
        %3273 = vmatpush1.msra.mxu0 0.0
        %3274 = vmatprep.subr.mxu0 0.0
        %3275 = vmatpush1.msra.mxu0 0.0
        %3276 = vmatprep.subr.mxu0 0.0
        %3277 = vmatpush1.msra.mxu0 0.0
        %3278 = vmatprep.subr.mxu0 0.0
        %3279 = vmatpush1.msra.mxu0 0.0
        %3280 = vmatprep.subr.mxu0 0.0
        %3281 = vmatpush1.msra.mxu0 0.0
        %3282 = vmatprep.subr.mxu0 0.0
        %3283 = vmatpush1.msra.mxu0 0.0
        %3284 = vmatprep.subr.mxu0 0.0
        %3285 = vmatpush1.msra.mxu0 0.0
        %3286 = vmatprep.subr.mxu0 0.0
        %3287 = vmatpush1.msra.mxu0 0.0
        %3288 = vmatprep.subr.mxu0 0.0
        %3289 = vmatpush1.msra.mxu0 0.0
        %3290 = vmatprep.subr.mxu0 0.0
        %3291 = vmatpush1.msra.mxu0 0.0
        %3292 = vmatprep.subr.mxu0 0.0
        %3293 = vmatpush1.msra.mxu0 0.0
        %3294 = vmatprep.subr.mxu0 0.0
        %3295 = vmatpush1.msra.mxu0 0.0
        %3296 = vmatprep.mubr.f32.mxu0 0.0
        %v3297 = vand.u32 %v2702, 4294901760
        %3298 = vmatmul.mubr.f32.gmra.mrb[0].mxu0 %v3297
        %v3299 = vpop.f32.mrb[0].mxu0
        %v3300 = vadd.f32 %v3205, %v3299
        %v3301 = vpop.f32.mrb[0].mxu0
        %v3302 = vadd.f32 %v3207, %v3301
        %3303 = vmatprep.mubr.f32.mxu0 0.0
        %v3304 = vand.u32 %v2705, 4294901760
        %3305 = vmatmul.mubr.f32.gmra.mrb[0].mxu0 %v3304
        %v3306 = vpop.f32.mrb[0].mxu0
        %v3307 = vadd.f32 %v3212, %v3306
        %v3308 = vpop.f32.mrb[0].mxu0
        %v3309 = vadd.f32 %v3214, %v3308
        %3310 = vmatprep.mubr.f32.mxu0 0.0
        %v3311 = vand.u32 %v2708, 4294901760
        %3312 = vmatmul.mubr.f32.gmra.mrb[0].mxu0 %v3311
        %v3313 = vpop.f32.mrb[0].mxu0
        %v3314 = vadd.f32 %v3219, %v3313
        %v3315 = vpop.f32.mrb[0].mxu0
        %v3316 = vadd.f32 %v3221, %v3315
        %3317 = vmatprep.mubr.f32.mxu0 0.0
        %v3318 = vand.u32 %v2711, 4294901760
        %3319 = vmatmul.mubr.f32.gmra.mrb[0].mxu0 %v3318
        %v3320 = vpop.f32.mrb[0].mxu0
        %v3321 = vadd.f32 %v3226, %v3320
        %v3322 = vpop.f32.mrb[0].mxu0
        %v3323 = vadd.f32 %v3228, %v3322
        %3324 = vdwg.mxu0
        %v3325 = vld [vmem:[%s11] sm:$0xff]
        %v3326 = vld [vmem:[%s11 + $0x8] sm:$0xff]
        %v3327 = vld [vmem:[%s11 + $0x10] sm:$0xff]
        %v3328 = vld [vmem:[%s11 + $0x18] sm:$0xff]
        %v3330 = vsel %vm1194, %v3325, 0
        %v3333 = vsel %vm1194, %v3326, 0
        %v3336 = vsel %vm1194, %v3327, 0
        %v3339 = vsel %vm1194, %v3328, 0
        %v3341 = vand.u32 %v2696, 4294901760
        %3342 = vmatprep.subr.mxu0 %v3341
        %v3343 = vand.u32 %v2695, 4294901760
        %3344 = vmatpush1.msra.mxu0 %v3343
        %3345 = vmatprep.subr.mxu0 0.0
        %3346 = vmatpush1.msra.mxu0 0.0
        %3347 = vmatprep.subr.mxu0 0.0
        %3348 = vmatpush1.msra.mxu0 0.0
        %3349 = vmatprep.subr.mxu0 0.0
        %3350 = vmatpush1.msra.mxu0 0.0
        %3351 = vmatprep.subr.mxu0 0.0
        %3352 = vmatpush1.msra.mxu0 0.0
        %3353 = vmatprep.subr.mxu0 0.0
        %3354 = vmatpush1.msra.mxu0 0.0
        %3355 = vmatprep.subr.mxu0 0.0
        %3356 = vmatpush1.msra.mxu0 0.0
        %3357 = vmatprep.subr.mxu0 0.0
        %3358 = vmatpush1.msra.mxu0 0.0
        %3359 = vmatprep.subr.mxu0 0.0
        %3360 = vmatpush1.msra.mxu0 0.0
        %3361 = vmatprep.subr.mxu0 0.0
        %3362 = vmatpush1.msra.mxu0 0.0
        %3363 = vmatprep.subr.mxu0 0.0
        %3364 = vmatpush1.msra.mxu0 0.0
        %3365 = vmatprep.subr.mxu0 0.0
        %3366 = vmatpush1.msra.mxu0 0.0
        %3367 = vmatprep.subr.mxu0 0.0
        %3368 = vmatpush1.msra.mxu0 0.0
        %3369 = vmatprep.subr.mxu0 0.0
        %3370 = vmatpush1.msra.mxu0 0.0
        %3371 = vmatprep.subr.mxu0 0.0
        %3372 = vmatpush1.msra.mxu0 0.0
        %3373 = vmatprep.subr.mxu0 0.0
        %3374 = vmatpush1.msra.mxu0 0.0
        %3375 = vmatprep.subr.mxu0 0.0
        %3376 = vmatpush1.msra.mxu0 0.0
        %3377 = vmatprep.subr.mxu0 0.0
        %3378 = vmatpush1.msra.mxu0 0.0
        %3379 = vmatprep.subr.mxu0 0.0
        %3380 = vmatpush1.msra.mxu0 0.0
        %3381 = vmatprep.subr.mxu0 0.0
        %3382 = vmatpush1.msra.mxu0 0.0
        %3383 = vmatprep.subr.mxu0 0.0
        %3384 = vmatpush1.msra.mxu0 0.0
        %3385 = vmatprep.subr.mxu0 0.0
        %3386 = vmatpush1.msra.mxu0 0.0
        %3387 = vmatprep.subr.mxu0 0.0
        %3388 = vmatpush1.msra.mxu0 0.0
        %3389 = vmatprep.subr.mxu0 0.0
        %3390 = vmatpush1.msra.mxu0 0.0
        %3391 = vmatprep.subr.mxu0 0.0
        %3392 = vmatpush1.msra.mxu0 0.0
        %3393 = vmatprep.subr.mxu0 0.0
        %3394 = vmatpush1.msra.mxu0 0.0
        %3395 = vmatprep.subr.mxu0 0.0
        %3396 = vmatpush1.msra.mxu0 0.0
        %3397 = vmatprep.subr.mxu0 0.0
        %3398 = vmatpush1.msra.mxu0 0.0
        %3399 = vmatprep.subr.mxu0 0.0
        %3400 = vmatpush1.msra.mxu0 0.0
        %3401 = vmatprep.subr.mxu0 0.0
        %3402 = vmatpush1.msra.mxu0 0.0
        %3403 = vmatprep.subr.mxu0 0.0
        %3404 = vmatpush1.msra.mxu0 0.0
        %3405 = vmatprep.subr.mxu0 0.0
        %3406 = vmatpush1.msra.mxu0 0.0
        %3407 = vmatprep.mubr.f32.mxu0 0.0
        %v3408 = vand.u32 %v3330, 4294901760
        %v3409 = vsub.f32 %v3330, %v3408
        %v3410 = vand.u32 %v3409, 4294901760
        %v3411 = vsub.f32 %v3409, %v3410
        %v3412 = vand.u32 %v3411, 4294901760
        %3413 = vmatmul.mubr.f32.gmra.mrb[0].mxu0 %v3412
        %v3414 = vpop.f32.mrb[0].mxu0
        %v3415 = vadd.f32 0.0, %v3414
        %v3416 = vpop.f32.mrb[0].mxu0
        %v3417 = vadd.f32 0.0, %v3416
        %3418 = vmatprep.mubr.f32.mxu0 0.0
        %v3419 = vand.u32 %v3333, 4294901760
        %v3420 = vsub.f32 %v3333, %v3419
        %v3421 = vand.u32 %v3420, 4294901760
        %v3422 = vsub.f32 %v3420, %v3421
        %v3423 = vand.u32 %v3422, 4294901760
        %3424 = vmatmul.mubr.f32.gmra.mrb[0].mxu0 %v3423
        %v3425 = vpop.f32.mrb[0].mxu0
        %v3426 = vadd.f32 0.0, %v3425
        %v3427 = vpop.f32.mrb[0].mxu0
        %v3428 = vadd.f32 0.0, %v3427
        %3429 = vmatprep.mubr.f32.mxu0 0.0
        %v3430 = vand.u32 %v3336, 4294901760
        %v3431 = vsub.f32 %v3336, %v3430
        %v3432 = vand.u32 %v3431, 4294901760
        %v3433 = vsub.f32 %v3431, %v3432
        %v3434 = vand.u32 %v3433, 4294901760
        %3435 = vmatmul.mubr.f32.gmra.mrb[0].mxu0 %v3434
        %v3436 = vpop.f32.mrb[0].mxu0
        %v3437 = vadd.f32 0.0, %v3436
        %v3438 = vpop.f32.mrb[0].mxu0
        %v3439 = vadd.f32 0.0, %v3438
        %3440 = vmatprep.mubr.f32.mxu0 0.0
        %v3441 = vand.u32 %v3339, 4294901760
        %v3442 = vsub.f32 %v3339, %v3441
        %v3443 = vand.u32 %v3442, 4294901760
        %v3444 = vsub.f32 %v3442, %v3443
        %v3445 = vand.u32 %v3444, 4294901760
        %3446 = vmatmul.mubr.f32.gmra.mrb[0].mxu0 %v3445
        %v3447 = vpop.f32.mrb[0].mxu0
        %v3448 = vadd.f32 0.0, %v3447
        %v3449 = vpop.f32.mrb[0].mxu0
        %v3450 = vadd.f32 0.0, %v3449
        %3451 = vdwg.mxu0
        %v3452 = vand.u32 %v2696, 4294901760
        %v3453 = vsub.f32 %v2696, %v3452
        %v3454 = vand.u32 %v3453, 4294901760
        %v3455 = vsub.f32 %v3453, %v3454
        %v3456 = vand.u32 %v3455, 4294901760
        %3457 = vmatprep.subr.mxu0 %v3456
        %v3458 = vand.u32 %v2695, 4294901760
        %v3459 = vsub.f32 %v2695, %v3458
        %v3460 = vand.u32 %v3459, 4294901760
        %v3461 = vsub.f32 %v3459, %v3460
        %v3462 = vand.u32 %v3461, 4294901760
        %3463 = vmatpush1.msra.mxu0 %v3462
        %3464 = vmatprep.subr.mxu0 0.0
        %3465 = vmatpush1.msra.mxu0 0.0
        %3466 = vmatprep.subr.mxu0 0.0
        %3467 = vmatpush1.msra.mxu0 0.0
        %3468 = vmatprep.subr.mxu0 0.0
        %3469 = vmatpush1.msra.mxu0 0.0
        %3470 = vmatprep.subr.mxu0 0.0
        %3471 = vmatpush1.msra.mxu0 0.0
        %3472 = vmatprep.subr.mxu0 0.0
        %3473 = vmatpush1.msra.mxu0 0.0
        %3474 = vmatprep.subr.mxu0 0.0
        %3475 = vmatpush1.msra.mxu0 0.0
        %3476 = vmatprep.subr.mxu0 0.0
        %3477 = vmatpush1.msra.mxu0 0.0
        %3478 = vmatprep.subr.mxu0 0.0
        %3479 = vmatpush1.msra.mxu0 0.0
        %3480 = vmatprep.subr.mxu0 0.0
        %3481 = vmatpush1.msra.mxu0 0.0
        %3482 = vmatprep.subr.mxu0 0.0
        %3483 = vmatpush1.msra.mxu0 0.0
        %3484 = vmatprep.subr.mxu0 0.0
        %3485 = vmatpush1.msra.mxu0 0.0
        %3486 = vmatprep.subr.mxu0 0.0
        %3487 = vmatpush1.msra.mxu0 0.0
        %3488 = vmatprep.subr.mxu0 0.0
        %3489 = vmatpush1.msra.mxu0 0.0
        %3490 = vmatprep.subr.mxu0 0.0
        %3491 = vmatpush1.msra.mxu0 0.0
        %3492 = vmatprep.subr.mxu0 0.0
        %3493 = vmatpush1.msra.mxu0 0.0
        %3494 = vmatprep.subr.mxu0 0.0
        %3495 = vmatpush1.msra.mxu0 0.0
        %3496 = vmatprep.subr.mxu0 0.0
        %3497 = vmatpush1.msra.mxu0 0.0
        %3498 = vmatprep.subr.mxu0 0.0
        %3499 = vmatpush1.msra.mxu0 0.0
        %3500 = vmatprep.subr.mxu0 0.0
        %3501 = vmatpush1.msra.mxu0 0.0
        %3502 = vmatprep.subr.mxu0 0.0
        %3503 = vmatpush1.msra.mxu0 0.0
        %3504 = vmatprep.subr.mxu0 0.0
        %3505 = vmatpush1.msra.mxu0 0.0
        %3506 = vmatprep.subr.mxu0 0.0
        %3507 = vmatpush1.msra.mxu0 0.0
        %3508 = vmatprep.subr.mxu0 0.0
        %3509 = vmatpush1.msra.mxu0 0.0
        %3510 = vmatprep.subr.mxu0 0.0
        %3511 = vmatpush1.msra.mxu0 0.0
        %3512 = vmatprep.subr.mxu0 0.0
        %3513 = vmatpush1.msra.mxu0 0.0
        %3514 = vmatprep.subr.mxu0 0.0
        %3515 = vmatpush1.msra.mxu0 0.0
        %3516 = vmatprep.subr.mxu0 0.0
        %3517 = vmatpush1.msra.mxu0 0.0
        %3518 = vmatprep.subr.mxu0 0.0
        %3519 = vmatpush1.msra.mxu0 0.0
        %3520 = vmatprep.subr.mxu0 0.0
        %3521 = vmatpush1.msra.mxu0 0.0
        %3522 = vmatprep.subr.mxu0 0.0
        %3523 = vmatpush1.msra.mxu0 0.0
        %3524 = vmatprep.subr.mxu0 0.0
        %3525 = vmatpush1.msra.mxu0 0.0
        %3526 = vmatprep.mubr.f32.mxu0 0.0
        %v3527 = vand.u32 %v3330, 4294901760
        %3528 = vmatmul.mubr.f32.gmra.mrb[0].mxu0 %v3527
        %v3529 = vpop.f32.mrb[0].mxu0
        %v3530 = vadd.f32 %v3415, %v3529
        %v3531 = vpop.f32.mrb[0].mxu0
        %v3532 = vadd.f32 %v3417, %v3531
        %3533 = vmatprep.mubr.f32.mxu0 0.0
        %v3534 = vand.u32 %v3333, 4294901760
        %3535 = vmatmul.mubr.f32.gmra.mrb[0].mxu0 %v3534
        %v3536 = vpop.f32.mrb[0].mxu0
        %v3537 = vadd.f32 %v3426, %v3536
        %v3538 = vpop.f32.mrb[0].mxu0
        %v3539 = vadd.f32 %v3428, %v3538
        %3540 = vmatprep.mubr.f32.mxu0 0.0
        %v3541 = vand.u32 %v3336, 4294901760
        %3542 = vmatmul.mubr.f32.gmra.mrb[0].mxu0 %v3541
        %v3543 = vpop.f32.mrb[0].mxu0
        %v3544 = vadd.f32 %v3437, %v3543
        %v3545 = vpop.f32.mrb[0].mxu0
        %v3546 = vadd.f32 %v3439, %v3545
        %3547 = vmatprep.mubr.f32.mxu0 0.0
        %v3548 = vand.u32 %v3339, 4294901760
        %3549 = vmatmul.mubr.f32.gmra.mrb[0].mxu0 %v3548
        %v3550 = vpop.f32.mrb[0].mxu0
        %v3551 = vadd.f32 %v3448, %v3550
        %v3552 = vpop.f32.mrb[0].mxu0
        %v3553 = vadd.f32 %v3450, %v3552
        %3554 = vdwg.mxu0
        %v3555 = vand.u32 %v2696, 4294901760
        %v3556 = vsub.f32 %v2696, %v3555
        %3557 = vmatprep.subr.mxu0 %v3556
        %v3558 = vand.u32 %v2695, 4294901760
        %v3559 = vsub.f32 %v2695, %v3558
        %3560 = vmatpush1.msra.mxu0 %v3559
        %3561 = vmatprep.subr.mxu0 0.0
        %3562 = vmatpush1.msra.mxu0 0.0
        %3563 = vmatprep.subr.mxu0 0.0
        %3564 = vmatpush1.msra.mxu0 0.0
        %3565 = vmatprep.subr.mxu0 0.0
        %3566 = vmatpush1.msra.mxu0 0.0
        %3567 = vmatprep.subr.mxu0 0.0
        %3568 = vmatpush1.msra.mxu0 0.0
        %3569 = vmatprep.subr.mxu0 0.0
        %3570 = vmatpush1.msra.mxu0 0.0
        %3571 = vmatprep.subr.mxu0 0.0
        %3572 = vmatpush1.msra.mxu0 0.0
        %3573 = vmatprep.subr.mxu0 0.0
        %3574 = vmatpush1.msra.mxu0 0.0
        %3575 = vmatprep.subr.mxu0 0.0
        %3576 = vmatpush1.msra.mxu0 0.0
        %3577 = vmatprep.subr.mxu0 0.0
        %3578 = vmatpush1.msra.mxu0 0.0
        %3579 = vmatprep.subr.mxu0 0.0
        %3580 = vmatpush1.msra.mxu0 0.0
        %3581 = vmatprep.subr.mxu0 0.0
        %3582 = vmatpush1.msra.mxu0 0.0
        %3583 = vmatprep.subr.mxu0 0.0
        %3584 = vmatpush1.msra.mxu0 0.0
        %3585 = vmatprep.subr.mxu0 0.0
        %3586 = vmatpush1.msra.mxu0 0.0
        %3587 = vmatprep.subr.mxu0 0.0
        %3588 = vmatpush1.msra.mxu0 0.0
        %3589 = vmatprep.subr.mxu0 0.0
        %3590 = vmatpush1.msra.mxu0 0.0
        %3591 = vmatprep.subr.mxu0 0.0
        %3592 = vmatpush1.msra.mxu0 0.0
        %3593 = vmatprep.subr.mxu0 0.0
        %3594 = vmatpush1.msra.mxu0 0.0
        %3595 = vmatprep.subr.mxu0 0.0
        %3596 = vmatpush1.msra.mxu0 0.0
        %3597 = vmatprep.subr.mxu0 0.0
        %3598 = vmatpush1.msra.mxu0 0.0
        %3599 = vmatprep.subr.mxu0 0.0
        %3600 = vmatpush1.msra.mxu0 0.0
        %3601 = vmatprep.subr.mxu0 0.0
        %3602 = vmatpush1.msra.mxu0 0.0
        %3603 = vmatprep.subr.mxu0 0.0
        %3604 = vmatpush1.msra.mxu0 0.0
        %3605 = vmatprep.subr.mxu0 0.0
        %3606 = vmatpush1.msra.mxu0 0.0
        %3607 = vmatprep.subr.mxu0 0.0
        %3608 = vmatpush1.msra.mxu0 0.0
        %3609 = vmatprep.subr.mxu0 0.0
        %3610 = vmatpush1.msra.mxu0 0.0
        %3611 = vmatprep.subr.mxu0 0.0
        %3612 = vmatpush1.msra.mxu0 0.0
        %3613 = vmatprep.subr.mxu0 0.0
        %3614 = vmatpush1.msra.mxu0 0.0
        %3615 = vmatprep.subr.mxu0 0.0
        %3616 = vmatpush1.msra.mxu0 0.0
        %3617 = vmatprep.subr.mxu0 0.0
        %3618 = vmatpush1.msra.mxu0 0.0
        %3619 = vmatprep.subr.mxu0 0.0
        %3620 = vmatpush1.msra.mxu0 0.0
        %3621 = vmatprep.subr.mxu0 0.0
        %3622 = vmatpush1.msra.mxu0 0.0
        %3623 = vmatprep.mubr.f32.mxu0 0.0
        %v3624 = vand.u32 %v3330, 4294901760
        %v3625 = vsub.f32 %v3330, %v3624
        %3626 = vmatmul.mubr.f32.gmra.mrb[0].mxu0 %v3625
        %v3627 = vpop.f32.mrb[0].mxu0
        %v3628 = vadd.f32 %v3530, %v3627
        %v3629 = vpop.f32.mrb[0].mxu0
        %v3630 = vadd.f32 %v3532, %v3629
        %3631 = vmatprep.mubr.f32.mxu0 0.0
        %v3632 = vand.u32 %v3333, 4294901760
        %v3633 = vsub.f32 %v3333, %v3632
        %3634 = vmatmul.mubr.f32.gmra.mrb[0].mxu0 %v3633
        %v3635 = vpop.f32.mrb[0].mxu0
        %v3636 = vadd.f32 %v3537, %v3635
        %v3637 = vpop.f32.mrb[0].mxu0
        %v3638 = vadd.f32 %v3539, %v3637
        %3639 = vmatprep.mubr.f32.mxu0 0.0
        %v3640 = vand.u32 %v3336, 4294901760
        %v3641 = vsub.f32 %v3336, %v3640
        %3642 = vmatmul.mubr.f32.gmra.mrb[0].mxu0 %v3641
        %v3643 = vpop.f32.mrb[0].mxu0
        %v3644 = vadd.f32 %v3544, %v3643
        %v3645 = vpop.f32.mrb[0].mxu0
        %v3646 = vadd.f32 %v3546, %v3645
        %3647 = vmatprep.mubr.f32.mxu0 0.0
        %v3648 = vand.u32 %v3339, 4294901760
        %v3649 = vsub.f32 %v3339, %v3648
        %3650 = vmatmul.mubr.f32.gmra.mrb[0].mxu0 %v3649
        %v3651 = vpop.f32.mrb[0].mxu0
        %v3652 = vadd.f32 %v3551, %v3651
        %v3653 = vpop.f32.mrb[0].mxu0
        %v3654 = vadd.f32 %v3553, %v3653
        %3655 = vdwg.mxu0
        %v3656 = vand.u32 %v2696, 4294901760
        %3657 = vmatprep.subr.mxu0 %v3656
        %v3658 = vand.u32 %v2695, 4294901760
        %3659 = vmatpush1.msra.mxu0 %v3658
        %3660 = vmatprep.subr.mxu0 0.0
        %3661 = vmatpush1.msra.mxu0 0.0
        %3662 = vmatprep.subr.mxu0 0.0
        %3663 = vmatpush1.msra.mxu0 0.0
        %3664 = vmatprep.subr.mxu0 0.0
        %3665 = vmatpush1.msra.mxu0 0.0
        %3666 = vmatprep.subr.mxu0 0.0
        %3667 = vmatpush1.msra.mxu0 0.0
        %3668 = vmatprep.subr.mxu0 0.0
        %3669 = vmatpush1.msra.mxu0 0.0
        %3670 = vmatprep.subr.mxu0 0.0
        %3671 = vmatpush1.msra.mxu0 0.0
        %3672 = vmatprep.subr.mxu0 0.0
        %3673 = vmatpush1.msra.mxu0 0.0
        %3674 = vmatprep.subr.mxu0 0.0
        %3675 = vmatpush1.msra.mxu0 0.0
        %3676 = vmatprep.subr.mxu0 0.0
        %3677 = vmatpush1.msra.mxu0 0.0
        %3678 = vmatprep.subr.mxu0 0.0
        %3679 = vmatpush1.msra.mxu0 0.0
        %3680 = vmatprep.subr.mxu0 0.0
        %3681 = vmatpush1.msra.mxu0 0.0
        %3682 = vmatprep.subr.mxu0 0.0
        %3683 = vmatpush1.msra.mxu0 0.0
        %3684 = vmatprep.subr.mxu0 0.0
        %3685 = vmatpush1.msra.mxu0 0.0
        %3686 = vmatprep.subr.mxu0 0.0
        %3687 = vmatpush1.msra.mxu0 0.0
        %3688 = vmatprep.subr.mxu0 0.0
        %3689 = vmatpush1.msra.mxu0 0.0
        %3690 = vmatprep.subr.mxu0 0.0
        %3691 = vmatpush1.msra.mxu0 0.0
        %3692 = vmatprep.subr.mxu0 0.0
        %3693 = vmatpush1.msra.mxu0 0.0
        %3694 = vmatprep.subr.mxu0 0.0
        %3695 = vmatpush1.msra.mxu0 0.0
        %3696 = vmatprep.subr.mxu0 0.0
        %3697 = vmatpush1.msra.mxu0 0.0
        %3698 = vmatprep.subr.mxu0 0.0
        %3699 = vmatpush1.msra.mxu0 0.0
        %3700 = vmatprep.subr.mxu0 0.0
        %3701 = vmatpush1.msra.mxu0 0.0
        %3702 = vmatprep.subr.mxu0 0.0
        %3703 = vmatpush1.msra.mxu0 0.0
        %3704 = vmatprep.subr.mxu0 0.0
        %3705 = vmatpush1.msra.mxu0 0.0
        %3706 = vmatprep.subr.mxu0 0.0
        %3707 = vmatpush1.msra.mxu0 0.0
        %3708 = vmatprep.subr.mxu0 0.0
        %3709 = vmatpush1.msra.mxu0 0.0
        %3710 = vmatprep.subr.mxu0 0.0
        %3711 = vmatpush1.msra.mxu0 0.0
        %3712 = vmatprep.subr.mxu0 0.0
        %3713 = vmatpush1.msra.mxu0 0.0
        %3714 = vmatprep.subr.mxu0 0.0
        %3715 = vmatpush1.msra.mxu0 0.0
        %3716 = vmatprep.subr.mxu0 0.0
        %3717 = vmatpush1.msra.mxu0 0.0
        %3718 = vmatprep.subr.mxu0 0.0
        %3719 = vmatpush1.msra.mxu0 0.0
        %3720 = vmatprep.subr.mxu0 0.0
        %3721 = vmatpush1.msra.mxu0 0.0
        %3722 = vmatprep.mubr.f32.mxu0 0.0
        %v3723 = vand.u32 %v3330, 4294901760
        %v3724 = vsub.f32 %v3330, %v3723
        %v3725 = vand.u32 %v3724, 4294901760
        %3726 = vmatmul.mubr.f32.gmra.mrb[0].mxu0 %v3725
        %v3727 = vpop.f32.mrb[0].mxu0
        %v3728 = vadd.f32 %v3628, %v3727
        %v3729 = vpop.f32.mrb[0].mxu0
        %v3730 = vadd.f32 %v3630, %v3729
        %3731 = vmatprep.mubr.f32.mxu0 0.0
        %v3732 = vand.u32 %v3333, 4294901760
        %v3733 = vsub.f32 %v3333, %v3732
        %v3734 = vand.u32 %v3733, 4294901760
        %3735 = vmatmul.mubr.f32.gmra.mrb[0].mxu0 %v3734
        %v3736 = vpop.f32.mrb[0].mxu0
        %v3737 = vadd.f32 %v3636, %v3736
        %v3738 = vpop.f32.mrb[0].mxu0
        %v3739 = vadd.f32 %v3638, %v3738
        %3740 = vmatprep.mubr.f32.mxu0 0.0
        %v3741 = vand.u32 %v3336, 4294901760
        %v3742 = vsub.f32 %v3336, %v3741
        %v3743 = vand.u32 %v3742, 4294901760
        %3744 = vmatmul.mubr.f32.gmra.mrb[0].mxu0 %v3743
        %v3745 = vpop.f32.mrb[0].mxu0
        %v3746 = vadd.f32 %v3644, %v3745
        %v3747 = vpop.f32.mrb[0].mxu0
        %v3748 = vadd.f32 %v3646, %v3747
        %3749 = vmatprep.mubr.f32.mxu0 0.0
        %v3750 = vand.u32 %v3339, 4294901760
        %v3751 = vsub.f32 %v3339, %v3750
        %v3752 = vand.u32 %v3751, 4294901760
        %3753 = vmatmul.mubr.f32.gmra.mrb[0].mxu0 %v3752
        %v3754 = vpop.f32.mrb[0].mxu0
        %v3755 = vadd.f32 %v3652, %v3754
        %v3756 = vpop.f32.mrb[0].mxu0
        %v3757 = vadd.f32 %v3654, %v3756
        %3758 = vdwg.mxu0
        %v3759 = vand.u32 %v2696, 4294901760
        %v3760 = vsub.f32 %v2696, %v3759
        %v3761 = vand.u32 %v3760, 4294901760
        %3762 = vmatprep.subr.mxu0 %v3761
        %v3763 = vand.u32 %v2695, 4294901760
        %v3764 = vsub.f32 %v2695, %v3763
        %v3765 = vand.u32 %v3764, 4294901760
        %3766 = vmatpush1.msra.mxu0 %v3765
        %3767 = vmatprep.subr.mxu0 0.0
        %3768 = vmatpush1.msra.mxu0 0.0
        %3769 = vmatprep.subr.mxu0 0.0
        %3770 = vmatpush1.msra.mxu0 0.0
        %3771 = vmatprep.subr.mxu0 0.0
        %3772 = vmatpush1.msra.mxu0 0.0
        %3773 = vmatprep.subr.mxu0 0.0
        %3774 = vmatpush1.msra.mxu0 0.0
        %3775 = vmatprep.subr.mxu0 0.0
        %3776 = vmatpush1.msra.mxu0 0.0
        %3777 = vmatprep.subr.mxu0 0.0
        %3778 = vmatpush1.msra.mxu0 0.0
        %3779 = vmatprep.subr.mxu0 0.0
        %3780 = vmatpush1.msra.mxu0 0.0
        %3781 = vmatprep.subr.mxu0 0.0
        %3782 = vmatpush1.msra.mxu0 0.0
        %3783 = vmatprep.subr.mxu0 0.0
        %3784 = vmatpush1.msra.mxu0 0.0
        %3785 = vmatprep.subr.mxu0 0.0
        %3786 = vmatpush1.msra.mxu0 0.0
        %3787 = vmatprep.subr.mxu0 0.0
        %3788 = vmatpush1.msra.mxu0 0.0
        %3789 = vmatprep.subr.mxu0 0.0
        %3790 = vmatpush1.msra.mxu0 0.0
        %3791 = vmatprep.subr.mxu0 0.0
        %3792 = vmatpush1.msra.mxu0 0.0
        %3793 = vmatprep.subr.mxu0 0.0
        %3794 = vmatpush1.msra.mxu0 0.0
        %3795 = vmatprep.subr.mxu0 0.0
        %3796 = vmatpush1.msra.mxu0 0.0
        %3797 = vmatprep.subr.mxu0 0.0
        %3798 = vmatpush1.msra.mxu0 0.0
        %3799 = vmatprep.subr.mxu0 0.0
        %3800 = vmatpush1.msra.mxu0 0.0
        %3801 = vmatprep.subr.mxu0 0.0
        %3802 = vmatpush1.msra.mxu0 0.0
        %3803 = vmatprep.subr.mxu0 0.0
        %3804 = vmatpush1.msra.mxu0 0.0
        %3805 = vmatprep.subr.mxu0 0.0
        %3806 = vmatpush1.msra.mxu0 0.0
        %3807 = vmatprep.subr.mxu0 0.0
        %3808 = vmatpush1.msra.mxu0 0.0
        %3809 = vmatprep.subr.mxu0 0.0
        %3810 = vmatpush1.msra.mxu0 0.0
        %3811 = vmatprep.subr.mxu0 0.0
        %3812 = vmatpush1.msra.mxu0 0.0
        %3813 = vmatprep.subr.mxu0 0.0
        %3814 = vmatpush1.msra.mxu0 0.0
        %3815 = vmatprep.subr.mxu0 0.0
        %3816 = vmatpush1.msra.mxu0 0.0
        %3817 = vmatprep.subr.mxu0 0.0
        %3818 = vmatpush1.msra.mxu0 0.0
        %3819 = vmatprep.subr.mxu0 0.0
        %3820 = vmatpush1.msra.mxu0 0.0
        %3821 = vmatprep.subr.mxu0 0.0
        %3822 = vmatpush1.msra.mxu0 0.0
        %3823 = vmatprep.subr.mxu0 0.0
        %3824 = vmatpush1.msra.mxu0 0.0
        %3825 = vmatprep.subr.mxu0 0.0
        %3826 = vmatpush1.msra.mxu0 0.0
        %3827 = vmatprep.subr.mxu0 0.0
        %3828 = vmatpush1.msra.mxu0 0.0
        %3829 = vmatprep.mubr.f32.mxu0 0.0
        %v3830 = vand.u32 %v3330, 4294901760
        %3831 = vmatmul.mubr.f32.gmra.mrb[0].mxu0 %v3830
        %v3832 = vpop.f32.mrb[0].mxu0
        %v3833 = vadd.f32 %v3728, %v3832
        %v3834 = vpop.f32.mrb[0].mxu0
        %v3835 = vadd.f32 %v3730, %v3834
        %3836 = vmatprep.mubr.f32.mxu0 0.0
        %v3837 = vand.u32 %v3333, 4294901760
        %3838 = vmatmul.mubr.f32.gmra.mrb[0].mxu0 %v3837
        %v3839 = vpop.f32.mrb[0].mxu0
        %v3840 = vadd.f32 %v3737, %v3839
        %v3841 = vpop.f32.mrb[0].mxu0
        %v3842 = vadd.f32 %v3739, %v3841
        %3843 = vmatprep.mubr.f32.mxu0 0.0
        %v3844 = vand.u32 %v3336, 4294901760
        %3845 = vmatmul.mubr.f32.gmra.mrb[0].mxu0 %v3844
        %v3846 = vpop.f32.mrb[0].mxu0
        %v3847 = vadd.f32 %v3746, %v3846
        %v3848 = vpop.f32.mrb[0].mxu0
        %v3849 = vadd.f32 %v3748, %v3848
        %3850 = vmatprep.mubr.f32.mxu0 0.0
        %v3851 = vand.u32 %v3339, 4294901760
        %3852 = vmatmul.mubr.f32.gmra.mrb[0].mxu0 %v3851
        %v3853 = vpop.f32.mrb[0].mxu0
        %v3854 = vadd.f32 %v3755, %v3853
        %v3855 = vpop.f32.mrb[0].mxu0
        %v3856 = vadd.f32 %v3757, %v3855
        %3857 = vdwg.mxu0
        %v3858 = vand.u32 %v2696, 4294901760
        %3859 = vmatprep.subr.mxu0 %v3858
        %v3860 = vand.u32 %v2695, 4294901760
        %3861 = vmatpush1.msra.mxu0 %v3860
        %3862 = vmatprep.subr.mxu0 0.0
        %3863 = vmatpush1.msra.mxu0 0.0
        %3864 = vmatprep.subr.mxu0 0.0
        %3865 = vmatpush1.msra.mxu0 0.0
        %3866 = vmatprep.subr.mxu0 0.0
        %3867 = vmatpush1.msra.mxu0 0.0
        %3868 = vmatprep.subr.mxu0 0.0
        %3869 = vmatpush1.msra.mxu0 0.0
        %3870 = vmatprep.subr.mxu0 0.0
        %3871 = vmatpush1.msra.mxu0 0.0
        %3872 = vmatprep.subr.mxu0 0.0
        %3873 = vmatpush1.msra.mxu0 0.0
        %3874 = vmatprep.subr.mxu0 0.0
        %3875 = vmatpush1.msra.mxu0 0.0
        %3876 = vmatprep.subr.mxu0 0.0
        %3877 = vmatpush1.msra.mxu0 0.0
        %3878 = vmatprep.subr.mxu0 0.0
        %3879 = vmatpush1.msra.mxu0 0.0
        %3880 = vmatprep.subr.mxu0 0.0
        %3881 = vmatpush1.msra.mxu0 0.0
        %3882 = vmatprep.subr.mxu0 0.0
        %3883 = vmatpush1.msra.mxu0 0.0
        %3884 = vmatprep.subr.mxu0 0.0
        %3885 = vmatpush1.msra.mxu0 0.0
        %3886 = vmatprep.subr.mxu0 0.0
        %3887 = vmatpush1.msra.mxu0 0.0
        %3888 = vmatprep.subr.mxu0 0.0
        %3889 = vmatpush1.msra.mxu0 0.0
        %3890 = vmatprep.subr.mxu0 0.0
        %3891 = vmatpush1.msra.mxu0 0.0
        %3892 = vmatprep.subr.mxu0 0.0
        %3893 = vmatpush1.msra.mxu0 0.0
        %3894 = vmatprep.subr.mxu0 0.0
        %3895 = vmatpush1.msra.mxu0 0.0
        %3896 = vmatprep.subr.mxu0 0.0
        %3897 = vmatpush1.msra.mxu0 0.0
        %3898 = vmatprep.subr.mxu0 0.0
        %3899 = vmatpush1.msra.mxu0 0.0
        %3900 = vmatprep.subr.mxu0 0.0
        %3901 = vmatpush1.msra.mxu0 0.0
        %3902 = vmatprep.subr.mxu0 0.0
        %3903 = vmatpush1.msra.mxu0 0.0
        %3904 = vmatprep.subr.mxu0 0.0
        %3905 = vmatpush1.msra.mxu0 0.0
        %3906 = vmatprep.subr.mxu0 0.0
        %3907 = vmatpush1.msra.mxu0 0.0
        %3908 = vmatprep.subr.mxu0 0.0
        %3909 = vmatpush1.msra.mxu0 0.0
        %3910 = vmatprep.subr.mxu0 0.0
        %3911 = vmatpush1.msra.mxu0 0.0
        %3912 = vmatprep.subr.mxu0 0.0
        %3913 = vmatpush1.msra.mxu0 0.0
        %3914 = vmatprep.subr.mxu0 0.0
        %3915 = vmatpush1.msra.mxu0 0.0
        %3916 = vmatprep.subr.mxu0 0.0
        %3917 = vmatpush1.msra.mxu0 0.0
        %3918 = vmatprep.subr.mxu0 0.0
        %3919 = vmatpush1.msra.mxu0 0.0
        %3920 = vmatprep.subr.mxu0 0.0
        %3921 = vmatpush1.msra.mxu0 0.0
        %3922 = vmatprep.subr.mxu0 0.0
        %3923 = vmatpush1.msra.mxu0 0.0
        %3924 = vmatprep.mubr.f32.mxu0 0.0
        %v3925 = vand.u32 %v3330, 4294901760
        %3926 = vmatmul.mubr.f32.gmra.mrb[0].mxu0 %v3925
        %v3927 = vpop.f32.mrb[0].mxu0
        %v3928 = vadd.f32 %v3833, %v3927
        %v3929 = vpop.f32.mrb[0].mxu0
        %v3930 = vadd.f32 %v3835, %v3929
        %3931 = vmatprep.mubr.f32.mxu0 0.0
        %v3932 = vand.u32 %v3333, 4294901760
        %3933 = vmatmul.mubr.f32.gmra.mrb[0].mxu0 %v3932
        %v3934 = vpop.f32.mrb[0].mxu0
        %v3935 = vadd.f32 %v3840, %v3934
        %v3936 = vpop.f32.mrb[0].mxu0
        %v3937 = vadd.f32 %v3842, %v3936
        %3938 = vmatprep.mubr.f32.mxu0 0.0
        %v3939 = vand.u32 %v3336, 4294901760
        %3940 = vmatmul.mubr.f32.gmra.mrb[0].mxu0 %v3939
        %v3941 = vpop.f32.mrb[0].mxu0
        %v3942 = vadd.f32 %v3847, %v3941
        %v3943 = vpop.f32.mrb[0].mxu0
        %v3944 = vadd.f32 %v3849, %v3943
        %3945 = vmatprep.mubr.f32.mxu0 0.0
        %v3946 = vand.u32 %v3339, 4294901760
        %3947 = vmatmul.mubr.f32.gmra.mrb[0].mxu0 %v3946
        %v3948 = vpop.f32.mrb[0].mxu0
        %v3949 = vadd.f32 %v3854, %v3948
        %v3950 = vpop.f32.mrb[0].mxu0
        %v3951 = vadd.f32 %v3856, %v3950
        %3952 = vdwg.mxu0
        %v3953 = vsub.f32 %v3300, %v3928
        %v3954 = vsub.f32 %v3302, %v3930
        %v3955 = vsub.f32 %v3307, %v3935
        %v3956 = vsub.f32 %v3309, %v3937
        %v3957 = vsub.f32 %v3314, %v3942
        %v3958 = vsub.f32 %v3316, %v3944
        %v3959 = vsub.f32 %v3321, %v3949
        %v3960 = vsub.f32 %v3323, %v3951
        %v3961 = vand.u32 2147483647, %v3953
        %v3962 = vand.u32 2147483647, %v3954
        %v3963 = vand.u32 2147483647, %v3955
        %v3964 = vand.u32 2147483647, %v3956
        %v3965 = vand.u32 2147483647, %v3957
        %v3966 = vand.u32 2147483647, %v3958
        %v3967 = vand.u32 2147483647, %v3959
        %v3968 = vand.u32 2147483647, %v3960
        %v3969 = vsub.f32 0.0, %v3961
        %v3970 = vsub.f32 0.0, %v3962
        %v3971 = vsub.f32 0.0, %v3963
        %v3972 = vsub.f32 0.0, %v3964
        %v3973 = vsub.f32 0.0, %v3965
        %v3974 = vsub.f32 0.0, %v3966
        %v3975 = vsub.f32 0.0, %v3967
        %v3976 = vsub.f32 0.0, %v3968
        %v3977 = vmul.f32 %v3969, 1.442695
        %v3978 = vpow.pop %v3977
        %v3979 = vmul.f32 %v3970, 1.442695
        %v3980 = vpow.pop %v3979
        %v3981 = vmul.f32 %v3971, 1.442695
        %v3982 = vpow.pop %v3981
        %v3983 = vmul.f32 %v3972, 1.442695
        %v3984 = vpow.pop %v3983
        %v3985 = vmul.f32 %v3973, 1.442695
        %v3986 = vpow.pop %v3985
        %v3987 = vmul.f32 %v3974, 1.442695
        %v3988 = vpow.pop %v3987
        %v3989 = vmul.f32 %v3975, 1.442695
        %v3990 = vpow.pop %v3989
        %v3991 = vmul.f32 %v3976, 1.442695
        %v3992 = vpow.pop %v3991
        %v3993 = vadd.f32 %v3978, 1.0
        %v3994 = vadd.f32 %v3980, 1.0
        %v3995 = vadd.f32 %v3982, 1.0
        %v3996 = vadd.f32 %v3984, 1.0
        %v3997 = vadd.f32 %v3986, 1.0
        %v3998 = vadd.f32 %v3988, 1.0
        %v3999 = vadd.f32 %v3990, 1.0
        %v4000 = vadd.f32 %v3992, 1.0
        %v4001 = vrcp.pop %v3993
        %v4002 = vmul.f32 1.0, %v4001
        %v4003 = vrcp.pop %v3994
        %v4004 = vmul.f32 1.0, %v4003
        %v4005 = vrcp.pop %v3995
        %v4006 = vmul.f32 1.0, %v4005
        %v4007 = vrcp.pop %v3996
        %v4008 = vmul.f32 1.0, %v4007
        %v4009 = vrcp.pop %v3997
        %v4010 = vmul.f32 1.0, %v4009
        %v4011 = vrcp.pop %v3998
        %v4012 = vmul.f32 1.0, %v4011
        %v4013 = vrcp.pop %v3999
        %v4014 = vmul.f32 1.0, %v4013
        %v4015 = vrcp.pop %v4000
        %v4016 = vmul.f32 1.0, %v4015
        %v4017 = vmul.f32 %v3978, %v4002
        %v4018 = vmul.f32 %v3980, %v4004
        %v4019 = vmul.f32 %v3982, %v4006
        %v4020 = vmul.f32 %v3984, %v4008
        %v4021 = vmul.f32 %v3986, %v4010
        %v4022 = vmul.f32 %v3988, %v4012
        %v4023 = vmul.f32 %v3990, %v4014
        %v4024 = vmul.f32 %v3992, %v4016
        %vm4025 = vcmp.ge.f32.partialorder %v3953, 0.0
        %vm4026 = vcmp.ge.f32.partialorder %v3954, 0.0
        %vm4027 = vcmp.ge.f32.partialorder %v3955, 0.0
        %vm4028 = vcmp.ge.f32.partialorder %v3956, 0.0
        %vm4029 = vcmp.ge.f32.partialorder %v3957, 0.0
        %vm4030 = vcmp.ge.f32.partialorder %v3958, 0.0
        %vm4031 = vcmp.ge.f32.partialorder %v3959, 0.0
        %vm4032 = vcmp.ge.f32.partialorder %v3960, 0.0
        %v4033 = vsel %vm4025, %v4002, %v4017
        %v4034 = vsel %vm4026, %v4004, %v4018
        %v4035 = vsel %vm4027, %v4006, %v4019
        %v4036 = vsel %vm4028, %v4008, %v4020
        %v4037 = vsel %vm4029, %v4010, %v4021
        %v4038 = vsel %vm4030, %v4012, %v4022
        %v4039 = vsel %vm4031, %v4014, %v4023
        %v4040 = vsel %vm4032, %v4016, %v4024
        %v4041 = vsel %vm4025, %v4017, %v4002
        %v4042 = vsel %vm4026, %v4018, %v4004
        %v4043 = vsel %vm4027, %v4019, %v4006
        %v4044 = vsel %vm4028, %v4020, %v4008
        %v4045 = vsel %vm4029, %v4021, %v4010
        %v4046 = vsel %vm4030, %v4022, %v4012
        %v4047 = vsel %vm4031, %v4023, %v4014
        %v4048 = vsel %vm4032, %v4024, %v4016
        %v4049 = vmin.f32 %v4017, %v4021
        %v4050 = vmin.f32 %v4019, %v4023
        %v4051 = vmin.f32 %v4049, %v4050
        %v4052 = vrot.slane %v4051, 4
        %v4053 = vmin.f32 %v4051, %v4052
        %v4054 = vrot.slane %v4053, 2
        %v4055 = vmin.f32 %v4053, %v4054
        %v4056 = vrot.slane %v4055, 1
        %v4057 = vmin.f32 %v4055, %v4056
        %v4058 = vmin.f32 %v4018, %v4022
        %v4059 = vmin.f32 %v4020, %v4024
        %v4060 = vmin.f32 %v4058, %v4059
        %v4061 = vrot.slane %v4060, 4
        %v4062 = vmin.f32 %v4060, %v4061
        %v4063 = vrot.slane %v4062, 2
        %v4064 = vmin.f32 %v4062, %v4063
        %v4065 = vrot.slane %v4064, 1
        %v4066 = vmin.f32 %v4064, %v4065
        %v4067 = vmax.f32 %v4017, %v4021
        %v4068 = vmax.f32 %v4019, %v4023
        %v4069 = vmax.f32 %v4067, %v4068
        %v4070 = vrot.slane %v4069, 4
        %v4071 = vmax.f32 %v4069, %v4070
        %v4072 = vrot.slane %v4071, 2
        %v4073 = vmax.f32 %v4071, %v4072
        %v4074 = vrot.slane %v4073, 1
        %v4075 = vmax.f32 %v4073, %v4074
        %v4076 = vmax.f32 %v4018, %v4022
        %v4077 = vmax.f32 %v4020, %v4024
        %v4078 = vmax.f32 %v4076, %v4077
        %v4079 = vrot.slane %v4078, 4
        %v4080 = vmax.f32 %v4078, %v4079
        %v4081 = vrot.slane %v4080, 2
        %v4082 = vmax.f32 %v4080, %v4081
        %v4083 = vrot.slane %v4082, 1
        %v4084 = vmax.f32 %v4082, %v4083
        %v4085 = vsub.f32 %v4017, %v4057
        %v4086 = vsub.f32 %v4018, %v4066
        %v4087 = vsub.f32 %v4019, %v4057
        %v4088 = vsub.f32 %v4020, %v4066
        %v4089 = vsub.f32 %v4021, %v4057
        %v4090 = vsub.f32 %v4022, %v4066
        %v4091 = vsub.f32 %v4023, %v4057
        %v4092 = vsub.f32 %v4024, %v4066
        %v4093 = vsub.f32 %v4075, %v4057
        %v4094 = vsub.f32 %v4084, %v4066
        %v4095 = vadd.f32 %v4093, 1e-06
        %v4096 = vadd.f32 %v4094, 1e-06
        %v4097 = vrcp.pop %v4095
        %v4098 = vmul.f32 %v4085, %v4097
        %v4099 = vrcp.pop %v4096
        %v4100 = vmul.f32 %v4086, %v4099
        %v4101 = vmul.f32 %v4087, %v4097
        %v4102 = vmul.f32 %v4088, %v4099
        %v4103 = vmul.f32 %v4089, %v4097
        %v4104 = vmul.f32 %v4090, %v4099
        %v4105 = vmul.f32 %v4091, %v4097
        %v4106 = vmul.f32 %v4092, %v4099
        %v4107 = vmax.f32 %v4098, 0.0
        %v4108 = vmax.f32 %v4100, 0.0
        %v4109 = vmax.f32 %v4101, 0.0
        %v4110 = vmax.f32 %v4102, 0.0
        %v4111 = vmax.f32 %v4103, 0.0
        %v4112 = vmax.f32 %v4104, 0.0
        %v4113 = vmax.f32 %v4105, 0.0
        %v4114 = vmax.f32 %v4106, 0.0
        %v4115 = vmin.f32 %v4107, 1.0
        %v4116 = vmin.f32 %v4108, 1.0
        %v4117 = vmin.f32 %v4109, 1.0
        %v4118 = vmin.f32 %v4110, 1.0
        %v4119 = vmin.f32 %v4111, 1.0
        %v4120 = vmin.f32 %v4112, 1.0
        %v4121 = vmin.f32 %v4113, 1.0
        %v4122 = vmin.f32 %v4114, 1.0
        %v4123 = vadd.f32 %v615, %v623
        %v4124 = vadd.f32 %v616, %v624
        %v4125 = vadd.f32 %v617, %v625
        %v4126 = vadd.f32 %v618, %v626
        %v4127 = vadd.f32 %v619, %v627
        %v4128 = vadd.f32 %v620, %v628
        %v4129 = vadd.f32 %v621, %v629
        %v4130 = vadd.f32 %v622, %v630
        %v4131 = vmul.f32 %v4123, 0.5
        %v4132 = vmul.f32 %v4124, 0.5
        %v4133 = vmul.f32 %v4125, 0.5
        %v4134 = vmul.f32 %v4126, 0.5
        %v4135 = vmul.f32 %v4127, 0.5
        %v4136 = vmul.f32 %v4128, 0.5
        %v4137 = vmul.f32 %v4129, 0.5
        %v4138 = vmul.f32 %v4130, 0.5
        %v4139 = vmul.f32 %v4131, %v4115
        %v4140 = vmul.f32 %v4132, %v4116
        %v4141 = vmul.f32 %v4133, %v4117
        %v4142 = vmul.f32 %v4134, %v4118
        %v4143 = vmul.f32 %v4135, %v4119
        %v4144 = vmul.f32 %v4136, %v4120
        %v4145 = vmul.f32 %v4137, %v4121
        %v4146 = vmul.f32 %v4138, %v4122
        %4147 = vst [vmem:[%s587] sm:$0xff] %v4139
        %4148 = vst [vmem:[%s587 + $0x8] sm:$0xff] %v4140
        %4149 = vst [vmem:[%s587 + $0x10] sm:$0xff] %v4141
        %4150 = vst [vmem:[%s587 + $0x18] sm:$0xff] %v4142
        %4151 = vst [vmem:[%s587 + $0x20] sm:$0xff] %v4143
        %4152 = vst [vmem:[%s587 + $0x28] sm:$0xff] %v4144
        %4153 = vst [vmem:[%s587 + $0x30] sm:$0xff] %v4145
        %4154 = vst [vmem:[%s587 + $0x38] sm:$0xff] %v4146
        %v4155 = vsub.f32 1.0, %v4115
        %v4156 = vsub.f32 1.0, %v4116
        %v4157 = vsub.f32 1.0, %v4117
        %v4158 = vsub.f32 1.0, %v4118
        %v4159 = vsub.f32 1.0, %v4119
        %v4160 = vsub.f32 1.0, %v4120
        %v4161 = vsub.f32 1.0, %v4121
        %v4162 = vsub.f32 1.0, %v4122
        %v4163 = vmul.f32 %v4155, %v4033
        %v4164 = vmul.f32 %v4156, %v4034
        %v4165 = vmul.f32 %v4157, %v4035
        %v4166 = vmul.f32 %v4158, %v4036
        %v4167 = vmul.f32 %v4159, %v4037
        %v4168 = vmul.f32 %v4160, %v4038
        %v4169 = vmul.f32 %v4161, %v4039
        %v4170 = vmul.f32 %v4162, %v4040
        %4171 = vst [vmem:[%s594] sm:$0xff] %v4163
        %4172 = vst [vmem:[%s594 + $0x8] sm:$0xff] %v4164
        %4173 = vst [vmem:[%s594 + $0x10] sm:$0xff] %v4165
        %4174 = vst [vmem:[%s594 + $0x18] sm:$0xff] %v4166
        %4175 = vst [vmem:[%s594 + $0x20] sm:$0xff] %v4167
        %4176 = vst [vmem:[%s594 + $0x28] sm:$0xff] %v4168
        %4177 = vst [vmem:[%s594 + $0x30] sm:$0xff] %v4169
        %4178 = vst [vmem:[%s594 + $0x38] sm:$0xff] %v4170
        %v4179 = vmul.f32 %v4155, %v4041
        %v4180 = vmul.f32 %v4156, %v4042
        %v4181 = vmul.f32 %v4157, %v4043
        %v4182 = vmul.f32 %v4158, %v4044
        %v4183 = vmul.f32 %v4159, %v4045
        %v4184 = vmul.f32 %v4160, %v4046
        %v4185 = vmul.f32 %v4161, %v4047
        %v4186 = vmul.f32 %v4162, %v4048
        %4187 = vst [vmem:[%s601] sm:$0xff] %v4179
        %4188 = vst [vmem:[%s601 + $0x8] sm:$0xff] %v4180
        %4189 = vst [vmem:[%s601 + $0x10] sm:$0xff] %v4181
        %4190 = vst [vmem:[%s601 + $0x18] sm:$0xff] %v4182
        %4191 = vst [vmem:[%s601 + $0x20] sm:$0xff] %v4183
        %4192 = vst [vmem:[%s601 + $0x28] sm:$0xff] %v4184
        %4193 = vst [vmem:[%s601 + $0x30] sm:$0xff] %v4185
        %4194 = vst [vmem:[%s601 + $0x38] sm:$0xff] %v4186
        %vm4195 = vcmask 523264
        %4196 = vst.msk [vmem:[%s608] sm:$0xff] %vm4195, %v4115
        %4197 = vst.msk [vmem:[%s608 + $0x8] sm:$0xff] %vm4195, %v4117
        %4198 = vst.msk [vmem:[%s608 + $0x10] sm:$0xff] %vm4195, %v4119
        %4199 = vst.msk [vmem:[%s608 + $0x18] sm:$0xff] %vm4195, %v4121
        %4204 = vrot.lane.b32.xlu0 %v4115, 64
        %v4205 = vpop.permute.xlu0 %4204
        %4206 = vrot.lane.b32.xlu0 %v4117, 64
        %v4207 = vpop.permute.xlu0 %4206
        %4208 = vrot.lane.b32.xlu0 %v4119, 64
        %v4209 = vpop.permute.xlu0 %4208
        %4210 = vrot.lane.b32.xlu0 %v4121, 64
        %v4211 = vpop.permute.xlu0 %4210
        %s4216 = scalar_lea.vmem %s608, 32 [#allocation11]
        %4217 = vst.msk [vmem:[%s4216] sm:$0xff] %vm4195, %v4205
        %4218 = vst.msk [vmem:[%s4216 + $0x8] sm:$0xff] %vm4195, %v4207
        %4219 = vst.msk [vmem:[%s4216 + $0x10] sm:$0xff] %vm4195, %v4209
        %4220 = vst.msk [vmem:[%s4216 + $0x18] sm:$0xff] %vm4195, %v4211
        %s4221 = scalar_lea.vmem %s608, 64 [#allocation11]
        %4222 = vst.msk [vmem:[%s4221] sm:$0xff] %vm4195, %v4116
        %4223 = vst.msk [vmem:[%s4221 + $0x8] sm:$0xff] %vm4195, %v4118
        %4224 = vst.msk [vmem:[%s4221 + $0x10] sm:$0xff] %vm4195, %v4120
        %4225 = vst.msk [vmem:[%s4221 + $0x18] sm:$0xff] %vm4195, %v4122
        %4230 = vrot.lane.b32.xlu0 %v4116, 64
        %v4231 = vpop.permute.xlu0 %4230
        %4232 = vrot.lane.b32.xlu0 %v4118, 64
        %v4233 = vpop.permute.xlu0 %4232
        %4234 = vrot.lane.b32.xlu0 %v4120, 64
        %v4235 = vpop.permute.xlu0 %4234
        %4236 = vrot.lane.b32.xlu0 %v4122, 64
        %v4237 = vpop.permute.xlu0 %4236
        %s4242 = scalar_lea.vmem %s608, 96 [#allocation11]
        %4243 = vst.msk [vmem:[%s4242] sm:$0xff] %vm4195, %v4231
        %4244 = vst.msk [vmem:[%s4242 + $0x8] sm:$0xff] %vm4195, %v4233
        %4245 = vst.msk [vmem:[%s4242 + $0x10] sm:$0xff] %vm4195, %v4235
        %4246 = vst.msk [vmem:[%s4242 + $0x18] sm:$0xff] %vm4195, %v4237
        %s4247 = sand.u32 %s330, 1
        %s4248 = scalar_lea.sflag [#allocation4], %s4247
        %s4249 = sand.u32 %s330, 1
        %s4250 = smul.addr %s4249, 64
        %s4251 = scalar_lea.vmem [#allocation7], %s4250
        %s4252 = sand.u32 %s42, 1
        %s4253 = scalar_lea.sflag [#allocation9], %s4252
        %s4254 = sand.u32 %s358, 1
        %s4255 = smul.addr %s4254, 64
        %s4256 = scalar_lea.vmem [#allocation8], %s4255
        %s4257 = sand.u32 %s42, 1
        %s4258 = scalar_lea.sflag [#allocation9], %s4257
        %s4259 = sand.u32 %s386, 1
        %s4260 = smul.addr %s4259, 64
        %s4261 = scalar_lea.vmem [#allocation10], %s4260
        %s4262 = sand.u32 %s414, 1
        %s4263 = scalar_lea.sflag [#allocation12], %s4262
        %s4264 = sand.u32 %s414, 1
        %s4265 = smul.addr %s4264, 128
        %s4266 = scalar_lea.vmem [#allocation11], %s4265
        // Predicated region
        $region77: #{tpu_custom_call.1} parent=67 // pred_check
          %p4267 = pneg %p340
        $region78: #{tpu_custom_call.1} parent=67 // pred_check_branch
          %4269 = sbr.rel (%p4267) target = $region80
        $region79: #{tpu_custom_call.1} parent=67 // pred_region
          %s4270 = smul.u32 2, %s47
          %s4272 = ssub.s32 1024, 1024
          %4273 = vsyncadd %s4248, %s4272
          %s4274 = smul.addr %s46, 8
          %s4275 = sadd.s32 %s4270, %s4274
          %s4276 = smul.addr %s4275, 128
          %s4277 = scalar_lea.hbm %s12, %s4276
          %s4278 = sshll.u32 %s4251, 4
          %s4279 = int_to_ptr.vmem [resolvable:$true] %s4278
          %4284 = dma.vmem_to_hbm [thread:$0]  %s4279, 1024, %s4277, %s4248, 256, 256, 16
        $region80: #{tpu_custom_call.1} parent=67 // pred_fallthru
          _
        // Predicated region
        $region81: #{tpu_custom_call.1} parent=67 // pred_check
          %p4285 = pneg %p368
        $region82: #{tpu_custom_call.1} parent=67 // pred_check_branch
          %4287 = sbr.rel (%p4285) target = $region84
        $region83: #{tpu_custom_call.1} parent=67 // pred_region
          %s4288 = smul.u32 2, %s47
          %s4290 = ssub.s32 1024, 1024
          %4291 = vsyncadd %s4253, %s4290
          %s4292 = smul.addr %s46, 8
          %s4293 = sadd.s32 %s4288, %s4292
          %s4294 = smul.addr %s4293, 128
          %s4295 = scalar_lea.hbm %s13, %s4294
          %s4296 = sshll.u32 %s4256, 4
          %s4297 = int_to_ptr.vmem [resolvable:$true] %s4296
          %4302 = dma.vmem_to_hbm [thread:$0]  %s4297, 1024, %s4295, %s4253, 256, 256, 16
        $region84: #{tpu_custom_call.1} parent=67 // pred_fallthru
          _
        // Predicated region
        $region85: #{tpu_custom_call.1} parent=67 // pred_check
          %p4303 = pneg %p396
        $region86: #{tpu_custom_call.1} parent=67 // pred_check_branch
          %4305 = sbr.rel (%p4303) target = $region88
        $region87: #{tpu_custom_call.1} parent=67 // pred_region
          %s4306 = smul.u32 2, %s47
          %s4308 = ssub.s32 1024, 1024
          %4309 = vsyncadd %s4258, %s4308
          %s4310 = smul.addr %s46, 8
          %s4311 = sadd.s32 %s4306, %s4310
          %s4312 = smul.addr %s4311, 128
          %s4313 = scalar_lea.hbm %s14, %s4312
          %s4314 = sshll.u32 %s4261, 4
          %s4315 = int_to_ptr.vmem [resolvable:$true] %s4314
          %4320 = dma.vmem_to_hbm [thread:$0]  %s4315, 1024, %s4313, %s4258, 256, 256, 16
        $region88: #{tpu_custom_call.1} parent=67 // pred_fallthru
          _
        // Predicated region
        $region89: #{tpu_custom_call.1} parent=67 // pred_check
          %p4321 = pneg %p424
        $region90: #{tpu_custom_call.1} parent=67 // pred_check_branch
          %4323 = sbr.rel (%p4321) target = $region92
        $region91: #{tpu_custom_call.1} parent=67 // pred_region
          %s4324 = smul.u32 4, %s47
          %s4326 = ssub.s32 2048, 2048
          %4327 = vsyncadd %s4263, %s4326
          %s4328 = smul.addr %s4324, 4
          %s4329 = smul.addr %s46, 16
          %s4330 = sadd.s32 %s4328, %s4329
          %s4331 = smul.addr %s4330, 128
          %s4332 = scalar_lea.hbm %s15, %s4331
          %s4333 = sshll.u32 %s4266, 4
          %s4334 = int_to_ptr.vmem [resolvable:$true] %s4333
          %4339 = dma.vmem_to_hbm [thread:$0]  %s4334, 2048, %s4332, %s4263, 128, 128, 8
        $region92: #{tpu_custom_call.1} parent=67 // pred_fallthru
          _
      $region68: #{tpu_custom_call.1} parent=5 // pred_fallthru
        _
      %p4340 = scmp.le.s32.totalorder 2, %s37
      // Predicated region
      $region93: #{tpu_custom_call.1} parent=5 // pred_check
        %p4341 = pneg %p4340
      $region94: #{tpu_custom_call.1} parent=5 // pred_check_branch
        %4343 = sbr.rel (%p4341) target = $region96
      $region95: #{tpu_custom_call.1} parent=5 // pred_region
        %s4344 = ssub.s32 %s37, 2
        // Predicated region
        $region97: #{tpu_custom_call.1} parent=95 // pred_check
          %p4345 = pneg %p346
        $region98: #{tpu_custom_call.1} parent=95 // pred_check_branch
          %4347 = sbr.rel (%p4345) target = $region100
        $region99: #{tpu_custom_call.1} parent=95 // pred_region
          %s4348 = sand.u32 %s331, 1
          %s4349 = scalar_lea.sflag [#allocation4], %s4348
          %s4350 = sand.u32 %s331, 1
          %s4351 = smul.addr %s4350, 64
          %s4352 = scalar_lea.vmem [#allocation7], %s4351
          %4353 = dma.done %s4349, 1024
        $region100: #{tpu_custom_call.1} parent=95 // pred_fallthru
          _
        // Predicated region
        $region101: #{tpu_custom_call.1} parent=95 // pred_check
          %p4354 = pneg %p374
        $region102: #{tpu_custom_call.1} parent=95 // pred_check_branch
          %4356 = sbr.rel (%p4354) target = $region104
        $region103: #{tpu_custom_call.1} parent=95 // pred_region
          %s4357 = sand.u32 %s43, 1
          %s4358 = scalar_lea.sflag [#allocation9], %s4357
          %s4359 = sand.u32 %s359, 1
          %s4360 = smul.addr %s4359, 64
          %s4361 = scalar_lea.vmem [#allocation8], %s4360
          %4362 = dma.done %s4358, 1024
        $region104: #{tpu_custom_call.1} parent=95 // pred_fallthru
          _
        // Predicated region
        $region105: #{tpu_custom_call.1} parent=95 // pred_check
          %p4363 = pneg %p402
        $region106: #{tpu_custom_call.1} parent=95 // pred_check_branch
          %4365 = sbr.rel (%p4363) target = $region108
        $region107: #{tpu_custom_call.1} parent=95 // pred_region
          %s4366 = sand.u32 %s43, 1
          %s4367 = scalar_lea.sflag [#allocation9], %s4366
          %s4368 = sand.u32 %s387, 1
          %s4369 = smul.addr %s4368, 64
          %s4370 = scalar_lea.vmem [#allocation10], %s4369
          %4371 = dma.done %s4367, 1024
        $region108: #{tpu_custom_call.1} parent=95 // pred_fallthru
          _
        // Predicated region
        $region109: #{tpu_custom_call.1} parent=95 // pred_check
          %p4372 = pneg %p430
        $region110: #{tpu_custom_call.1} parent=95 // pred_check_branch
          %4374 = sbr.rel (%p4372) target = $region112
        $region111: #{tpu_custom_call.1} parent=95 // pred_region
          %s4375 = sand.u32 %s415, 1
          %s4376 = scalar_lea.sflag [#allocation12], %s4375
          %s4377 = sand.u32 %s415, 1
          %s4378 = smul.addr %s4377, 128
          %s4379 = scalar_lea.vmem [#allocation11], %s4378
          %4380 = dma.done %s4376, 2048
        $region112: #{tpu_custom_call.1} parent=95 // pred_fallthru
          _
      $region96: #{tpu_custom_call.1} parent=5 // pred_fallthru
        _
    $region6: #{tpu_custom_call.1} parent=1 // loop_footer
      %s41 = sadd.s32 1, %s37
    $region7: #{tpu_custom_call.1} parent=1 // loop_footer_branch
      %36 = sbr.rel target = $region3
    $region8: #{tpu_custom_call.1} parent=1 // loop_exit
      _
    %4381 = vsyncpa [#allocation3], 1
    %s4382 = scalar_lea.sflag [#allocation3], 1
    %4383 = vsyncpa %s4382, 1
    %4384 = vsyncpa [#allocation6], 1
    %s4385 = scalar_lea.sflag [#allocation6], 1
    %4386 = vsyncpa %s4385, 1
    %4387 = vsyncpa [#allocation4], 1
    %s4388 = scalar_lea.sflag [#allocation4], 1
    %4389 = vsyncpa %s4388, 1
    %4390 = vsyncpa [#allocation9], 1
    %s4391 = scalar_lea.sflag [#allocation9], 1
    %4392 = vsyncpa %s4391, 1
    %4393 = vsyncpa [#allocation12], 1
    %s4394 = scalar_lea.sflag [#allocation12], 1
    %4395 = vsyncpa %s4394, 1

</llo_original>
